<compile_context>
chip_gen: v6e
topology: v6e:2x2x1
jax: 0.10.0
libtpu: 0.0.40
codegen_flags: <defaults>
</compile_context>

<pallas_src>
import jax
import jax.numpy as jnp
from jax import lax
from jax.experimental import pallas as pl
from jax.experimental.pallas import tpu as pltpu


# ----------------------------------------------------------------------------
# helpers
# ----------------------------------------------------------------------------
def _round_up(x, m):
    return ((x + m - 1) // m) * m


def _largest_divisor_at_most(n, cap):
    for d in range(min(n, cap), 0, -1):
        if n % d == 0:
            return d
    return 1


def _sigmoid(x):
    # Exact sigmoid: exp rides the EUP slot; the single f32 divide per gate is
    # off the MXU critical path and avoids approx-reciprocal error feeding back
    # through the h/c recurrence.
    return 1.0 / (1.0 + jnp.exp(-x))


def _resident_spec(shape, index_map, single_buffer):
    """Constant-index (resident) operand; keep a single VMEM copy if requested."""
    if single_buffer:
        return pl.BlockSpec(shape, index_map,
                            pipeline_mode=pl.Buffered(buffer_count=1))
    return pl.BlockSpec(shape, index_map)


def _try_single_buffered(run):
    # pl.Buffered(1) halves resident weight VMEM (make-or-break for large H on
    # v7x's 64 MiB).  If this jax/libtpu build rejects per-operand pipeline_mode,
    # fall back to default double buffering; genuine kernel bugs still re-raise
    # from the fallback path.
    try:
        return run(True)
    except Exception:  # noqa: BLE001
        return run(False)


def _vmem_limit_bytes(chunk, Bc, Dp, Hp):
    H4 = 4 * Hp
    weights = (Dp * H4 + Hp * H4) * 2 + 2 * (H4 * 4)   # bf16 W (1 copy) + f32 bias (2 copies)
    gx = chunk * Bc * H4 * 4                           # f32 staging scratch
    io = 2 * chunk * Bc * (Dp + Hp) * 4                # double-buffered in/out blocks
    carry = 2 * Bc * Hp * 4                            # h/c carries
    need = weights + gx + io + carry
    # Clamp to 64 MiB so the same setting is legal on v7x (half the VMEM of v5e/v6e).
    return int(min(64 << 20, max(32 << 20, need + (8 << 20))))


# ----------------------------------------------------------------------------
# Kernel 1: single-layer LSTM recurrence, chunked over time.
#   grid = (Bp // Bc, T // Tc)   -- batch blocks (parallel) x time chunks (arbitrary)
#   x       : (T, Bp, Dp) f32   block (Tc, Bc, Dp)   time-major input
#   w_ih_t  : (Dp, 4Hp)  bf16   full block, resident (PyTorch weight_ih.T, gate-padded)
#   w_hh_t  : (Hp, 4Hp)  bf16   full block, resident (PyTorch weight_hh.T, gate-padded)
#   bias    : (1, 4Hp)   f32    full block           (bias_ih + bias_hh, gate-padded)
#   out     : (T, Bp, Hp) f32   block (Tc, Bc, Hp)
#   scratch : gx staging (Tc, Bc, 4Hp) f32;  h, c carries (Bc, Hp) f32
# ----------------------------------------------------------------------------
def _lstm_chunk_kernel(x_ref, w_ih_ref, w_hh_ref, b_ref, out_ref,
                       gx_ref, h_ref, c_ref):
    Tc, Bc, Dp = x_ref.shape
    Hp = w_hh_ref.shape[0]
    H4 = w_ih_ref.shape[1]

    @pl.when(pl.program_id(1) == 0)  # first time-chunk of this batch block
    def _():
        h_ref[...] = jnp.zeros_like(h_ref)
        c_ref[...] = jnp.zeros_like(c_ref)

    # Hoisted input projection for the whole chunk: one big bf16 MXU matmul with
    # f32 accumulation, staged into VMEM so the recurrence only keeps (h, c) and
    # one gx row live in vregs (no spills on the serial chain).
    x_chunk = x_ref[...].reshape(Tc * Bc, Dp).astype(jnp.bfloat16)
    gx = jnp.dot(x_chunk, w_ih_ref[...],
                 preferred_element_type=jnp.float32) + b_ref[...]
    gx_ref[...] = gx.reshape(Tc, Bc, H4)

    w_hh = w_hh_ref[...]  # bf16, resident in VMEM

    def step(t, carry):
        h, c = carry
        gates = gx_ref[t] + jnp.dot(h.astype(jnp.bfloat16), w_hh,
                                    preferred_element_type=jnp.float32)
        # PyTorch gate order i, f, g, o; slices are 128-lane aligned (Hp % 128 == 0).
        i_g = _sigmoid(gates[:, 0 * Hp:1 * Hp])
        f_g = _sigmoid(gates[:, 1 * Hp:2 * Hp])
        g_g = jnp.tanh(gates[:, 2 * Hp:3 * Hp])
        o_g = _sigmoid(gates[:, 3 * Hp:4 * Hp])
        c_new = f_g * c + i_g * g_g
        h_new = o_g * jnp.tanh(c_new)
        out_ref[t] = h_new
        return h_new, c_new

    h, c = lax.fori_loop(0, Tc, step, (h_ref[...], c_ref[...]), unroll=True)
    h_ref[...] = h
    c_ref[...] = c


def lstm_layer(x_tm, w_ih_t, w_hh_t, bias, *, chunk, batch_block):
    """x_tm: (T, Bp, Dp) f32 time-major.  Returns (T, Bp, Hp) f32."""
    T, Bp, Dp = x_tm.shape
    H4 = w_ih_t.shape[1]
    Hp = H4 // 4
    Bc = batch_block
    assert T % chunk == 0
    assert Bp % Bc == 0 and Bc % 8 == 0

    def run(single_buffer_weights):
        return pl.pallas_call(
            _lstm_chunk_kernel,
            out_shape=jax.ShapeDtypeStruct((T, Bp, Hp), jnp.float32),
            grid_spec=pltpu.PrefetchScalarGridSpec(
                num_scalar_prefetch=0,
                grid=(Bp // Bc, T // chunk),
                in_specs=[
                    pl.BlockSpec((chunk, Bc, Dp), lambda b, t: (t, b, 0)),
                    _resident_spec((Dp, H4), lambda b, t: (0, 0),
                                   single_buffer_weights),
                    _resident_spec((Hp, H4), lambda b, t: (0, 0),
                                   single_buffer_weights),
                    pl.BlockSpec((1, H4), lambda b, t: (0, 0)),
                ],
                out_specs=pl.BlockSpec((chunk, Bc, Hp), lambda b, t: (t, b, 0)),
                scratch_shapes=[
                    pltpu.VMEM((chunk, Bc, H4), jnp.float32),  # gx staging
                    pltpu.VMEM((Bc, Hp), jnp.float32),         # h carry
                    pltpu.VMEM((Bc, Hp), jnp.float32),         # c carry
                ],
            ),
            compiler_params=pltpu.CompilerParams(
                # batch blocks independent (megacore-splittable on v7x); time is
                # a true recurrence -> sequential.
                dimension_semantics=("parallel", "arbitrary"),
                vmem_limit_bytes=_vmem_limit_bytes(chunk, Bc, Dp, Hp)),
        )(x_tm, w_ih_t, w_hh_t, bias)

    return _try_single_buffered(run)


# ----------------------------------------------------------------------------
# Kernel 2: ReLU + Linear head, tiled over rows (lane-dense padded output).
#   x      : (N, Hp) f32   block (tile_n, Hp)
#   w_fc_t : (Hp, Op) bf16 resident (PyTorch fc1.weight.T, padded to 128 lanes)
#   b_fc   : (1, Op) f32   resident
# ----------------------------------------------------------------------------
def _relu_fc_kernel(x_ref, w_ref, b_ref, o_ref):
    x = jnp.maximum(x_ref[...], 0.0).astype(jnp.bfloat16)
    o_ref[...] = (
        jnp.dot(x, w_ref[...], preferred_element_type=jnp.float32) + b_ref[...]
    )


def relu_fc(x, w_fc_t, b_fc, *, tile_rows=256):
    N, Hp = x.shape
    Op = w_fc_t.shape[1]
    tile_n = min(tile_rows, N)          # N is a multiple of 8 (padded batch)
    Np = _round_up(N, tile_n)
    if Np != N:
        x = jnp.pad(x, ((0, Np - N), (0, 0)))

    def run(single_buffer_weights):
        return pl.pallas_call(
            _relu_fc_kernel,
            out_shape=jax.ShapeDtypeStruct((Np, Op), jnp.float32),
            grid_spec=pltpu.PrefetchScalarGridSpec(
                num_scalar_prefetch=0,
                grid=(Np // tile_n,),
                in_specs=[
                    pl.BlockSpec((tile_n, Hp), lambda i: (i, 0)),
                    _resident_spec((Hp, Op), lambda i: (0, 0),
                                   single_buffer_weights),
                    pl.BlockSpec((1, Op), lambda i: (0, 0)),
                ],
                out_specs=pl.BlockSpec((tile_n, Op), lambda i: (i, 0)),
            ),
            compiler_params=pltpu.CompilerParams(
                dimension_semantics=("parallel",)),
        )(x, w_fc_t, b_fc)

    y = _try_single_buffered(run)
    return y[:N]


# ----------------------------------------------------------------------------
# Full model forward
# ----------------------------------------------------------------------------
def lstm_model_forward(x, kp, input_sequence_length, output_sequence_length):
    """x: (B, T, input_size) float32.  Returns (B, output_sequence_length, output_size)."""
    x = x.astype(jnp.float32)
    B, T, D = x.shape
    assert T == input_sequence_length, "sequence length mismatch with module config"

    Dp, Hp, Op = kp["Dp"], kp["Hp"], kp["Op"]
    Bp = max(8, _round_up(B, 8))          # sublane-dense rows

    # Batch blocking: keep Bc = Bp (fill MXU rows on the serial h@W_hh) unless the
    # batch is big enough to split in two for v7x's second TensorCore.
    if Bp >= 16 and (Bp // 2) % 8 == 0:
        Bc = Bp // 2
    else:
        Bc = Bp

    # Time chunking: pad T to a multiple of 8, pick the largest divisor <= 32.
    # Trailing zero timesteps only influence t >= T (sliced off), so results for
    # real timesteps are exact.
    Tp = _round_up(T, 8)
    chunk = _largest_divisor_at_most(Tp, 32)

    # time-major + pad time / batch rows / feature lanes
    x_tm = jnp.transpose(x, (1, 0, 2))                                  # (T, B, D)
    x_tm = jnp.pad(x_tm, ((0, Tp - T), (0, Bp - B), (0, Dp - D)))       # (Tp, Bp, Dp)

    h_tm = x_tm
    for (w_ih_t, w_hh_t, bias) in kp["layers"]:
        h_tm = lstm_layer(h_tm, w_ih_t, w_hh_t, bias,
                          chunk=chunk, batch_block=Bc)                  # (Tp, Bp, Hp)

    start = input_sequence_length - output_sequence_length
    out = h_tm[start:T]                                                 # (Tout, Bp, Hp)
    Tout = out.shape[0]

    y = relu_fc(out.reshape(Tout * Bp, Hp), kp["w_fc_t"], kp["b_fc"])   # (Tout*Bp, Op)
    y = y.reshape(Tout, Bp, Op)
    y = jnp.transpose(y, (1, 0, 2))[:B, :, :kp["output_size"]]
    return y


# ----------------------------------------------------------------------------
# Parameter init (PyTorch layout) + padding/packing for the kernels
# ----------------------------------------------------------------------------
def init_raw_params(key, input_size, hidden_size, num_layers, output_size):
    """Matches PyTorch U(-1/sqrt(H), 1/sqrt(H)) init; PyTorch weight layouts."""
    H = hidden_size
    bound = 1.0 / (H ** 0.5)
    lstm = []
    for layer in range(num_layers):
        d_in = input_size if layer == 0 else H
        key, k1, k2, k3, k4 = jax.random.split(key, 5)
        w_ih = jax.random.uniform(k1, (4 * H, d_in), jnp.float32, -bound, bound)
        w_hh = jax.random.uniform(k2, (4 * H, H), jnp.float32, -bound, bound)
        b_ih = jax.random.uniform(k3, (4 * H,), jnp.float32, -bound, bound)
        b_hh = jax.random.uniform(k4, (4 * H,), jnp.float32, -bound, bound)
        lstm.append((w_ih, w_hh, b_ih, b_hh))
    key, k5, k6 = jax.random.split(key, 3)
    w_fc = jax.random.uniform(k5, (output_size, H), jnp.float32, -bound, bound)
    b_fc = jax.random.uniform(k6, (output_size,), jnp.float32, -bound, bound)
    return {"lstm": lstm, "w_fc": w_fc, "b_fc": b_fc}


def _pad_gate_weight_T(w, d_in_p, Hp):
    """w: (4H, d_in) PyTorch i|f|g|o stacking -> (d_in_p, 4Hp) bf16 with per-gate padding."""
    H4, d_in = w.shape
    H = H4 // 4
    w = w.reshape(4, H, d_in)
    w = jnp.pad(w, ((0, 0), (0, Hp - H), (0, d_in_p - d_in)))
    return jnp.transpose(w.reshape(4 * Hp, d_in_p)).astype(jnp.bfloat16)


def _pad_gate_bias(b_ih, b_hh, Hp):
    b = (b_ih + b_hh).reshape(4, -1)
    b = jnp.pad(b, ((0, 0), (0, Hp - b.shape[1])))
    return b.reshape(1, 4 * Hp)


def pack_params(raw, input_size, hidden_size, output_size):
    H = hidden_size
    Hp = max(128, _round_up(H, 128))           # lane-dense hidden
    Dp = max(8, _round_up(input_size, 8))      # feature lanes (full-dim block)
    Op = max(128, _round_up(output_size, 128)) # lane-dense FC output
    layers = []
    for li, (w_ih, w_hh, b_ih, b_hh) in enumerate(raw["lstm"]):
        d_in_p = Dp if li == 0 else Hp
        layers.append((
            _pad_gate_weight_T(w_ih, d_in_p, Hp),   # (d_in_p, 4Hp) bf16
            _pad_gate_weight_T(w_hh, Hp, Hp),       # (Hp, 4Hp)     bf16
            _pad_gate_bias(b_ih, b_hh, Hp),         # (1, 4Hp)      f32
        ))
    w_fc_t = jnp.pad(raw["w_fc"].T,
                     ((0, Hp - H), (0, Op - output_size))).astype(jnp.bfloat16)
    b_fc = jnp.pad(raw["b_fc"], (0, Op - output_size)).reshape(1, Op)
    return {"layers": layers, "w_fc_t": w_fc_t, "b_fc": b_fc,
            "Dp": Dp, "Hp": Hp, "Op": Op, "output_size": output_size}


# ----------------------------------------------------------------------------
# Pure-JAX reference (unpadded, fp32) for correctness check
# ----------------------------------------------------------------------------
def reference_forward(x, raw, input_sequence_length, output_sequence_length):
    B, T, _ = x.shape
    layer_in = x.astype(jnp.float32)
    for (w_ih, w_hh, b_ih, b_hh) in raw["lstm"]:
        H = w_hh.shape[1]
        w_ih_t, w_hh_t, b = w_ih.T, w_hh.T, b_ih + b_hh

        def step(carry, x_t, w_ih_t=w_ih_t, w_hh_t=w_hh_t, b=b, H=H):
            h, c = carry
            g = x_t @ w_ih_t + h @ w_hh_t + b
            i = jax.nn.sigmoid(g[:, 0 * H:1 * H])
            f = jax.nn.sigmoid(g[:, 1 * H:2 * H])
            gg = jnp.tanh(g[:, 2 * H:3 * H])
            o = jax.nn.sigmoid(g[:, 3 * H:4 * H])
            c = f * c + i * gg
            h = o * jnp.tanh(c)
            return (h, c), h

        init = (jnp.zeros((B, H), jnp.float32), jnp.zeros((B, H), jnp.float32))
        _, outs = jax.lax.scan(step, init, jnp.transpose(layer_in, (1, 0, 2)))
        layer_in = jnp.transpose(outs, (1, 0, 2))
    start = input_sequence_length - output_sequence_length
    out = jnp.maximum(layer_in[:, start:, :], 0.0)
    return out @ raw["w_fc"].T + raw["b_fc"]


if __name__ == "__main__":
    # Small shapes consistent with the module's forward.
    batch = 2
    input_size = 6
    hidden_size = 32
    num_layers = 2
    output_size = 3
    input_sequence_length = 8
    output_sequence_length = 4

    key = jax.random.PRNGKey(0)
    key, kx = jax.random.split(key)
    x = jax.random.normal(
        kx, (batch, input_sequence_length, input_size), jnp.float32)

    raw = init_raw_params(key, input_size, hidden_size, num_layers, output_size)
    kp = pack_params(raw, input_size, hidden_size, output_size)

    y = lstm_model_forward(
        x, kp, input_sequence_length, output_sequence_length)
    y = jax.block_until_ready(y)

    y_ref = reference_forward(
        x, raw, input_sequence_length, output_sequence_length)
    assert y.shape == (batch, output_sequence_length, output_size)
    # Tolerance covers bf16 MXU operands (f32 accumulation / f32 gate math);
    # at these shapes the observed error is well below this bound.
    assert jnp.allclose(y, y_ref, atol=3e-2, rtol=3e-2), \
        float(jnp.max(jnp.abs(y - y_ref)))

    print("KERNEL_OK")
</pallas_src>

<mosaic_0001>
module attributes {stable_mosaic.version = 11 : i64} {
  func.func @_lstm_chunk_kernel(%arg0: i32, %arg1: i32, %arg2: memref<8x8x8xf32, #tpu.memory_space<vmem>>, %arg3: memref<8x512xbf16, #tpu.memory_space<vmem>>, %arg4: memref<128x512xbf16, #tpu.memory_space<vmem>>, %arg5: memref<1x512xf32, #tpu.memory_space<vmem>>, %arg6: memref<8x8x128xf32, #tpu.memory_space<vmem>>, %arg7: memref<8x8x512xf32, #tpu.memory_space<vmem>>, %arg8: memref<8x128xf32, #tpu.memory_space<vmem>>, %arg9: memref<8x128xf32, #tpu.memory_space<vmem>>) attributes {dimension_semantics = [#tpu.dimension_semantics<parallel>, #tpu.dimension_semantics<arbitrary>], iteration_bounds = array<i64: 1, 1>, scalar_prefetch = 0 : i64, scratch_operands = 3 : i64, tpu.core_type = #tpu.core_type<tc>, window_params = [{transform_indices = @transform_0, window_bounds = array<i64: 8, 8, 8>}, {pipeline_mode = #tpu.pipeline_mode<synchronous>, transform_indices = @transform_1, window_bounds = array<i64: 8, 512>}, {pipeline_mode = #tpu.pipeline_mode<synchronous>, transform_indices = @transform_2, window_bounds = array<i64: 128, 512>}, {pipeline_mode = #tpu.pipeline_mode<synchronous>, transform_indices = @transform_3, window_bounds = array<i64: 1, 512>}, {transform_indices = @transform_4, window_bounds = array<i64: 8, 8, 128>}]} {
    %c0_i32 = arith.constant 0 : i32
    %0 = arith.cmpi eq, %arg1, %c0_i32 : i32
    %1 = arith.extui %0 : i1 to i32
    %c0_i32_0 = arith.constant 0 : i32
    %2 = arith.cmpi ne, %1, %c0_i32_0 : i32
    scf.if %2 {
      %cst_133 = arith.constant 0.000000e+00 : f32
      %346 = vector.broadcast %cst_133 : f32 to vector<8x128xf32>
      %c0_134 = arith.constant 0 : index
      %c0_135 = arith.constant 0 : index
      %347 = vector.load %arg8[%c0_134, %c0_135] : memref<8x128xf32, #tpu.memory_space<vmem>>, vector<8x128xf32>
      tpu.vector_store %arg8[%c0_134, %c0_135], %346 {strides = array<i32>} : memref<8x128xf32, #tpu.memory_space<vmem>>, vector<8x128xf32>,
      %cst_136 = arith.constant 0.000000e+00 : f32
      %348 = vector.broadcast %cst_136 : f32 to vector<8x128xf32>
      %c0_137 = arith.constant 0 : index
      %c0_138 = arith.constant 0 : index
      %349 = vector.load %arg9[%c0_137, %c0_138] : memref<8x128xf32, #tpu.memory_space<vmem>>, vector<8x128xf32>
      tpu.vector_store %arg9[%c0_137, %c0_138], %348 {strides = array<i32>} : memref<8x128xf32, #tpu.memory_space<vmem>>, vector<8x128xf32>,
    } else {
    }
    %c0 = arith.constant 0 : index
    %c0_1 = arith.constant 0 : index
    %c0_2 = arith.constant 0 : index
    %3 = vector.load %arg2[%c0, %c0_1, %c0_2] : memref<8x8x8xf32, #tpu.memory_space<vmem>>, vector<8x8x8xf32>
    %4 = vector.shape_cast %3 : vector<8x8x8xf32> to vector<64x8xf32>
    %5 = arith.truncf %4 : vector<64x8xf32> to vector<64x8xbf16>
    %c0_3 = arith.constant 0 : index
    %c0_4 = arith.constant 0 : index
    %6 = vector.load %arg3[%c0_3, %c0_4] : memref<8x512xbf16, #tpu.memory_space<vmem>>, vector<8x512xbf16>
    %cst = arith.constant dense<0.000000e+00> : vector<64x512xf32>
    %7 = tpu.matmul %5, %6, %cst {dimension_numbers = #tpu.dot_dimension_numbers<[1], [0], [0], [1], [0, 0, 1, 1], [], []>} : vector<64x8xbf16>, vector<8x512xbf16>, vector<64x512xf32> -> vector<64x512xf32>
    %c0_5 = arith.constant 0 : index
    %c0_6 = arith.constant 0 : index
    %8 = vector.load %arg5[%c0_5, %c0_6] : memref<1x512xf32, #tpu.memory_space<vmem>>, vector<1x512xf32>
    %9 = vector.broadcast %8 : vector<1x512xf32> to vector<64x512xf32>
    %10 = arith.addf %7, %9 : vector<64x512xf32>
    %11 = vector.shape_cast %10 : vector<64x512xf32> to vector<8x8x512xf32>
    %c0_7 = arith.constant 0 : index
    %c0_8 = arith.constant 0 : index
    %c0_9 = arith.constant 0 : index
    %12 = vector.load %arg7[%c0_7, %c0_8, %c0_9] : memref<8x8x512xf32, #tpu.memory_space<vmem>>, vector<8x8x512xf32>
    tpu.vector_store %arg7[%c0_7, %c0_8, %c0_9], %11 {strides = array<i32>} : memref<8x8x512xf32, #tpu.memory_space<vmem>>, vector<8x8x512xf32>,
    %c0_10 = arith.constant 0 : index
    %c0_11 = arith.constant 0 : index
    %13 = vector.load %arg4[%c0_10, %c0_11] : memref<128x512xbf16, #tpu.memory_space<vmem>>, vector<128x512xbf16>
    %c0_12 = arith.constant 0 : index
    %c0_13 = arith.constant 0 : index
    %14 = vector.load %arg8[%c0_12, %c0_13] : memref<8x128xf32, #tpu.memory_space<vmem>>, vector<8x128xf32>
    %c0_14 = arith.constant 0 : index
    %c0_15 = arith.constant 0 : index
    %15 = vector.load %arg9[%c0_14, %c0_15] : memref<8x128xf32, #tpu.memory_space<vmem>>, vector<8x128xf32>
    %c0_i32_16 = arith.constant 0 : i32
    %16 = arith.index_cast %c0_i32_16 : i32 to index
    %c0_17 = arith.constant 0 : index
    %c0_18 = arith.constant 0 : index
    %17 = vector.load %arg7[%16, %c0_17, %c0_18] : memref<8x8x512xf32, #tpu.memory_space<vmem>>, vector<1x8x512xf32>
    %18 = vector.shape_cast %17 : vector<1x8x512xf32> to vector<8x512xf32>
    %19 = arith.truncf %14 : vector<8x128xf32> to vector<8x128xbf16>
    %cst_19 = arith.constant dense<0.000000e+00> : vector<8x512xf32>
    %20 = tpu.matmul %19, %13, %cst_19 {dimension_numbers = #tpu.dot_dimension_numbers<[1], [0], [0], [1], [0, 0, 1, 1], [], []>} : vector<8x128xbf16>, vector<128x512xbf16>, vector<8x512xf32> -> vector<8x512xf32>
    %21 = arith.addf %18, %20 : vector<8x512xf32>
    %22 = vector.extract_strided_slice %21 {offsets = [0, 0], sizes = [8, 128], strides = [1, 1]} : vector<8x512xf32> to vector<8x128xf32>
    %cst_20 = arith.constant 0.000000e+00 : f32
    %23 = vector.broadcast %cst_20 : f32 to vector<8x128xf32>
    %24 = arith.subf %23, %22 : vector<8x128xf32>
    %25 = math.exp %24 : vector<8x128xf32>
    %cst_21 = arith.constant 1.000000e+00 : f32
    %26 = vector.broadcast %cst_21 : f32 to vector<8x128xf32>
    %27 = arith.addf %26, %25 : vector<8x128xf32>
    %cst_22 = arith.constant 1.000000e+00 : f32
    %28 = vector.broadcast %cst_22 : f32 to vector<8x128xf32>
    %29 = arith.divf %28, %27 : vector<8x128xf32>
    %30 = vector.extract_strided_slice %21 {offsets = [0, 128], sizes = [8, 128], strides = [1, 1]} : vector<8x512xf32> to vector<8x128xf32>
    %cst_23 = arith.constant 0.000000e+00 : f32
    %31 = vector.broadcast %cst_23 : f32 to vector<8x128xf32>
    %32 = arith.subf %31, %30 : vector<8x128xf32>
    %33 = math.exp %32 : vector<8x128xf32>
    %cst_24 = arith.constant 1.000000e+00 : f32
    %34 = vector.broadcast %cst_24 : f32 to vector<8x128xf32>
    %35 = arith.addf %34, %33 : vector<8x128xf32>
    %cst_25 = arith.constant 1.000000e+00 : f32
    %36 = vector.broadcast %cst_25 : f32 to vector<8x128xf32>
    %37 = arith.divf %36, %35 : vector<8x128xf32>
    %38 = vector.extract_strided_slice %21 {offsets = [0, 256], sizes = [8, 128], strides = [1, 1]} : vector<8x512xf32> to vector<8x128xf32>
    %39 = math.tanh %38 : vector<8x128xf32>
    %40 = vector.extract_strided_slice %21 {offsets = [0, 384], sizes = [8, 128], strides = [1, 1]} : vector<8x512xf32> to vector<8x128xf32>
    %cst_26 = arith.constant 0.000000e+00 : f32
    %41 = vector.broadcast %cst_26 : f32 to vector<8x128xf32>
    %42 = arith.subf %41, %40 : vector<8x128xf32>
    %43 = math.exp %42 : vector<8x128xf32>
    %cst_27 = arith.constant 1.000000e+00 : f32
    %44 = vector.broadcast %cst_27 : f32 to vector<8x128xf32>
    %45 = arith.addf %44, %43 : vector<8x128xf32>
    %cst_28 = arith.constant 1.000000e+00 : f32
    %46 = vector.broadcast %cst_28 : f32 to vector<8x128xf32>
    %47 = arith.divf %46, %45 : vector<8x128xf32>
    %48 = arith.mulf %37, %15 : vector<8x128xf32>
    %49 = arith.mulf %29, %39 : vector<8x128xf32>
    %50 = arith.addf %48, %49 : vector<8x128xf32>
    %51 = math.tanh %50 : vector<8x128xf32>
    %52 = arith.mulf %47, %51 : vector<8x128xf32>
    %53 = arith.index_cast %c0_i32_16 : i32 to index
    %c0_29 = arith.constant 0 : index
    %c0_30 = arith.constant 0 : index
    %54 = vector.load %arg6[%53, %c0_29, %c0_30] : memref<8x8x128xf32, #tpu.memory_space<vmem>>, vector<1x8x128xf32>
    %55 = vector.shape_cast %54 : vector<1x8x128xf32> to vector<8x128xf32>
    %56 = vector.shape_cast %52 : vector<8x128xf32> to vector<1x8x128xf32>
    tpu.vector_store %arg6[%53, %c0_29, %c0_30], %56 {strides = array<i32>} : memref<8x8x128xf32, #tpu.memory_space<vmem>>, vector<1x8x128xf32>,
    %c1_i32 = arith.constant 1 : i32
    %57 = arith.index_cast %c1_i32 : i32 to index
    %c0_31 = arith.constant 0 : index
    %c0_32 = arith.constant 0 : index
    %58 = vector.load %arg7[%57, %c0_31, %c0_32] : memref<8x8x512xf32, #tpu.memory_space<vmem>>, vector<1x8x512xf32>
    %59 = vector.shape_cast %58 : vector<1x8x512xf32> to vector<8x512xf32>
    %60 = arith.truncf %52 : vector<8x128xf32> to vector<8x128xbf16>
    %cst_33 = arith.constant dense<0.000000e+00> : vector<8x512xf32>
    %61 = tpu.matmul %60, %13, %cst_33 {dimension_numbers = #tpu.dot_dimension_numbers<[1], [0], [0], [1], [0, 0, 1, 1], [], []>} : vector<8x128xbf16>, vector<128x512xbf16>, vector<8x512xf32> -> vector<8x512xf32>
    %62 = arith.addf %59, %61 : vector<8x512xf32>
    %63 = vector.extract_strided_slice %62 {offsets = [0, 0], sizes = [8, 128], strides = [1, 1]} : vector<8x512xf32> to vector<8x128xf32>
    %cst_34 = arith.constant 0.000000e+00 : f32
    %64 = vector.broadcast %cst_34 : f32 to vector<8x128xf32>
    %65 = arith.subf %64, %63 : vector<8x128xf32>
    %66 = math.exp %65 : vector<8x128xf32>
    %cst_35 = arith.constant 1.000000e+00 : f32
    %67 = vector.broadcast %cst_35 : f32 to vector<8x128xf32>
    %68 = arith.addf %67, %66 : vector<8x128xf32>
    %cst_36 = arith.constant 1.000000e+00 : f32
    %69 = vector.broadcast %cst_36 : f32 to vector<8x128xf32>
    %70 = arith.divf %69, %68 : vector<8x128xf32>
    %71 = vector.extract_strided_slice %62 {offsets = [0, 128], sizes = [8, 128], strides = [1, 1]} : vector<8x512xf32> to vector<8x128xf32>
    %cst_37 = arith.constant 0.000000e+00 : f32
    %72 = vector.broadcast %cst_37 : f32 to vector<8x128xf32>
    %73 = arith.subf %72, %71 : vector<8x128xf32>
    %74 = math.exp %73 : vector<8x128xf32>
    %cst_38 = arith.constant 1.000000e+00 : f32
    %75 = vector.broadcast %cst_38 : f32 to vector<8x128xf32>
    %76 = arith.addf %75, %74 : vector<8x128xf32>
    %cst_39 = arith.constant 1.000000e+00 : f32
    %77 = vector.broadcast %cst_39 : f32 to vector<8x128xf32>
    %78 = arith.divf %77, %76 : vector<8x128xf32>
    %79 = vector.extract_strided_slice %62 {offsets = [0, 256], sizes = [8, 128], strides = [1, 1]} : vector<8x512xf32> to vector<8x128xf32>
    %80 = math.tanh %79 : vector<8x128xf32>
    %81 = vector.extract_strided_slice %62 {offsets = [0, 384], sizes = [8, 128], strides = [1, 1]} : vector<8x512xf32> to vector<8x128xf32>
    %cst_40 = arith.constant 0.000000e+00 : f32
    %82 = vector.broadcast %cst_40 : f32 to vector<8x128xf32>
    %83 = arith.subf %82, %81 : vector<8x128xf32>
    %84 = math.exp %83 : vector<8x128xf32>
    %cst_41 = arith.constant 1.000000e+00 : f32
    %85 = vector.broadcast %cst_41 : f32 to vector<8x128xf32>
    %86 = arith.addf %85, %84 : vector<8x128xf32>
    %cst_42 = arith.constant 1.000000e+00 : f32
    %87 = vector.broadcast %cst_42 : f32 to vector<8x128xf32>
    %88 = arith.divf %87, %86 : vector<8x128xf32>
    %89 = arith.mulf %78, %50 : vector<8x128xf32>
    %90 = arith.mulf %70, %80 : vector<8x128xf32>
    %91 = arith.addf %89, %90 : vector<8x128xf32>
    %92 = math.tanh %91 : vector<8x128xf32>
    %93 = arith.mulf %88, %92 : vector<8x128xf32>
    %94 = arith.index_cast %c1_i32 : i32 to index
    %c0_43 = arith.constant 0 : index
    %c0_44 = arith.constant 0 : index
    %95 = vector.load %arg6[%94, %c0_43, %c0_44] : memref<8x8x128xf32, #tpu.memory_space<vmem>>, vector<1x8x128xf32>
    %96 = vector.shape_cast %95 : vector<1x8x128xf32> to vector<8x128xf32>
    %97 = vector.shape_cast %93 : vector<8x128xf32> to vector<1x8x128xf32>
    tpu.vector_store %arg6[%94, %c0_43, %c0_44], %97 {strides = array<i32>} : memref<8x8x128xf32, #tpu.memory_space<vmem>>, vector<1x8x128xf32>,
    %c2_i32 = arith.constant 2 : i32
    %98 = arith.index_cast %c2_i32 : i32 to index
    %c0_45 = arith.constant 0 : index
    %c0_46 = arith.constant 0 : index
    %99 = vector.load %arg7[%98, %c0_45, %c0_46] : memref<8x8x512xf32, #tpu.memory_space<vmem>>, vector<1x8x512xf32>
    %100 = vector.shape_cast %99 : vector<1x8x512xf32> to vector<8x512xf32>
    %101 = arith.truncf %93 : vector<8x128xf32> to vector<8x128xbf16>
    %cst_47 = arith.constant dense<0.000000e+00> : vector<8x512xf32>
    %102 = tpu.matmul %101, %13, %cst_47 {dimension_numbers = #tpu.dot_dimension_numbers<[1], [0], [0], [1], [0, 0, 1, 1], [], []>} : vector<8x128xbf16>, vector<128x512xbf16>, vector<8x512xf32> -> vector<8x512xf32>
    %103 = arith.addf %100, %102 : vector<8x512xf32>
    %104 = vector.extract_strided_slice %103 {offsets = [0, 0], sizes = [8, 128], strides = [1, 1]} : vector<8x512xf32> to vector<8x128xf32>
    %cst_48 = arith.constant 0.000000e+00 : f32
    %105 = vector.broadcast %cst_48 : f32 to vector<8x128xf32>
    %106 = arith.subf %105, %104 : vector<8x128xf32>
    %107 = math.exp %106 : vector<8x128xf32>
    %cst_49 = arith.constant 1.000000e+00 : f32
    %108 = vector.broadcast %cst_49 : f32 to vector<8x128xf32>
    %109 = arith.addf %108, %107 : vector<8x128xf32>
    %cst_50 = arith.constant 1.000000e+00 : f32
    %110 = vector.broadcast %cst_50 : f32 to vector<8x128xf32>
    %111 = arith.divf %110, %109 : vector<8x128xf32>
    %112 = vector.extract_strided_slice %103 {offsets = [0, 128], sizes = [8, 128], strides = [1, 1]} : vector<8x512xf32> to vector<8x128xf32>
    %cst_51 = arith.constant 0.000000e+00 : f32
    %113 = vector.broadcast %cst_51 : f32 to vector<8x128xf32>
    %114 = arith.subf %113, %112 : vector<8x128xf32>
    %115 = math.exp %114 : vector<8x128xf32>
    %cst_52 = arith.constant 1.000000e+00 : f32
    %116 = vector.broadcast %cst_52 : f32 to vector<8x128xf32>
    %117 = arith.addf %116, %115 : vector<8x128xf32>
    %cst_53 = arith.constant 1.000000e+00 : f32
    %118 = vector.broadcast %cst_53 : f32 to vector<8x128xf32>
    %119 = arith.divf %118, %117 : vector<8x128xf32>
    %120 = vector.extract_strided_slice %103 {offsets = [0, 256], sizes = [8, 128], strides = [1, 1]} : vector<8x512xf32> to vector<8x128xf32>
    %121 = math.tanh %120 : vector<8x128xf32>
    %122 = vector.extract_strided_slice %103 {offsets = [0, 384], sizes = [8, 128], strides = [1, 1]} : vector<8x512xf32> to vector<8x128xf32>
    %cst_54 = arith.constant 0.000000e+00 : f32
    %123 = vector.broadcast %cst_54 : f32 to vector<8x128xf32>
    %124 = arith.subf %123, %122 : vector<8x128xf32>
    %125 = math.exp %124 : vector<8x128xf32>
    %cst_55 = arith.constant 1.000000e+00 : f32
    %126 = vector.broadcast %cst_55 : f32 to vector<8x128xf32>
    %127 = arith.addf %126, %125 : vector<8x128xf32>
    %cst_56 = arith.constant 1.000000e+00 : f32
    %128 = vector.broadcast %cst_56 : f32 to vector<8x128xf32>
    %129 = arith.divf %128, %127 : vector<8x128xf32>
    %130 = arith.mulf %119, %91 : vector<8x128xf32>
    %131 = arith.mulf %111, %121 : vector<8x128xf32>
    %132 = arith.addf %130, %131 : vector<8x128xf32>
    %133 = math.tanh %132 : vector<8x128xf32>
    %134 = arith.mulf %129, %133 : vector<8x128xf32>
    %135 = arith.index_cast %c2_i32 : i32 to index
    %c0_57 = arith.constant 0 : index
    %c0_58 = arith.constant 0 : index
    %136 = vector.load %arg6[%135, %c0_57, %c0_58] : memref<8x8x128xf32, #tpu.memory_space<vmem>>, vector<1x8x128xf32>
    %137 = vector.shape_cast %136 : vector<1x8x128xf32> to vector<8x128xf32>
    %138 = vector.shape_cast %134 : vector<8x128xf32> to vector<1x8x128xf32>
    tpu.vector_store %arg6[%135, %c0_57, %c0_58], %138 {strides = array<i32>} : memref<8x8x128xf32, #tpu.memory_space<vmem>>, vector<1x8x128xf32>,
    %c3_i32 = arith.constant 3 : i32
    %139 = arith.index_cast %c3_i32 : i32 to index
    %c0_59 = arith.constant 0 : index
    %c0_60 = arith.constant 0 : index
    %140 = vector.load %arg7[%139, %c0_59, %c0_60] : memref<8x8x512xf32, #tpu.memory_space<vmem>>, vector<1x8x512xf32>
    %141 = vector.shape_cast %140 : vector<1x8x512xf32> to vector<8x512xf32>
    %142 = arith.truncf %134 : vector<8x128xf32> to vector<8x128xbf16>
    %cst_61 = arith.constant dense<0.000000e+00> : vector<8x512xf32>
    %143 = tpu.matmul %142, %13, %cst_61 {dimension_numbers = #tpu.dot_dimension_numbers<[1], [0], [0], [1], [0, 0, 1, 1], [], []>} : vector<8x128xbf16>, vector<128x512xbf16>, vector<8x512xf32> -> vector<8x512xf32>
    %144 = arith.addf %141, %143 : vector<8x512xf32>
    %145 = vector.extract_strided_slice %144 {offsets = [0, 0], sizes = [8, 128], strides = [1, 1]} : vector<8x512xf32> to vector<8x128xf32>
    %cst_62 = arith.constant 0.000000e+00 : f32
    %146 = vector.broadcast %cst_62 : f32 to vector<8x128xf32>
    %147 = arith.subf %146, %145 : vector<8x128xf32>
    %148 = math.exp %147 : vector<8x128xf32>
    %cst_63 = arith.constant 1.000000e+00 : f32
    %149 = vector.broadcast %cst_63 : f32 to vector<8x128xf32>
    %150 = arith.addf %149, %148 : vector<8x128xf32>
    %cst_64 = arith.constant 1.000000e+00 : f32
    %151 = vector.broadcast %cst_64 : f32 to vector<8x128xf32>
    %152 = arith.divf %151, %150 : vector<8x128xf32>
    %153 = vector.extract_strided_slice %144 {offsets = [0, 128], sizes = [8, 128], strides = [1, 1]} : vector<8x512xf32> to vector<8x128xf32>
    %cst_65 = arith.constant 0.000000e+00 : f32
    %154 = vector.broadcast %cst_65 : f32 to vector<8x128xf32>
    %155 = arith.subf %154, %153 : vector<8x128xf32>
    %156 = math.exp %155 : vector<8x128xf32>
    %cst_66 = arith.constant 1.000000e+00 : f32
    %157 = vector.broadcast %cst_66 : f32 to vector<8x128xf32>
    %158 = arith.addf %157, %156 : vector<8x128xf32>
    %cst_67 = arith.constant 1.000000e+00 : f32
    %159 = vector.broadcast %cst_67 : f32 to vector<8x128xf32>
    %160 = arith.divf %159, %158 : vector<8x128xf32>
    %161 = vector.extract_strided_slice %144 {offsets = [0, 256], sizes = [8, 128], strides = [1, 1]} : vector<8x512xf32> to vector<8x128xf32>
    %162 = math.tanh %161 : vector<8x128xf32>
    %163 = vector.extract_strided_slice %144 {offsets = [0, 384], sizes = [8, 128], strides = [1, 1]} : vector<8x512xf32> to vector<8x128xf32>
    %cst_68 = arith.constant 0.000000e+00 : f32
    %164 = vector.broadcast %cst_68 : f32 to vector<8x128xf32>
    %165 = arith.subf %164, %163 : vector<8x128xf32>
    %166 = math.exp %165 : vector<8x128xf32>
    %cst_69 = arith.constant 1.000000e+00 : f32
    %167 = vector.broadcast %cst_69 : f32 to vector<8x128xf32>
    %168 = arith.addf %167, %166 : vector<8x128xf32>
    %cst_70 = arith.constant 1.000000e+00 : f32
    %169 = vector.broadcast %cst_70 : f32 to vector<8x128xf32>
    %170 = arith.divf %169, %168 : vector<8x128xf32>
    %171 = arith.mulf %160, %132 : vector<8x128xf32>
    %172 = arith.mulf %152, %162 : vector<8x128xf32>
    %173 = arith.addf %171, %172 : vector<8x128xf32>
    %174 = math.tanh %173 : vector<8x128xf32>
    %175 = arith.mulf %170, %174 : vector<8x128xf32>
    %176 = arith.index_cast %c3_i32 : i32 to index
    %c0_71 = arith.constant 0 : index
    %c0_72 = arith.constant 0 : index
    %177 = vector.load %arg6[%176, %c0_71, %c0_72] : memref<8x8x128xf32, #tpu.memory_space<vmem>>, vector<1x8x128xf32>
    %178 = vector.shape_cast %177 : vector<1x8x128xf32> to vector<8x128xf32>
    %179 = vector.shape_cast %175 : vector<8x128xf32> to vector<1x8x128xf32>
    tpu.vector_store %arg6[%176, %c0_71, %c0_72], %179 {strides = array<i32>} : memref<8x8x128xf32, #tpu.memory_space<vmem>>, vector<1x8x128xf32>,
    %c4_i32 = arith.constant 4 : i32
    %180 = arith.index_cast %c4_i32 : i32 to index
    %c0_73 = arith.constant 0 : index
    %c0_74 = arith.constant 0 : index
    %181 = vector.load %arg7[%180, %c0_73, %c0_74] : memref<8x8x512xf32, #tpu.memory_space<vmem>>, vector<1x8x512xf32>
    %182 = vector.shape_cast %181 : vector<1x8x512xf32> to vector<8x512xf32>
    %183 = arith.truncf %175 : vector<8x128xf32> to vector<8x128xbf16>
    %cst_75 = arith.constant dense<0.000000e+00> : vector<8x512xf32>
    %184 = tpu.matmul %183, %13, %cst_75 {dimension_numbers = #tpu.dot_dimension_numbers<[1], [0], [0], [1], [0, 0, 1, 1], [], []>} : vector<8x128xbf16>, vector<128x512xbf16>, vector<8x512xf32> -> vector<8x512xf32>
    %185 = arith.addf %182, %184 : vector<8x512xf32>
    %186 = vector.extract_strided_slice %185 {offsets = [0, 0], sizes = [8, 128], strides = [1, 1]} : vector<8x512xf32> to vector<8x128xf32>
    %cst_76 = arith.constant 0.000000e+00 : f32
    %187 = vector.broadcast %cst_76 : f32 to vector<8x128xf32>
    %188 = arith.subf %187, %186 : vector<8x128xf32>
    %189 = math.exp %188 : vector<8x128xf32>
    %cst_77 = arith.constant 1.000000e+00 : f32
    %190 = vector.broadcast %cst_77 : f32 to vector<8x128xf32>
    %191 = arith.addf %190, %189 : vector<8x128xf32>
    %cst_78 = arith.constant 1.000000e+00 : f32
    %192 = vector.broadcast %cst_78 : f32 to vector<8x128xf32>
    %193 = arith.divf %192, %191 : vector<8x128xf32>
    %194 = vector.extract_strided_slice %185 {offsets = [0, 128], sizes = [8, 128], strides = [1, 1]} : vector<8x512xf32> to vector<8x128xf32>
    %cst_79 = arith.constant 0.000000e+00 : f32
    %195 = vector.broadcast %cst_79 : f32 to vector<8x128xf32>
    %196 = arith.subf %195, %194 : vector<8x128xf32>
    %197 = math.exp %196 : vector<8x128xf32>
    %cst_80 = arith.constant 1.000000e+00 : f32
    %198 = vector.broadcast %cst_80 : f32 to vector<8x128xf32>
    %199 = arith.addf %198, %197 : vector<8x128xf32>
    %cst_81 = arith.constant 1.000000e+00 : f32
    %200 = vector.broadcast %cst_81 : f32 to vector<8x128xf32>
    %201 = arith.divf %200, %199 : vector<8x128xf32>
    %202 = vector.extract_strided_slice %185 {offsets = [0, 256], sizes = [8, 128], strides = [1, 1]} : vector<8x512xf32> to vector<8x128xf32>
    %203 = math.tanh %202 : vector<8x128xf32>
    %204 = vector.extract_strided_slice %185 {offsets = [0, 384], sizes = [8, 128], strides = [1, 1]} : vector<8x512xf32> to vector<8x128xf32>
    %cst_82 = arith.constant 0.000000e+00 : f32
    %205 = vector.broadcast %cst_82 : f32 to vector<8x128xf32>
    %206 = arith.subf %205, %204 : vector<8x128xf32>
    %207 = math.exp %206 : vector<8x128xf32>
    %cst_83 = arith.constant 1.000000e+00 : f32
    %208 = vector.broadcast %cst_83 : f32 to vector<8x128xf32>
    %209 = arith.addf %208, %207 : vector<8x128xf32>
    %cst_84 = arith.constant 1.000000e+00 : f32
    %210 = vector.broadcast %cst_84 : f32 to vector<8x128xf32>
    %211 = arith.divf %210, %209 : vector<8x128xf32>
    %212 = arith.mulf %201, %173 : vector<8x128xf32>
    %213 = arith.mulf %193, %203 : vector<8x128xf32>
    %214 = arith.addf %212, %213 : vector<8x128xf32>
    %215 = math.tanh %214 : vector<8x128xf32>
    %216 = arith.mulf %211, %215 : vector<8x128xf32>
    %217 = arith.index_cast %c4_i32 : i32 to index
    %c0_85 = arith.constant 0 : index
    %c0_86 = arith.constant 0 : index
    %218 = vector.load %arg6[%217, %c0_85, %c0_86] : memref<8x8x128xf32, #tpu.memory_space<vmem>>, vector<1x8x128xf32>
    %219 = vector.shape_cast %218 : vector<1x8x128xf32> to vector<8x128xf32>
    %220 = vector.shape_cast %216 : vector<8x128xf32> to vector<1x8x128xf32>
    tpu.vector_store %arg6[%217, %c0_85, %c0_86], %220 {strides = array<i32>} : memref<8x8x128xf32, #tpu.memory_space<vmem>>, vector<1x8x128xf32>,
    %c5_i32 = arith.constant 5 : i32
    %221 = arith.index_cast %c5_i32 : i32 to index
    %c0_87 = arith.constant 0 : index
    %c0_88 = arith.constant 0 : index
    %222 = vector.load %arg7[%221, %c0_87, %c0_88] : memref<8x8x512xf32, #tpu.memory_space<vmem>>, vector<1x8x512xf32>
    %223 = vector.shape_cast %222 : vector<1x8x512xf32> to vector<8x512xf32>
    %224 = arith.truncf %216 : vector<8x128xf32> to vector<8x128xbf16>
    %cst_89 = arith.constant dense<0.000000e+00> : vector<8x512xf32>
    %225 = tpu.matmul %224, %13, %cst_89 {dimension_numbers = #tpu.dot_dimension_numbers<[1], [0], [0], [1], [0, 0, 1, 1], [], []>} : vector<8x128xbf16>, vector<128x512xbf16>, vector<8x512xf32> -> vector<8x512xf32>
    %226 = arith.addf %223, %225 : vector<8x512xf32>
    %227 = vector.extract_strided_slice %226 {offsets = [0, 0], sizes = [8, 128], strides = [1, 1]} : vector<8x512xf32> to vector<8x128xf32>
    %cst_90 = arith.constant 0.000000e+00 : f32
    %228 = vector.broadcast %cst_90 : f32 to vector<8x128xf32>
    %229 = arith.subf %228, %227 : vector<8x128xf32>
    %230 = math.exp %229 : vector<8x128xf32>
    %cst_91 = arith.constant 1.000000e+00 : f32
    %231 = vector.broadcast %cst_91 : f32 to vector<8x128xf32>
    %232 = arith.addf %231, %230 : vector<8x128xf32>
    %cst_92 = arith.constant 1.000000e+00 : f32
    %233 = vector.broadcast %cst_92 : f32 to vector<8x128xf32>
    %234 = arith.divf %233, %232 : vector<8x128xf32>
    %235 = vector.extract_strided_slice %226 {offsets = [0, 128], sizes = [8, 128], strides = [1, 1]} : vector<8x512xf32> to vector<8x128xf32>
    %cst_93 = arith.constant 0.000000e+00 : f32
    %236 = vector.broadcast %cst_93 : f32 to vector<8x128xf32>
    %237 = arith.subf %236, %235 : vector<8x128xf32>
    %238 = math.exp %237 : vector<8x128xf32>
    %cst_94 = arith.constant 1.000000e+00 : f32
    %239 = vector.broadcast %cst_94 : f32 to vector<8x128xf32>
    %240 = arith.addf %239, %238 : vector<8x128xf32>
    %cst_95 = arith.constant 1.000000e+00 : f32
    %241 = vector.broadcast %cst_95 : f32 to vector<8x128xf32>
    %242 = arith.divf %241, %240 : vector<8x128xf32>
    %243 = vector.extract_strided_slice %226 {offsets = [0, 256], sizes = [8, 128], strides = [1, 1]} : vector<8x512xf32> to vector<8x128xf32>
    %244 = math.tanh %243 : vector<8x128xf32>
    %245 = vector.extract_strided_slice %226 {offsets = [0, 384], sizes = [8, 128], strides = [1, 1]} : vector<8x512xf32> to vector<8x128xf32>
    %cst_96 = arith.constant 0.000000e+00 : f32
    %246 = vector.broadcast %cst_96 : f32 to vector<8x128xf32>
    %247 = arith.subf %246, %245 : vector<8x128xf32>
    %248 = math.exp %247 : vector<8x128xf32>
    %cst_97 = arith.constant 1.000000e+00 : f32
    %249 = vector.broadcast %cst_97 : f32 to vector<8x128xf32>
    %250 = arith.addf %249, %248 : vector<8x128xf32>
    %cst_98 = arith.constant 1.000000e+00 : f32
    %251 = vector.broadcast %cst_98 : f32 to vector<8x128xf32>
    %252 = arith.divf %251, %250 : vector<8x128xf32>
    %253 = arith.mulf %242, %214 : vector<8x128xf32>
    %254 = arith.mulf %234, %244 : vector<8x128xf32>
    %255 = arith.addf %253, %254 : vector<8x128xf32>
    %256 = math.tanh %255 : vector<8x128xf32>
    %257 = arith.mulf %252, %256 : vector<8x128xf32>
    %258 = arith.index_cast %c5_i32 : i32 to index
    %c0_99 = arith.constant 0 : index
    %c0_100 = arith.constant 0 : index
    %259 = vector.load %arg6[%258, %c0_99, %c0_100] : memref<8x8x128xf32, #tpu.memory_space<vmem>>, vector<1x8x128xf32>
    %260 = vector.shape_cast %259 : vector<1x8x128xf32> to vector<8x128xf32>
    %261 = vector.shape_cast %257 : vector<8x128xf32> to vector<1x8x128xf32>
    tpu.vector_store %arg6[%258, %c0_99, %c0_100], %261 {strides = array<i32>} : memref<8x8x128xf32, #tpu.memory_space<vmem>>, vector<1x8x128xf32>,
    %c6_i32 = arith.constant 6 : i32
    %262 = arith.index_cast %c6_i32 : i32 to index
    %c0_101 = arith.constant 0 : index
    %c0_102 = arith.constant 0 : index
    %263 = vector.load %arg7[%262, %c0_101, %c0_102] : memref<8x8x512xf32, #tpu.memory_space<vmem>>, vector<1x8x512xf32>
    %264 = vector.shape_cast %263 : vector<1x8x512xf32> to vector<8x512xf32>
    %265 = arith.truncf %257 : vector<8x128xf32> to vector<8x128xbf16>
    %cst_103 = arith.constant dense<0.000000e+00> : vector<8x512xf32>
    %266 = tpu.matmul %265, %13, %cst_103 {dimension_numbers = #tpu.dot_dimension_numbers<[1], [0], [0], [1], [0, 0, 1, 1], [], []>} : vector<8x128xbf16>, vector<128x512xbf16>, vector<8x512xf32> -> vector<8x512xf32>
    %267 = arith.addf %264, %266 : vector<8x512xf32>
    %268 = vector.extract_strided_slice %267 {offsets = [0, 0], sizes = [8, 128], strides = [1, 1]} : vector<8x512xf32> to vector<8x128xf32>
    %cst_104 = arith.constant 0.000000e+00 : f32
    %269 = vector.broadcast %cst_104 : f32 to vector<8x128xf32>
    %270 = arith.subf %269, %268 : vector<8x128xf32>
    %271 = math.exp %270 : vector<8x128xf32>
    %cst_105 = arith.constant 1.000000e+00 : f32
    %272 = vector.broadcast %cst_105 : f32 to vector<8x128xf32>
    %273 = arith.addf %272, %271 : vector<8x128xf32>
    %cst_106 = arith.constant 1.000000e+00 : f32
    %274 = vector.broadcast %cst_106 : f32 to vector<8x128xf32>
    %275 = arith.divf %274, %273 : vector<8x128xf32>
    %276 = vector.extract_strided_slice %267 {offsets = [0, 128], sizes = [8, 128], strides = [1, 1]} : vector<8x512xf32> to vector<8x128xf32>
    %cst_107 = arith.constant 0.000000e+00 : f32
    %277 = vector.broadcast %cst_107 : f32 to vector<8x128xf32>
    %278 = arith.subf %277, %276 : vector<8x128xf32>
    %279 = math.exp %278 : vector<8x128xf32>
    %cst_108 = arith.constant 1.000000e+00 : f32
    %280 = vector.broadcast %cst_108 : f32 to vector<8x128xf32>
    %281 = arith.addf %280, %279 : vector<8x128xf32>
    %cst_109 = arith.constant 1.000000e+00 : f32
    %282 = vector.broadcast %cst_109 : f32 to vector<8x128xf32>
    %283 = arith.divf %282, %281 : vector<8x128xf32>
    %284 = vector.extract_strided_slice %267 {offsets = [0, 256], sizes = [8, 128], strides = [1, 1]} : vector<8x512xf32> to vector<8x128xf32>
    %285 = math.tanh %284 : vector<8x128xf32>
    %286 = vector.extract_strided_slice %267 {offsets = [0, 384], sizes = [8, 128], strides = [1, 1]} : vector<8x512xf32> to vector<8x128xf32>
    %cst_110 = arith.constant 0.000000e+00 : f32
    %287 = vector.broadcast %cst_110 : f32 to vector<8x128xf32>
    %288 = arith.subf %287, %286 : vector<8x128xf32>
    %289 = math.exp %288 : vector<8x128xf32>
    %cst_111 = arith.constant 1.000000e+00 : f32
    %290 = vector.broadcast %cst_111 : f32 to vector<8x128xf32>
    %291 = arith.addf %290, %289 : vector<8x128xf32>
    %cst_112 = arith.constant 1.000000e+00 : f32
    %292 = vector.broadcast %cst_112 : f32 to vector<8x128xf32>
    %293 = arith.divf %292, %291 : vector<8x128xf32>
    %294 = arith.mulf %283, %255 : vector<8x128xf32>
    %295 = arith.mulf %275, %285 : vector<8x128xf32>
    %296 = arith.addf %294, %295 : vector<8x128xf32>
    %297 = math.tanh %296 : vector<8x128xf32>
    %298 = arith.mulf %293, %297 : vector<8x128xf32>
    %299 = arith.index_cast %c6_i32 : i32 to index
    %c0_113 = arith.constant 0 : index
    %c0_114 = arith.constant 0 : index
    %300 = vector.load %arg6[%299, %c0_113, %c0_114] : memref<8x8x128xf32, #tpu.memory_space<vmem>>, vector<1x8x128xf32>
    %301 = vector.shape_cast %300 : vector<1x8x128xf32> to vector<8x128xf32>
    %302 = vector.shape_cast %298 : vector<8x128xf32> to vector<1x8x128xf32>
    tpu.vector_store %arg6[%299, %c0_113, %c0_114], %302 {strides = array<i32>} : memref<8x8x128xf32, #tpu.memory_space<vmem>>, vector<1x8x128xf32>,
    %c7_i32 = arith.constant 7 : i32
    %303 = arith.index_cast %c7_i32 : i32 to index
    %c0_115 = arith.constant 0 : index
    %c0_116 = arith.constant 0 : index
    %304 = vector.load %arg7[%303, %c0_115, %c0_116] : memref<8x8x512xf32, #tpu.memory_space<vmem>>, vector<1x8x512xf32>
    %305 = vector.shape_cast %304 : vector<1x8x512xf32> to vector<8x512xf32>
    %306 = arith.truncf %298 : vector<8x128xf32> to vector<8x128xbf16>
    %cst_117 = arith.constant dense<0.000000e+00> : vector<8x512xf32>
    %307 = tpu.matmul %306, %13, %cst_117 {dimension_numbers = #tpu.dot_dimension_numbers<[1], [0], [0], [1], [0, 0, 1, 1], [], []>} : vector<8x128xbf16>, vector<128x512xbf16>, vector<8x512xf32> -> vector<8x512xf32>
    %308 = arith.addf %305, %307 : vector<8x512xf32>
    %309 = vector.extract_strided_slice %308 {offsets = [0, 0], sizes = [8, 128], strides = [1, 1]} : vector<8x512xf32> to vector<8x128xf32>
    %cst_118 = arith.constant 0.000000e+00 : f32
    %310 = vector.broadcast %cst_118 : f32 to vector<8x128xf32>
    %311 = arith.subf %310, %309 : vector<8x128xf32>
    %312 = math.exp %311 : vector<8x128xf32>
    %cst_119 = arith.constant 1.000000e+00 : f32
    %313 = vector.broadcast %cst_119 : f32 to vector<8x128xf32>
    %314 = arith.addf %313, %312 : vector<8x128xf32>
    %cst_120 = arith.constant 1.000000e+00 : f32
    %315 = vector.broadcast %cst_120 : f32 to vector<8x128xf32>
    %316 = arith.divf %315, %314 : vector<8x128xf32>
    %317 = vector.extract_strided_slice %308 {offsets = [0, 128], sizes = [8, 128], strides = [1, 1]} : vector<8x512xf32> to vector<8x128xf32>
    %cst_121 = arith.constant 0.000000e+00 : f32
    %318 = vector.broadcast %cst_121 : f32 to vector<8x128xf32>
    %319 = arith.subf %318, %317 : vector<8x128xf32>
    %320 = math.exp %319 : vector<8x128xf32>
    %cst_122 = arith.constant 1.000000e+00 : f32
    %321 = vector.broadcast %cst_122 : f32 to vector<8x128xf32>
    %322 = arith.addf %321, %320 : vector<8x128xf32>
    %cst_123 = arith.constant 1.000000e+00 : f32
    %323 = vector.broadcast %cst_123 : f32 to vector<8x128xf32>
    %324 = arith.divf %323, %322 : vector<8x128xf32>
    %325 = vector.extract_strided_slice %308 {offsets = [0, 256], sizes = [8, 128], strides = [1, 1]} : vector<8x512xf32> to vector<8x128xf32>
    %326 = math.tanh %325 : vector<8x128xf32>
    %327 = vector.extract_strided_slice %308 {offsets = [0, 384], sizes = [8, 128], strides = [1, 1]} : vector<8x512xf32> to vector<8x128xf32>
    %cst_124 = arith.constant 0.000000e+00 : f32
    %328 = vector.broadcast %cst_124 : f32 to vector<8x128xf32>
    %329 = arith.subf %328, %327 : vector<8x128xf32>
    %330 = math.exp %329 : vector<8x128xf32>
    %cst_125 = arith.constant 1.000000e+00 : f32
    %331 = vector.broadcast %cst_125 : f32 to vector<8x128xf32>
    %332 = arith.addf %331, %330 : vector<8x128xf32>
    %cst_126 = arith.constant 1.000000e+00 : f32
    %333 = vector.broadcast %cst_126 : f32 to vector<8x128xf32>
    %334 = arith.divf %333, %332 : vector<8x128xf32>
    %335 = arith.mulf %324, %296 : vector<8x128xf32>
    %336 = arith.mulf %316, %326 : vector<8x128xf32>
    %337 = arith.addf %335, %336 : vector<8x128xf32>
    %338 = math.tanh %337 : vector<8x128xf32>
    %339 = arith.mulf %334, %338 : vector<8x128xf32>
    %340 = arith.index_cast %c7_i32 : i32 to index
    %c0_127 = arith.constant 0 : index
    %c0_128 = arith.constant 0 : index
    %341 = vector.load %arg6[%340, %c0_127, %c0_128] : memref<8x8x128xf32, #tpu.memory_space<vmem>>, vector<1x8x128xf32>
    %342 = vector.shape_cast %341 : vector<1x8x128xf32> to vector<8x128xf32>
    %343 = vector.shape_cast %339 : vector<8x128xf32> to vector<1x8x128xf32>
    tpu.vector_store %arg6[%340, %c0_127, %c0_128], %343 {strides = array<i32>} : memref<8x8x128xf32, #tpu.memory_space<vmem>>, vector<1x8x128xf32>,
    %c8_i32 = arith.constant 8 : i32
    %c0_129 = arith.constant 0 : index
    %c0_130 = arith.constant 0 : index
    %344 = vector.load %arg8[%c0_129, %c0_130] : memref<8x128xf32, #tpu.memory_space<vmem>>, vector<8x128xf32>
    tpu.vector_store %arg8[%c0_129, %c0_130], %339 {strides = array<i32>} : memref<8x128xf32, #tpu.memory_space<vmem>>, vector<8x128xf32>,
    %c0_131 = arith.constant 0 : index
    %c0_132 = arith.constant 0 : index
    %345 = vector.load %arg9[%c0_131, %c0_132] : memref<8x128xf32, #tpu.memory_space<vmem>>, vector<8x128xf32>
    tpu.vector_store %arg9[%c0_131, %c0_132], %337 {strides = array<i32>} : memref<8x128xf32, #tpu.memory_space<vmem>>, vector<8x128xf32>,
    return
  }
  func.func @transform_0(%arg0: i32, %arg1: i32) -> (i32, i32, i32) {
    %c0_i32 = arith.constant 0 : i32
    %c0_i32_0 = arith.constant 0 : i32
    return %arg1, %arg0, %c0_i32 : i32, i32, i32
  }
  func.func @transform_1(%arg0: i32, %arg1: i32) -> (i32, i32) {
    %c0_i32 = arith.constant 0 : i32
    %c0_i32_0 = arith.constant 0 : i32
    %c0_i32_1 = arith.constant 0 : i32
    return %c0_i32, %c0_i32_0 : i32, i32
  }
  func.func @transform_2(%arg0: i32, %arg1: i32) -> (i32, i32) {
    %c0_i32 = arith.constant 0 : i32
    %c0_i32_0 = arith.constant 0 : i32
    %c0_i32_1 = arith.constant 0 : i32
    return %c0_i32, %c0_i32_0 : i32, i32
  }
  func.func @transform_3(%arg0: i32, %arg1: i32) -> (i32, i32) {
    %c0_i32 = arith.constant 0 : i32
    %c0_i32_0 = arith.constant 0 : i32
    %c0_i32_1 = arith.constant 0 : i32
    return %c0_i32, %c0_i32_0 : i32, i32
  }
  func.func @transform_4(%arg0: i32, %arg1: i32) -> (i32, i32, i32) {
    %c0_i32 = arith.constant 0 : i32
    %c0_i32_0 = arith.constant 0 : i32
    return %arg1, %arg0, %c0_i32 : i32, i32, i32
  }
}

module attributes {stable_mosaic.version = 11 : i64} {
  func.func @_lstm_chunk_kernel(%arg0: i32, %arg1: i32, %arg2: memref<8x8x8xf32, #tpu.memory_space<vmem>>, %arg3: memref<8x512xbf16, #tpu.memory_space<vmem>>, %arg4: memref<128x512xbf16, #tpu.memory_space<vmem>>, %arg5: memref<1x512xf32, #tpu.memory_space<vmem>>, %arg6: memref<8x8x128xf32, #tpu.memory_space<vmem>>, %arg7: memref<8x8x512xf32, #tpu.memory_space<vmem>>, %arg8: memref<8x128xf32, #tpu.memory_space<vmem>>, %arg9: memref<8x128xf32, #tpu.memory_space<vmem>>) attributes {dimension_semantics = [#tpu.dimension_semantics<parallel>, #tpu.dimension_semantics<arbitrary>], iteration_bounds = array<i64: 1, 1>, scalar_prefetch = 0 : i64, scratch_operands = 3 : i64, tpu.core_type = #tpu.core_type<tc>, window_params = [{transform_indices = @transform_0, window_bounds = array<i64: 8, 8, 8>}, {pipeline_mode = #tpu.pipeline_mode<synchronous>, transform_indices = @transform_1, window_bounds = array<i64: 8, 512>}, {pipeline_mode = #tpu.pipeline_mode<synchronous>, transform_indices = @transform_2, window_bounds = array<i64: 128, 512>}, {pipeline_mode = #tpu.pipeline_mode<synchronous>, transform_indices = @transform_3, window_bounds = array<i64: 1, 512>}, {transform_indices = @transform_4, window_bounds = array<i64: 8, 8, 128>}]} {
    %c0_i32 = arith.constant 0 : i32
    %0 = arith.cmpi eq, %arg1, %c0_i32 : i32
    %1 = arith.extui %0 : i1 to i32
    %c0_i32_0 = arith.constant 0 : i32
    %2 = arith.cmpi ne, %1, %c0_i32_0 : i32
    scf.if %2 {
      %cst_133 = arith.constant 0.000000e+00 : f32
      %346 = vector.broadcast %cst_133 : f32 to vector<8x128xf32>
      %c0_134 = arith.constant 0 : index
      %c0_135 = arith.constant 0 : index
      %347 = vector.load %arg8[%c0_134, %c0_135] : memref<8x128xf32, #tpu.memory_space<vmem>>, vector<8x128xf32>
      tpu.vector_store %arg8[%c0_134, %c0_135], %346 {strides = array<i32>} : memref<8x128xf32, #tpu.memory_space<vmem>>, vector<8x128xf32>,
      %cst_136 = arith.constant 0.000000e+00 : f32
      %348 = vector.broadcast %cst_136 : f32 to vector<8x128xf32>
      %c0_137 = arith.constant 0 : index
      %c0_138 = arith.constant 0 : index
      %349 = vector.load %arg9[%c0_137, %c0_138] : memref<8x128xf32, #tpu.memory_space<vmem>>, vector<8x128xf32>
      tpu.vector_store %arg9[%c0_137, %c0_138], %348 {strides = array<i32>} : memref<8x128xf32, #tpu.memory_space<vmem>>, vector<8x128xf32>,
    } else {
    }
    %c0 = arith.constant 0 : index
    %c0_1 = arith.constant 0 : index
    %c0_2 = arith.constant 0 : index
    %3 = vector.load %arg2[%c0, %c0_1, %c0_2] : memref<8x8x8xf32, #tpu.memory_space<vmem>>, vector<8x8x8xf32>
    %4 = vector.shape_cast %3 : vector<8x8x8xf32> to vector<64x8xf32>
    %5 = arith.truncf %4 : vector<64x8xf32> to vector<64x8xbf16>
    %c0_3 = arith.constant 0 : index
    %c0_4 = arith.constant 0 : index
    %6 = vector.load %arg3[%c0_3, %c0_4] : memref<8x512xbf16, #tpu.memory_space<vmem>>, vector<8x512xbf16>
    %cst = arith.constant dense<0.000000e+00> : vector<64x512xf32>
    %7 = tpu.matmul %5, %6, %cst {dimension_numbers = #tpu.dot_dimension_numbers<[1], [0], [0], [1], [0, 0, 1, 1], [], []>} : vector<64x8xbf16>, vector<8x512xbf16>, vector<64x512xf32> -> vector<64x512xf32>
    %c0_5 = arith.constant 0 : index
    %c0_6 = arith.constant 0 : index
    %8 = vector.load %arg5[%c0_5, %c0_6] : memref<1x512xf32, #tpu.memory_space<vmem>>, vector<1x512xf32>
    %9 = vector.broadcast %8 : vector<1x512xf32> to vector<64x512xf32>
    %10 = arith.addf %7, %9 : vector<64x512xf32>
    %11 = vector.shape_cast %10 : vector<64x512xf32> to vector<8x8x512xf32>
    %c0_7 = arith.constant 0 : index
    %c0_8 = arith.constant 0 : index
    %c0_9 = arith.constant 0 : index
    %12 = vector.load %arg7[%c0_7, %c0_8, %c0_9] : memref<8x8x512xf32, #tpu.memory_space<vmem>>, vector<8x8x512xf32>
    tpu.vector_store %arg7[%c0_7, %c0_8, %c0_9], %11 {strides = array<i32>} : memref<8x8x512xf32, #tpu.memory_space<vmem>>, vector<8x8x512xf32>,
    %c0_10 = arith.constant 0 : index
    %c0_11 = arith.constant 0 : index
    %13 = vector.load %arg4[%c0_10, %c0_11] : memref<128x512xbf16, #tpu.memory_space<vmem>>, vector<128x512xbf16>
    %c0_12 = arith.constant 0 : index
    %c0_13 = arith.constant 0 : index
    %14 = vector.load %arg8[%c0_12, %c0_13] : memref<8x128xf32, #tpu.memory_space<vmem>>, vector<8x128xf32>
    %c0_14 = arith.constant 0 : index
    %c0_15 = arith.constant 0 : index
    %15 = vector.load %arg9[%c0_14, %c0_15] : memref<8x128xf32, #tpu.memory_space<vmem>>, vector<8x128xf32>
    %c0_i32_16 = arith.constant 0 : i32
    %16 = arith.index_cast %c0_i32_16 : i32 to index
    %c0_17 = arith.constant 0 : index
    %c0_18 = arith.constant 0 : index
    %17 = vector.load %arg7[%16, %c0_17, %c0_18] : memref<8x8x512xf32, #tpu.memory_space<vmem>>, vector<1x8x512xf32>
    %18 = vector.shape_cast %17 : vector<1x8x512xf32> to vector<8x512xf32>
    %19 = arith.truncf %14 : vector<8x128xf32> to vector<8x128xbf16>
    %cst_19 = arith.constant dense<0.000000e+00> : vector<8x512xf32>
    %20 = tpu.matmul %19, %13, %cst_19 {dimension_numbers = #tpu.dot_dimension_numbers<[1], [0], [0], [1], [0, 0, 1, 1], [], []>} : vector<8x128xbf16>, vector<128x512xbf16>, vector<8x512xf32> -> vector<8x512xf32>
    %21 = arith.addf %18, %20 : vector<8x512xf32>
    %22 = vector.extract_strided_slice %21 {offsets = [0, 0], sizes = [8, 128], strides = [1, 1]} : vector<8x512xf32> to vector<8x128xf32>
    %cst_20 = arith.constant 0.000000e+00 : f32
    %23 = vector.broadcast %cst_20 : f32 to vector<8x128xf32>
    %24 = arith.subf %23, %22 : vector<8x128xf32>
    %25 = math.exp %24 : vector<8x128xf32>
    %cst_21 = arith.constant 1.000000e+00 : f32
    %26 = vector.broadcast %cst_21 : f32 to vector<8x128xf32>
    %27 = arith.addf %26, %25 : vector<8x128xf32>
    %cst_22 = arith.constant 1.000000e+00 : f32
    %28 = vector.broadcast %cst_22 : f32 to vector<8x128xf32>
    %29 = arith.divf %28, %27 : vector<8x128xf32>
    %30 = vector.extract_strided_slice %21 {offsets = [0, 128], sizes = [8, 128], strides = [1, 1]} : vector<8x512xf32> to vector<8x128xf32>
    %cst_23 = arith.constant 0.000000e+00 : f32
    %31 = vector.broadcast %cst_23 : f32 to vector<8x128xf32>
    %32 = arith.subf %31, %30 : vector<8x128xf32>
    %33 = math.exp %32 : vector<8x128xf32>
    %cst_24 = arith.constant 1.000000e+00 : f32
    %34 = vector.broadcast %cst_24 : f32 to vector<8x128xf32>
    %35 = arith.addf %34, %33 : vector<8x128xf32>
    %cst_25 = arith.constant 1.000000e+00 : f32
    %36 = vector.broadcast %cst_25 : f32 to vector<8x128xf32>
    %37 = arith.divf %36, %35 : vector<8x128xf32>
    %38 = vector.extract_strided_slice %21 {offsets = [0, 256], sizes = [8, 128], strides = [1, 1]} : vector<8x512xf32> to vector<8x128xf32>
    %39 = math.tanh %38 : vector<8x128xf32>
    %40 = vector.extract_strided_slice %21 {offsets = [0, 384], sizes = [8, 128], strides = [1, 1]} : vector<8x512xf32> to vector<8x128xf32>
    %cst_26 = arith.constant 0.000000e+00 : f32
    %41 = vector.broadcast %cst_26 : f32 to vector<8x128xf32>
    %42 = arith.subf %41, %40 : vector<8x128xf32>
    %43 = math.exp %42 : vector<8x128xf32>
    %cst_27 = arith.constant 1.000000e+00 : f32
    %44 = vector.broadcast %cst_27 : f32 to vector<8x128xf32>
    %45 = arith.addf %44, %43 : vector<8x128xf32>
    %cst_28 = arith.constant 1.000000e+00 : f32
    %46 = vector.broadcast %cst_28 : f32 to vector<8x128xf32>
    %47 = arith.divf %46, %45 : vector<8x128xf32>
    %48 = arith.mulf %37, %15 : vector<8x128xf32>
    %49 = arith.mulf %29, %39 : vector<8x128xf32>
    %50 = arith.addf %48, %49 : vector<8x128xf32>
    %51 = math.tanh %50 : vector<8x128xf32>
    %52 = arith.mulf %47, %51 : vector<8x128xf32>
    %53 = arith.index_cast %c0_i32_16 : i32 to index
    %c0_29 = arith.constant 0 : index
    %c0_30 = arith.constant 0 : index
    %54 = vector.load %arg6[%53, %c0_29, %c0_30] : memref<8x8x128xf32, #tpu.memory_space<vmem>>, vector<1x8x128xf32>
    %55 = vector.shape_cast %54 : vector<1x8x128xf32> to vector<8x128xf32>
    %56 = vector.shape_cast %52 : vector<8x128xf32> to vector<1x8x128xf32>
    tpu.vector_store %arg6[%53, %c0_29, %c0_30], %56 {strides = array<i32>} : memref<8x8x128xf32, #tpu.memory_space<vmem>>, vector<1x8x128xf32>,
    %c1_i32 = arith.constant 1 : i32
    %57 = arith.index_cast %c1_i32 : i32 to index
    %c0_31 = arith.constant 0 : index
    %c0_32 = arith.constant 0 : index
    %58 = vector.load %arg7[%57, %c0_31, %c0_32] : memref<8x8x512xf32, #tpu.memory_space<vmem>>, vector<1x8x512xf32>
    %59 = vector.shape_cast %58 : vector<1x8x512xf32> to vector<8x512xf32>
    %60 = arith.truncf %52 : vector<8x128xf32> to vector<8x128xbf16>
    %cst_33 = arith.constant dense<0.000000e+00> : vector<8x512xf32>
    %61 = tpu.matmul %60, %13, %cst_33 {dimension_numbers = #tpu.dot_dimension_numbers<[1], [0], [0], [1], [0, 0, 1, 1], [], []>} : vector<8x128xbf16>, vector<128x512xbf16>, vector<8x512xf32> -> vector<8x512xf32>
    %62 = arith.addf %59, %61 : vector<8x512xf32>
    %63 = vector.extract_strided_slice %62 {offsets = [0, 0], sizes = [8, 128], strides = [1, 1]} : vector<8x512xf32> to vector<8x128xf32>
    %cst_34 = arith.constant 0.000000e+00 : f32
    %64 = vector.broadcast %cst_34 : f32 to vector<8x128xf32>
    %65 = arith.subf %64, %63 : vector<8x128xf32>
    %66 = math.exp %65 : vector<8x128xf32>
    %cst_35 = arith.constant 1.000000e+00 : f32
    %67 = vector.broadcast %cst_35 : f32 to vector<8x128xf32>
    %68 = arith.addf %67, %66 : vector<8x128xf32>
    %cst_36 = arith.constant 1.000000e+00 : f32
    %69 = vector.broadcast %cst_36 : f32 to vector<8x128xf32>
    %70 = arith.divf %69, %68 : vector<8x128xf32>
    %71 = vector.extract_strided_slice %62 {offsets = [0, 128], sizes = [8, 128], strides = [1, 1]} : vector<8x512xf32> to vector<8x128xf32>
    %cst_37 = arith.constant 0.000000e+00 : f32
    %72 = vector.broadcast %cst_37 : f32 to vector<8x128xf32>
    %73 = arith.subf %72, %71 : vector<8x128xf32>
    %74 = math.exp %73 : vector<8x128xf32>
    %cst_38 = arith.constant 1.000000e+00 : f32
    %75 = vector.broadcast %cst_38 : f32 to vector<8x128xf32>
    %76 = arith.addf %75, %74 : vector<8x128xf32>
    %cst_39 = arith.constant 1.000000e+00 : f32
    %77 = vector.broadcast %cst_39 : f32 to vector<8x128xf32>
    %78 = arith.divf %77, %76 : vector<8x128xf32>
    %79 = vector.extract_strided_slice %62 {offsets = [0, 256], sizes = [8, 128], strides = [1, 1]} : vector<8x512xf32> to vector<8x128xf32>
    %80 = math.tanh %79 : vector<8x128xf32>
    %81 = vector.extract_strided_slice %62 {offsets = [0, 384], sizes = [8, 128], strides = [1, 1]} : vector<8x512xf32> to vector<8x128xf32>
    %cst_40 = arith.constant 0.000000e+00 : f32
    %82 = vector.broadcast %cst_40 : f32 to vector<8x128xf32>
    %83 = arith.subf %82, %81 : vector<8x128xf32>
    %84 = math.exp %83 : vector<8x128xf32>
    %cst_41 = arith.constant 1.000000e+00 : f32
    %85 = vector.broadcast %cst_41 : f32 to vector<8x128xf32>
    %86 = arith.addf %85, %84 : vector<8x128xf32>
    %cst_42 = arith.constant 1.000000e+00 : f32
    %87 = vector.broadcast %cst_42 : f32 to vector<8x128xf32>
    %88 = arith.divf %87, %86 : vector<8x128xf32>
    %89 = arith.mulf %78, %50 : vector<8x128xf32>
    %90 = arith.mulf %70, %80 : vector<8x128xf32>
    %91 = arith.addf %89, %90 : vector<8x128xf32>
    %92 = math.tanh %91 : vector<8x128xf32>
    %93 = arith.mulf %88, %92 : vector<8x128xf32>
    %94 = arith.index_cast %c1_i32 : i32 to index
    %c0_43 = arith.constant 0 : index
    %c0_44 = arith.constant 0 : index
    %95 = vector.load %arg6[%94, %c0_43, %c0_44] : memref<8x8x128xf32, #tpu.memory_space<vmem>>, vector<1x8x128xf32>
    %96 = vector.shape_cast %95 : vector<1x8x128xf32> to vector<8x128xf32>
    %97 = vector.shape_cast %93 : vector<8x128xf32> to vector<1x8x128xf32>
    tpu.vector_store %arg6[%94, %c0_43, %c0_44], %97 {strides = array<i32>} : memref<8x8x128xf32, #tpu.memory_space<vmem>>, vector<1x8x128xf32>,
    %c2_i32 = arith.constant 2 : i32
    %98 = arith.index_cast %c2_i32 : i32 to index
    %c0_45 = arith.constant 0 : index
    %c0_46 = arith.constant 0 : index
    %99 = vector.load %arg7[%98, %c0_45, %c0_46] : memref<8x8x512xf32, #tpu.memory_space<vmem>>, vector<1x8x512xf32>
    %100 = vector.shape_cast %99 : vector<1x8x512xf32> to vector<8x512xf32>
    %101 = arith.truncf %93 : vector<8x128xf32> to vector<8x128xbf16>
    %cst_47 = arith.constant dense<0.000000e+00> : vector<8x512xf32>
    %102 = tpu.matmul %101, %13, %cst_47 {dimension_numbers = #tpu.dot_dimension_numbers<[1], [0], [0], [1], [0, 0, 1, 1], [], []>} : vector<8x128xbf16>, vector<128x512xbf16>, vector<8x512xf32> -> vector<8x512xf32>
    %103 = arith.addf %100, %102 : vector<8x512xf32>
    %104 = vector.extract_strided_slice %103 {offsets = [0, 0], sizes = [8, 128], strides = [1, 1]} : vector<8x512xf32> to vector<8x128xf32>
    %cst_48 = arith.constant 0.000000e+00 : f32
    %105 = vector.broadcast %cst_48 : f32 to vector<8x128xf32>
    %106 = arith.subf %105, %104 : vector<8x128xf32>
    %107 = math.exp %106 : vector<8x128xf32>
    %cst_49 = arith.constant 1.000000e+00 : f32
    %108 = vector.broadcast %cst_49 : f32 to vector<8x128xf32>
    %109 = arith.addf %108, %107 : vector<8x128xf32>
    %cst_50 = arith.constant 1.000000e+00 : f32
    %110 = vector.broadcast %cst_50 : f32 to vector<8x128xf32>
    %111 = arith.divf %110, %109 : vector<8x128xf32>
    %112 = vector.extract_strided_slice %103 {offsets = [0, 128], sizes = [8, 128], strides = [1, 1]} : vector<8x512xf32> to vector<8x128xf32>
    %cst_51 = arith.constant 0.000000e+00 : f32
    %113 = vector.broadcast %cst_51 : f32 to vector<8x128xf32>
    %114 = arith.subf %113, %112 : vector<8x128xf32>
    %115 = math.exp %114 : vector<8x128xf32>
    %cst_52 = arith.constant 1.000000e+00 : f32
    %116 = vector.broadcast %cst_52 : f32 to vector<8x128xf32>
    %117 = arith.addf %116, %115 : vector<8x128xf32>
    %cst_53 = arith.constant 1.000000e+00 : f32
    %118 = vector.broadcast %cst_53 : f32 to vector<8x128xf32>
    %119 = arith.divf %118, %117 : vector<8x128xf32>
    %120 = vector.extract_strided_slice %103 {offsets = [0, 256], sizes = [8, 128], strides = [1, 1]} : vector<8x512xf32> to vector<8x128xf32>
    %121 = math.tanh %120 : vector<8x128xf32>
    %122 = vector.extract_strided_slice %103 {offsets = [0, 384], sizes = [8, 128], strides = [1, 1]} : vector<8x512xf32> to vector<8x128xf32>
    %cst_54 = arith.constant 0.000000e+00 : f32
    %123 = vector.broadcast %cst_54 : f32 to vector<8x128xf32>
    %124 = arith.subf %123, %122 : vector<8x128xf32>
    %125 = math.exp %124 : vector<8x128xf32>
    %cst_55 = arith.constant 1.000000e+00 : f32
    %126 = vector.broadcast %cst_55 : f32 to vector<8x128xf32>
    %127 = arith.addf %126, %125 : vector<8x128xf32>
    %cst_56 = arith.constant 1.000000e+00 : f32
    %128 = vector.broadcast %cst_56 : f32 to vector<8x128xf32>
    %129 = arith.divf %128, %127 : vector<8x128xf32>
    %130 = arith.mulf %119, %91 : vector<8x128xf32>
    %131 = arith.mulf %111, %121 : vector<8x128xf32>
    %132 = arith.addf %130, %131 : vector<8x128xf32>
    %133 = math.tanh %132 : vector<8x128xf32>
    %134 = arith.mulf %129, %133 : vector<8x128xf32>
    %135 = arith.index_cast %c2_i32 : i32 to index
    %c0_57 = arith.constant 0 : index
    %c0_58 = arith.constant 0 : index
    %136 = vector.load %arg6[%135, %c0_57, %c0_58] : memref<8x8x128xf32, #tpu.memory_space<vmem>>, vector<1x8x128xf32>
    %137 = vector.shape_cast %136 : vector<1x8x128xf32> to vector<8x128xf32>
    %138 = vector.shape_cast %134 : vector<8x128xf32> to vector<1x8x128xf32>
    tpu.vector_store %arg6[%135, %c0_57, %c0_58], %138 {strides = array<i32>} : memref<8x8x128xf32, #tpu.memory_space<vmem>>, vector<1x8x128xf32>,
    %c3_i32 = arith.constant 3 : i32
    %139 = arith.index_cast %c3_i32 : i32 to index
    %c0_59 = arith.constant 0 : index
    %c0_60 = arith.constant 0 : index
    %140 = vector.load %arg7[%139, %c0_59, %c0_60] : memref<8x8x512xf32, #tpu.memory_space<vmem>>, vector<1x8x512xf32>
    %141 = vector.shape_cast %140 : vector<1x8x512xf32> to vector<8x512xf32>
    %142 = arith.truncf %134 : vector<8x128xf32> to vector<8x128xbf16>
    %cst_61 = arith.constant dense<0.000000e+00> : vector<8x512xf32>
    %143 = tpu.matmul %142, %13, %cst_61 {dimension_numbers = #tpu.dot_dimension_numbers<[1], [0], [0], [1], [0, 0, 1, 1], [], []>} : vector<8x128xbf16>, vector<128x512xbf16>, vector<8x512xf32> -> vector<8x512xf32>
    %144 = arith.addf %141, %143 : vector<8x512xf32>
    %145 = vector.extract_strided_slice %144 {offsets = [0, 0], sizes = [8, 128], strides = [1, 1]} : vector<8x512xf32> to vector<8x128xf32>
    %cst_62 = arith.constant 0.000000e+00 : f32
    %146 = vector.broadcast %cst_62 : f32 to vector<8x128xf32>
    %147 = arith.subf %146, %145 : vector<8x128xf32>
    %148 = math.exp %147 : vector<8x128xf32>
    %cst_63 = arith.constant 1.000000e+00 : f32
    %149 = vector.broadcast %cst_63 : f32 to vector<8x128xf32>
    %150 = arith.addf %149, %148 : vector<8x128xf32>
    %cst_64 = arith.constant 1.000000e+00 : f32
    %151 = vector.broadcast %cst_64 : f32 to vector<8x128xf32>
    %152 = arith.divf %151, %150 : vector<8x128xf32>
    %153 = vector.extract_strided_slice %144 {offsets = [0, 128], sizes = [8, 128], strides = [1, 1]} : vector<8x512xf32> to vector<8x128xf32>
    %cst_65 = arith.constant 0.000000e+00 : f32
    %154 = vector.broadcast %cst_65 : f32 to vector<8x128xf32>
    %155 = arith.subf %154, %153 : vector<8x128xf32>
    %156 = math.exp %155 : vector<8x128xf32>
    %cst_66 = arith.constant 1.000000e+00 : f32
    %157 = vector.broadcast %cst_66 : f32 to vector<8x128xf32>
    %158 = arith.addf %157, %156 : vector<8x128xf32>
    %cst_67 = arith.constant 1.000000e+00 : f32
    %159 = vector.broadcast %cst_67 : f32 to vector<8x128xf32>
    %160 = arith.divf %159, %158 : vector<8x128xf32>
    %161 = vector.extract_strided_slice %144 {offsets = [0, 256], sizes = [8, 128], strides = [1, 1]} : vector<8x512xf32> to vector<8x128xf32>
    %162 = math.tanh %161 : vector<8x128xf32>
    %163 = vector.extract_strided_slice %144 {offsets = [0, 384], sizes = [8, 128], strides = [1, 1]} : vector<8x512xf32> to vector<8x128xf32>
    %cst_68 = arith.constant 0.000000e+00 : f32
    %164 = vector.broadcast %cst_68 : f32 to vector<8x128xf32>
    %165 = arith.subf %164, %163 : vector<8x128xf32>
    %166 = math.exp %165 : vector<8x128xf32>
    %cst_69 = arith.constant 1.000000e+00 : f32
    %167 = vector.broadcast %cst_69 : f32 to vector<8x128xf32>
    %168 = arith.addf %167, %166 : vector<8x128xf32>
    %cst_70 = arith.constant 1.000000e+00 : f32
    %169 = vector.broadcast %cst_70 : f32 to vector<8x128xf32>
    %170 = arith.divf %169, %168 : vector<8x128xf32>
    %171 = arith.mulf %160, %132 : vector<8x128xf32>
    %172 = arith.mulf %152, %162 : vector<8x128xf32>
    %173 = arith.addf %171, %172 : vector<8x128xf32>
    %174 = math.tanh %173 : vector<8x128xf32>
    %175 = arith.mulf %170, %174 : vector<8x128xf32>
    %176 = arith.index_cast %c3_i32 : i32 to index
    %c0_71 = arith.constant 0 : index
    %c0_72 = arith.constant 0 : index
    %177 = vector.load %arg6[%176, %c0_71, %c0_72] : memref<8x8x128xf32, #tpu.memory_space<vmem>>, vector<1x8x128xf32>
    %178 = vector.shape_cast %177 : vector<1x8x128xf32> to vector<8x128xf32>
    %179 = vector.shape_cast %175 : vector<8x128xf32> to vector<1x8x128xf32>
    tpu.vector_store %arg6[%176, %c0_71, %c0_72], %179 {strides = array<i32>} : memref<8x8x128xf32, #tpu.memory_space<vmem>>, vector<1x8x128xf32>,
    %c4_i32 = arith.constant 4 : i32
    %180 = arith.index_cast %c4_i32 : i32 to index
    %c0_73 = arith.constant 0 : index
    %c0_74 = arith.constant 0 : index
    %181 = vector.load %arg7[%180, %c0_73, %c0_74] : memref<8x8x512xf32, #tpu.memory_space<vmem>>, vector<1x8x512xf32>
    %182 = vector.shape_cast %181 : vector<1x8x512xf32> to vector<8x512xf32>
    %183 = arith.truncf %175 : vector<8x128xf32> to vector<8x128xbf16>
    %cst_75 = arith.constant dense<0.000000e+00> : vector<8x512xf32>
    %184 = tpu.matmul %183, %13, %cst_75 {dimension_numbers = #tpu.dot_dimension_numbers<[1], [0], [0], [1], [0, 0, 1, 1], [], []>} : vector<8x128xbf16>, vector<128x512xbf16>, vector<8x512xf32> -> vector<8x512xf32>
    %185 = arith.addf %182, %184 : vector<8x512xf32>
    %186 = vector.extract_strided_slice %185 {offsets = [0, 0], sizes = [8, 128], strides = [1, 1]} : vector<8x512xf32> to vector<8x128xf32>
    %cst_76 = arith.constant 0.000000e+00 : f32
    %187 = vector.broadcast %cst_76 : f32 to vector<8x128xf32>
    %188 = arith.subf %187, %186 : vector<8x128xf32>
    %189 = math.exp %188 : vector<8x128xf32>
    %cst_77 = arith.constant 1.000000e+00 : f32
    %190 = vector.broadcast %cst_77 : f32 to vector<8x128xf32>
    %191 = arith.addf %190, %189 : vector<8x128xf32>
    %cst_78 = arith.constant 1.000000e+00 : f32
    %192 = vector.broadcast %cst_78 : f32 to vector<8x128xf32>
    %193 = arith.divf %192, %191 : vector<8x128xf32>
    %194 = vector.extract_strided_slice %185 {offsets = [0, 128], sizes = [8, 128], strides = [1, 1]} : vector<8x512xf32> to vector<8x128xf32>
    %cst_79 = arith.constant 0.000000e+00 : f32
    %195 = vector.broadcast %cst_79 : f32 to vector<8x128xf32>
    %196 = arith.subf %195, %194 : vector<8x128xf32>
    %197 = math.exp %196 : vector<8x128xf32>
    %cst_80 = arith.constant 1.000000e+00 : f32
    %198 = vector.broadcast %cst_80 : f32 to vector<8x128xf32>
    %199 = arith.addf %198, %197 : vector<8x128xf32>
    %cst_81 = arith.constant 1.000000e+00 : f32
    %200 = vector.broadcast %cst_81 : f32 to vector<8x128xf32>
    %201 = arith.divf %200, %199 : vector<8x128xf32>
    %202 = vector.extract_strided_slice %185 {offsets = [0, 256], sizes = [8, 128], strides = [1, 1]} : vector<8x512xf32> to vector<8x128xf32>
    %203 = math.tanh %202 : vector<8x128xf32>
    %204 = vector.extract_strided_slice %185 {offsets = [0, 384], sizes = [8, 128], strides = [1, 1]} : vector<8x512xf32> to vector<8x128xf32>
    %cst_82 = arith.constant 0.000000e+00 : f32
    %205 = vector.broadcast %cst_82 : f32 to vector<8x128xf32>
    %206 = arith.subf %205, %204 : vector<8x128xf32>
    %207 = math.exp %206 : vector<8x128xf32>
    %cst_83 = arith.constant 1.000000e+00 : f32
    %208 = vector.broadcast %cst_83 : f32 to vector<8x128xf32>
    %209 = arith.addf %208, %207 : vector<8x128xf32>
    %cst_84 = arith.constant 1.000000e+00 : f32
    %210 = vector.broadcast %cst_84 : f32 to vector<8x128xf32>
    %211 = arith.divf %210, %209 : vector<8x128xf32>
    %212 = arith.mulf %201, %173 : vector<8x128xf32>
    %213 = arith.mulf %193, %203 : vector<8x128xf32>
    %214 = arith.addf %212, %213 : vector<8x128xf32>
    %215 = math.tanh %214 : vector<8x128xf32>
    %216 = arith.mulf %211, %215 : vector<8x128xf32>
    %217 = arith.index_cast %c4_i32 : i32 to index
    %c0_85 = arith.constant 0 : index
    %c0_86 = arith.constant 0 : index
    %218 = vector.load %arg6[%217, %c0_85, %c0_86] : memref<8x8x128xf32, #tpu.memory_space<vmem>>, vector<1x8x128xf32>
    %219 = vector.shape_cast %218 : vector<1x8x128xf32> to vector<8x128xf32>
    %220 = vector.shape_cast %216 : vector<8x128xf32> to vector<1x8x128xf32>
    tpu.vector_store %arg6[%217, %c0_85, %c0_86], %220 {strides = array<i32>} : memref<8x8x128xf32, #tpu.memory_space<vmem>>, vector<1x8x128xf32>,
    %c5_i32 = arith.constant 5 : i32
    %221 = arith.index_cast %c5_i32 : i32 to index
    %c0_87 = arith.constant 0 : index
    %c0_88 = arith.constant 0 : index
    %222 = vector.load %arg7[%221, %c0_87, %c0_88] : memref<8x8x512xf32, #tpu.memory_space<vmem>>, vector<1x8x512xf32>
    %223 = vector.shape_cast %222 : vector<1x8x512xf32> to vector<8x512xf32>
    %224 = arith.truncf %216 : vector<8x128xf32> to vector<8x128xbf16>
    %cst_89 = arith.constant dense<0.000000e+00> : vector<8x512xf32>
    %225 = tpu.matmul %224, %13, %cst_89 {dimension_numbers = #tpu.dot_dimension_numbers<[1], [0], [0], [1], [0, 0, 1, 1], [], []>} : vector<8x128xbf16>, vector<128x512xbf16>, vector<8x512xf32> -> vector<8x512xf32>
    %226 = arith.addf %223, %225 : vector<8x512xf32>
    %227 = vector.extract_strided_slice %226 {offsets = [0, 0], sizes = [8, 128], strides = [1, 1]} : vector<8x512xf32> to vector<8x128xf32>
    %cst_90 = arith.constant 0.000000e+00 : f32
    %228 = vector.broadcast %cst_90 : f32 to vector<8x128xf32>
    %229 = arith.subf %228, %227 : vector<8x128xf32>
    %230 = math.exp %229 : vector<8x128xf32>
    %cst_91 = arith.constant 1.000000e+00 : f32
    %231 = vector.broadcast %cst_91 : f32 to vector<8x128xf32>
    %232 = arith.addf %231, %230 : vector<8x128xf32>
    %cst_92 = arith.constant 1.000000e+00 : f32
    %233 = vector.broadcast %cst_92 : f32 to vector<8x128xf32>
    %234 = arith.divf %233, %232 : vector<8x128xf32>
    %235 = vector.extract_strided_slice %226 {offsets = [0, 128], sizes = [8, 128], strides = [1, 1]} : vector<8x512xf32> to vector<8x128xf32>
    %cst_93 = arith.constant 0.000000e+00 : f32
    %236 = vector.broadcast %cst_93 : f32 to vector<8x128xf32>
    %237 = arith.subf %236, %235 : vector<8x128xf32>
    %238 = math.exp %237 : vector<8x128xf32>
    %cst_94 = arith.constant 1.000000e+00 : f32
    %239 = vector.broadcast %cst_94 : f32 to vector<8x128xf32>
    %240 = arith.addf %239, %238 : vector<8x128xf32>
    %cst_95 = arith.constant 1.000000e+00 : f32
    %241 = vector.broadcast %cst_95 : f32 to vector<8x128xf32>
    %242 = arith.divf %241, %240 : vector<8x128xf32>
    %243 = vector.extract_strided_slice %226 {offsets = [0, 256], sizes = [8, 128], strides = [1, 1]} : vector<8x512xf32> to vector<8x128xf32>
    %244 = math.tanh %243 : vector<8x128xf32>
    %245 = vector.extract_strided_slice %226 {offsets = [0, 384], sizes = [8, 128], strides = [1, 1]} : vector<8x512xf32> to vector<8x128xf32>
    %cst_96 = arith.constant 0.000000e+00 : f32
    %246 = vector.broadcast %cst_96 : f32 to vector<8x128xf32>
    %247 = arith.subf %246, %245 : vector<8x128xf32>
    %248 = math.exp %247 : vector<8x128xf32>
    %cst_97 = arith.constant 1.000000e+00 : f32
    %249 = vector.broadcast %cst_97 : f32 to vector<8x128xf32>
    %250 = arith.addf %249, %248 : vector<8x128xf32>
    %cst_98 = arith.constant 1.000000e+00 : f32
    %251 = vector.broadcast %cst_98 : f32 to vector<8x128xf32>
    %252 = arith.divf %251, %250 : vector<8x128xf32>
    %253 = arith.mulf %242, %214 : vector<8x128xf32>
    %254 = arith.mulf %234, %244 : vector<8x128xf32>
    %255 = arith.addf %253, %254 : vector<8x128xf32>
    %256 = math.tanh %255 : vector<8x128xf32>
    %257 = arith.mulf %252, %256 : vector<8x128xf32>
    %258 = arith.index_cast %c5_i32 : i32 to index
    %c0_99 = arith.constant 0 : index
    %c0_100 = arith.constant 0 : index
    %259 = vector.load %arg6[%258, %c0_99, %c0_100] : memref<8x8x128xf32, #tpu.memory_space<vmem>>, vector<1x8x128xf32>
    %260 = vector.shape_cast %259 : vector<1x8x128xf32> to vector<8x128xf32>
    %261 = vector.shape_cast %257 : vector<8x128xf32> to vector<1x8x128xf32>
    tpu.vector_store %arg6[%258, %c0_99, %c0_100], %261 {strides = array<i32>} : memref<8x8x128xf32, #tpu.memory_space<vmem>>, vector<1x8x128xf32>,
    %c6_i32 = arith.constant 6 : i32
    %262 = arith.index_cast %c6_i32 : i32 to index
    %c0_101 = arith.constant 0 : index
    %c0_102 = arith.constant 0 : index
    %263 = vector.load %arg7[%262, %c0_101, %c0_102] : memref<8x8x512xf32, #tpu.memory_space<vmem>>, vector<1x8x512xf32>
    %264 = vector.shape_cast %263 : vector<1x8x512xf32> to vector<8x512xf32>
    %265 = arith.truncf %257 : vector<8x128xf32> to vector<8x128xbf16>
    %cst_103 = arith.constant dense<0.000000e+00> : vector<8x512xf32>
    %266 = tpu.matmul %265, %13, %cst_103 {dimension_numbers = #tpu.dot_dimension_numbers<[1], [0], [0], [1], [0, 0, 1, 1], [], []>} : vector<8x128xbf16>, vector<128x512xbf16>, vector<8x512xf32> -> vector<8x512xf32>
    %267 = arith.addf %264, %266 : vector<8x512xf32>
    %268 = vector.extract_strided_slice %267 {offsets = [0, 0], sizes = [8, 128], strides = [1, 1]} : vector<8x512xf32> to vector<8x128xf32>
    %cst_104 = arith.constant 0.000000e+00 : f32
    %269 = vector.broadcast %cst_104 : f32 to vector<8x128xf32>
    %270 = arith.subf %269, %268 : vector<8x128xf32>
    %271 = math.exp %270 : vector<8x128xf32>
    %cst_105 = arith.constant 1.000000e+00 : f32
    %272 = vector.broadcast %cst_105 : f32 to vector<8x128xf32>
    %273 = arith.addf %272, %271 : vector<8x128xf32>
    %cst_106 = arith.constant 1.000000e+00 : f32
    %274 = vector.broadcast %cst_106 : f32 to vector<8x128xf32>
    %275 = arith.divf %274, %273 : vector<8x128xf32>
    %276 = vector.extract_strided_slice %267 {offsets = [0, 128], sizes = [8, 128], strides = [1, 1]} : vector<8x512xf32> to vector<8x128xf32>
    %cst_107 = arith.constant 0.000000e+00 : f32
    %277 = vector.broadcast %cst_107 : f32 to vector<8x128xf32>
    %278 = arith.subf %277, %276 : vector<8x128xf32>
    %279 = math.exp %278 : vector<8x128xf32>
    %cst_108 = arith.constant 1.000000e+00 : f32
    %280 = vector.broadcast %cst_108 : f32 to vector<8x128xf32>
    %281 = arith.addf %280, %279 : vector<8x128xf32>
    %cst_109 = arith.constant 1.000000e+00 : f32
    %282 = vector.broadcast %cst_109 : f32 to vector<8x128xf32>
    %283 = arith.divf %282, %281 : vector<8x128xf32>
    %284 = vector.extract_strided_slice %267 {offsets = [0, 256], sizes = [8, 128], strides = [1, 1]} : vector<8x512xf32> to vector<8x128xf32>
    %285 = math.tanh %284 : vector<8x128xf32>
    %286 = vector.extract_strided_slice %267 {offsets = [0, 384], sizes = [8, 128], strides = [1, 1]} : vector<8x512xf32> to vector<8x128xf32>
    %cst_110 = arith.constant 0.000000e+00 : f32
    %287 = vector.broadcast %cst_110 : f32 to vector<8x128xf32>
    %288 = arith.subf %287, %286 : vector<8x128xf32>
    %289 = math.exp %288 : vector<8x128xf32>
    %cst_111 = arith.constant 1.000000e+00 : f32
    %290 = vector.broadcast %cst_111 : f32 to vector<8x128xf32>
    %291 = arith.addf %290, %289 : vector<8x128xf32>
    %cst_112 = arith.constant 1.000000e+00 : f32
    %292 = vector.broadcast %cst_112 : f32 to vector<8x128xf32>
    %293 = arith.divf %292, %291 : vector<8x128xf32>
    %294 = arith.mulf %283, %255 : vector<8x128xf32>
    %295 = arith.mulf %275, %285 : vector<8x128xf32>
    %296 = arith.addf %294, %295 : vector<8x128xf32>
    %297 = math.tanh %296 : vector<8x128xf32>
    %298 = arith.mulf %293, %297 : vector<8x128xf32>
    %299 = arith.index_cast %c6_i32 : i32 to index
    %c0_113 = arith.constant 0 : index
    %c0_114 = arith.constant 0 : index
    %300 = vector.load %arg6[%299, %c0_113, %c0_114] : memref<8x8x128xf32, #tpu.memory_space<vmem>>, vector<1x8x128xf32>
    %301 = vector.shape_cast %300 : vector<1x8x128xf32> to vector<8x128xf32>
    %302 = vector.shape_cast %298 : vector<8x128xf32> to vector<1x8x128xf32>
    tpu.vector_store %arg6[%299, %c0_113, %c0_114], %302 {strides = array<i32>} : memref<8x8x128xf32, #tpu.memory_space<vmem>>, vector<1x8x128xf32>,
    %c7_i32 = arith.constant 7 : i32
    %303 = arith.index_cast %c7_i32 : i32 to index
    %c0_115 = arith.constant 0 : index
    %c0_116 = arith.constant 0 : index
    %304 = vector.load %arg7[%303, %c0_115, %c0_116] : memref<8x8x512xf32, #tpu.memory_space<vmem>>, vector<1x8x512xf32>
    %305 = vector.shape_cast %304 : vector<1x8x512xf32> to vector<8x512xf32>
    %306 = arith.truncf %298 : vector<8x128xf32> to vector<8x128xbf16>
    %cst_117 = arith.constant dense<0.000000e+00> : vector<8x512xf32>
    %307 = tpu.matmul %306, %13, %cst_117 {dimension_numbers = #tpu.dot_dimension_numbers<[1], [0], [0], [1], [0, 0, 1, 1], [], []>} : vector<8x128xbf16>, vector<128x512xbf16>, vector<8x512xf32> -> vector<8x512xf32>
    %308 = arith.addf %305, %307 : vector<8x512xf32>
    %309 = vector.extract_strided_slice %308 {offsets = [0, 0], sizes = [8, 128], strides = [1, 1]} : vector<8x512xf32> to vector<8x128xf32>
    %cst_118 = arith.constant 0.000000e+00 : f32
    %310 = vector.broadcast %cst_118 : f32 to vector<8x128xf32>
    %311 = arith.subf %310, %309 : vector<8x128xf32>
    %312 = math.exp %311 : vector<8x128xf32>
    %cst_119 = arith.constant 1.000000e+00 : f32
    %313 = vector.broadcast %cst_119 : f32 to vector<8x128xf32>
    %314 = arith.addf %313, %312 : vector<8x128xf32>
    %cst_120 = arith.constant 1.000000e+00 : f32
    %315 = vector.broadcast %cst_120 : f32 to vector<8x128xf32>
    %316 = arith.divf %315, %314 : vector<8x128xf32>
    %317 = vector.extract_strided_slice %308 {offsets = [0, 128], sizes = [8, 128], strides = [1, 1]} : vector<8x512xf32> to vector<8x128xf32>
    %cst_121 = arith.constant 0.000000e+00 : f32
    %318 = vector.broadcast %cst_121 : f32 to vector<8x128xf32>
    %319 = arith.subf %318, %317 : vector<8x128xf32>
    %320 = math.exp %319 : vector<8x128xf32>
    %cst_122 = arith.constant 1.000000e+00 : f32
    %321 = vector.broadcast %cst_122 : f32 to vector<8x128xf32>
    %322 = arith.addf %321, %320 : vector<8x128xf32>
    %cst_123 = arith.constant 1.000000e+00 : f32
    %323 = vector.broadcast %cst_123 : f32 to vector<8x128xf32>
    %324 = arith.divf %323, %322 : vector<8x128xf32>
    %325 = vector.extract_strided_slice %308 {offsets = [0, 256], sizes = [8, 128], strides = [1, 1]} : vector<8x512xf32> to vector<8x128xf32>
    %326 = math.tanh %325 : vector<8x128xf32>
    %327 = vector.extract_strided_slice %308 {offsets = [0, 384], sizes = [8, 128], strides = [1, 1]} : vector<8x512xf32> to vector<8x128xf32>
    %cst_124 = arith.constant 0.000000e+00 : f32
    %328 = vector.broadcast %cst_124 : f32 to vector<8x128xf32>
    %329 = arith.subf %328, %327 : vector<8x128xf32>
    %330 = math.exp %329 : vector<8x128xf32>
    %cst_125 = arith.constant 1.000000e+00 : f32
    %331 = vector.broadcast %cst_125 : f32 to vector<8x128xf32>
    %332 = arith.addf %331, %330 : vector<8x128xf32>
    %cst_126 = arith.constant 1.000000e+00 : f32
    %333 = vector.broadcast %cst_126 : f32 to vector<8x128xf32>
    %334 = arith.divf %333, %332 : vector<8x128xf32>
    %335 = arith.mulf %324, %296 : vector<8x128xf32>
    %336 = arith.mulf %316, %326 : vector<8x128xf32>
    %337 = arith.addf %335, %336 : vector<8x128xf32>
    %338 = math.tanh %337 : vector<8x128xf32>
    %339 = arith.mulf %334, %338 : vector<8x128xf32>
    %340 = arith.index_cast %c7_i32 : i32 to index
    %c0_127 = arith.constant 0 : index
    %c0_128 = arith.constant 0 : index
    %341 = vector.load %arg6[%340, %c0_127, %c0_128] : memref<8x8x128xf32, #tpu.memory_space<vmem>>, vector<1x8x128xf32>
    %342 = vector.shape_cast %341 : vector<1x8x128xf32> to vector<8x128xf32>
    %343 = vector.shape_cast %339 : vector<8x128xf32> to vector<1x8x128xf32>
    tpu.vector_store %arg6[%340, %c0_127, %c0_128], %343 {strides = array<i32>} : memref<8x8x128xf32, #tpu.memory_space<vmem>>, vector<1x8x128xf32>,
    %c8_i32 = arith.constant 8 : i32
    %c0_129 = arith.constant 0 : index
    %c0_130 = arith.constant 0 : index
    %344 = vector.load %arg8[%c0_129, %c0_130] : memref<8x128xf32, #tpu.memory_space<vmem>>, vector<8x128xf32>
    tpu.vector_store %arg8[%c0_129, %c0_130], %339 {strides = array<i32>} : memref<8x128xf32, #tpu.memory_space<vmem>>, vector<8x128xf32>,
    %c0_131 = arith.constant 0 : index
    %c0_132 = arith.constant 0 : index
    %345 = vector.load %arg9[%c0_131, %c0_132] : memref<8x128xf32, #tpu.memory_space<vmem>>, vector<8x128xf32>
    tpu.vector_store %arg9[%c0_131, %c0_132], %337 {strides = array<i32>} : memref<8x128xf32, #tpu.memory_space<vmem>>, vector<8x128xf32>,
    return
  }
  func.func @transform_0(%arg0: i32, %arg1: i32) -> (i32, i32, i32) {
    %c0_i32 = arith.constant 0 : i32
    %c0_i32_0 = arith.constant 0 : i32
    return %arg1, %arg0, %c0_i32 : i32, i32, i32
  }
  func.func @transform_1(%arg0: i32, %arg1: i32) -> (i32, i32) {
    %c0_i32 = arith.constant 0 : i32
    %c0_i32_0 = arith.constant 0 : i32
    %c0_i32_1 = arith.constant 0 : i32
    return %c0_i32, %c0_i32_0 : i32, i32
  }
  func.func @transform_2(%arg0: i32, %arg1: i32) -> (i32, i32) {
    %c0_i32 = arith.constant 0 : i32
    %c0_i32_0 = arith.constant 0 : i32
    %c0_i32_1 = arith.constant 0 : i32
    return %c0_i32, %c0_i32_0 : i32, i32
  }
  func.func @transform_3(%arg0: i32, %arg1: i32) -> (i32, i32) {
    %c0_i32 = arith.constant 0 : i32
    %c0_i32_0 = arith.constant 0 : i32
    %c0_i32_1 = arith.constant 0 : i32
    return %c0_i32, %c0_i32_0 : i32, i32
  }
  func.func @transform_4(%arg0: i32, %arg1: i32) -> (i32, i32, i32) {
    %c0_i32 = arith.constant 0 : i32
    %c0_i32_0 = arith.constant 0 : i32
    return %arg1, %arg0, %c0_i32 : i32, i32, i32
  }
}

</mosaic_0001>

<llo_original>
// kernel: tpu_custom_call.1
$region0: #{tpu_custom_call.1}
  #allocation0 [shape = 'u32[]', space=smem, size = 0x4, offset = 0x4, fixed_abs, tag = 'smem constant byte address 0x4 - core index']
  #allocation1 [shape = 'u32[144,128]{1,0:T(1,128)}', space=vmem, size = 0x12000, scoped, tag = 'internal scratch']
  #allocation2 [shape = 'f32[8,8,512]{2,1,0:T(8,128)}', space=vmem, size = 0x20000, scoped, tag = 'scratch operand']
  #allocation3 [shape = 'f32[8,128]{1,0:T(8,128)}', space=vmem, size = 0x1000, scoped, tag = 'scratch operand']
  #allocation4 [shape = 'f32[8,128]{1,0:T(8,128)}', space=vmem, size = 0x1000, scoped, tag = 'scratch operand']
  %s0 = inlined_call_operand.hbm [shape: f32[8,8,8], index: 0, kind: input, shape index: {}]
  %s1 = inlined_call_operand.hbm [shape: bf16[8,512], index: 1, kind: input, shape index: {}]
  %s2 = inlined_call_operand.hbm [shape: bf16[128,512], index: 2, kind: input, shape index: {}]
  %s3 = inlined_call_operand.vmem [shape: f32[1,512], index: 3, kind: input, shape index: {}]
  %s4 = inlined_call_operand.hbm [shape: f32[8,8,128], index: 4, kind: output, shape index: {}]
  %s5 = sld [smem:[#allocation0]]
  $region42: #{tpu_custom_call.1} parent=0
    _
  %s7 = ssub.s32 1, %s5
  %s8 = scalar_select 0, %s7, %s5
  $region1: #{tpu_custom_call.1} parent=0
    #allocation5 [shape = 'u8[32768]{0}', space=vmem, size = 0x8000, scoped, tag = 'input window, operand 0, single buffered']
    #allocation6 [shape = 's32[1]{0}', space=sflag, size = 0x4, scoped, tag = 'scoped memory for tpu_custom_call.1']
    #allocation7 [shape = 's32[1]{0}', space=sflag, size = 0x4, scoped, tag = 'scoped memory for tpu_custom_call.1']
    #allocation8 [shape = 'u8[8192]{0}', space=vmem, size = 0x2000, scoped, tag = 'input window, operand 1, single buffered']
    #allocation9 [shape = 's32[1]{0}', space=sflag, size = 0x4, scoped, tag = 'scoped memory for tpu_custom_call.1']
    #allocation10 [shape = 'u8[131072]{0}', space=vmem, size = 0x20000, scoped, tag = 'input window, operand 2, single buffered']
    #allocation11 [shape = 'u8[32768]{0}', space=vmem, size = 0x8000, scoped, tag = 'output window, operand 0, single buffered']
    %9 = vsyncpa [#allocation6], 0
    %10 = vsyncpa [#allocation9], 0
    %11 = vsyncpa [#allocation7], 0
    // Predicated region
    $region2: #{tpu_custom_call.1} parent=1 // pred_check
      _
    $region3: #{tpu_custom_call.1} parent=1 // pred_check_branch
      %13 = sbr.rel (0) target = $region5
    $region4: #{tpu_custom_call.1} parent=1 // pred_region
      %s15 = ssub.s32 1024, 1024
      %16 = vsyncadd [#allocation6], %s15
      %s17 = sshll.u32 [#allocation5], 4
      %s18 = int_to_ptr.vmem [resolvable:$true] %s17
      %23 = dma.hbm_to_vmem [thread:$0]  %s0, 1024, %s18, [#allocation6], 128, 128, 8
    $region5: #{tpu_custom_call.1} parent=1 // pred_fallthru
      _
    // Predicated region
    $region6: #{tpu_custom_call.1} parent=1 // pred_check
      _
    $region7: #{tpu_custom_call.1} parent=1 // pred_check_branch
      %25 = sbr.rel (0) target = $region9
    $region8: #{tpu_custom_call.1} parent=1 // pred_region
      %s27 = ssub.s32 256, 256
      %28 = vsyncadd [#allocation9], %s27
      %s30 = sshll.u32 [#allocation8], 4
      %s31 = int_to_ptr.vmem [resolvable:$true] %s30
      %33 = dma.hbm_to_vmem [thread:$0]  %s1, 256, %s31, [#allocation9]
    $region9: #{tpu_custom_call.1} parent=1 // pred_fallthru
      _
    // Predicated region
    $region10: #{tpu_custom_call.1} parent=1 // pred_check
      _
    $region11: #{tpu_custom_call.1} parent=1 // pred_check_branch
      %35 = sbr.rel (0) target = $region13
    $region12: #{tpu_custom_call.1} parent=1 // pred_region
      %s37 = ssub.s32 4096, 4096
      %38 = vsyncadd [#allocation9], %s37
      %s39 = sshll.u32 [#allocation10], 4
      %s40 = int_to_ptr.vmem [resolvable:$true] %s39
      %45 = dma.hbm_to_vmem [thread:$0]  %s2, 4096, %s40, [#allocation9], 256, 256, 16
    $region13: #{tpu_custom_call.1} parent=1 // pred_fallthru
      _
    // Predicated region
    $region14: #{tpu_custom_call.1} parent=1 // pred_check
      _
    $region15: #{tpu_custom_call.1} parent=1 // pred_check_branch
      %47 = sbr.rel (0) target = $region17
    $region16: #{tpu_custom_call.1} parent=1 // pred_region
      _
    $region17: #{tpu_custom_call.1} parent=1 // pred_fallthru
      _
    // Predicated region
    $region18: #{tpu_custom_call.1} parent=1 // pred_check
      _
    $region19: #{tpu_custom_call.1} parent=1 // pred_check_branch
      %49 = sbr.rel (0) target = $region21
    $region20: #{tpu_custom_call.1} parent=1 // pred_region
      %50 = dma.done [#allocation6], 1024
    $region21: #{tpu_custom_call.1} parent=1 // pred_fallthru
      _
    // Predicated region
    $region22: #{tpu_custom_call.1} parent=1 // pred_check
      _
    $region23: #{tpu_custom_call.1} parent=1 // pred_check_branch
      %52 = sbr.rel (0) target = $region25
    $region24: #{tpu_custom_call.1} parent=1 // pred_region
      %53 = dma.done [#allocation9], 256
    $region25: #{tpu_custom_call.1} parent=1 // pred_fallthru
      _
    // Predicated region
    $region26: #{tpu_custom_call.1} parent=1 // pred_check
      _
    $region27: #{tpu_custom_call.1} parent=1 // pred_check_branch
      %55 = sbr.rel (0) target = $region29
    $region28: #{tpu_custom_call.1} parent=1 // pred_region
      %56 = dma.done [#allocation9], 4096
    $region29: #{tpu_custom_call.1} parent=1 // pred_fallthru
      _
    %p58 = scmp.eq.s32.totalorder 0, 0
    // Predicated region
    $region30: #{tpu_custom_call.1} parent=1 // pred_check
      %p59 = pneg %p58
    $region31: #{tpu_custom_call.1} parent=1 // pred_check_branch
      %61 = sbr.rel (%p59) target = $region33
    $region32: #{tpu_custom_call.1} parent=1 // pred_region
      %62 = vst [vmem:[#allocation3] sm:$0xff] 0.0
      %63 = vst [vmem:[#allocation4] sm:$0xff] 0.0
    $region33: #{tpu_custom_call.1} parent=1 // pred_fallthru
      _
    %v64 = vld [vmem:[#allocation5] sm:$0xff]
    %v65 = vld [vmem:[#allocation5 + $0x8] sm:$0xff]
    %v66 = vld [vmem:[#allocation5 + $0x10] sm:$0xff]
    %v67 = vld [vmem:[#allocation5 + $0x18] sm:$0xff]
    %v68 = vld [vmem:[#allocation5 + $0x20] sm:$0xff]
    %v69 = vld [vmem:[#allocation5 + $0x28] sm:$0xff]
    %v70 = vld [vmem:[#allocation5 + $0x30] sm:$0xff]
    %v71 = vld [vmem:[#allocation5 + $0x38] sm:$0xff]
    %v72 = vpack.c.bf16 %v65, %v64
    %v73 = vpack.c.bf16 %v67, %v66
    %v74 = vpack.c.bf16 %v69, %v68
    %v75 = vpack.c.bf16 %v71, %v70
    %v76 = vld [vmem:[#allocation8] sm:$0xff]
    %v77 = vld [vmem:[#allocation8 + $0x8] sm:$0xff]
    %v78 = vld [vmem:[%s3] sm:$0xf]
    %v80 = vlaneseq
    %v81 = vshrl.u32 %v80, 7
    %v82 = vsub.s32 0, %v81
    %v83 = vrot.slane %v78, %v82
    %v84 = vlaneseq
    %v85 = vshrl.u32 %v84, 7
    %v86 = vsub.s32 1, %v85
    %v87 = vrot.slane %v78, %v86
    %v88 = vlaneseq
    %v89 = vshrl.u32 %v88, 7
    %v90 = vsub.s32 2, %v89
    %v91 = vrot.slane %v78, %v90
    %v92 = vlaneseq
    %v93 = vshrl.u32 %v92, 7
    %v94 = vsub.s32 3, %v93
    %v95 = vrot.slane %v78, %v94
    %v102 = vunpack.c.l.b16 %v76
    %v103 = vunpack.c.h.b16 %v76
    %v104 = vunpack.c.l.b16 %v77
    %v105 = vunpack.c.h.b16 %v77
    %v106 = vpack.c.b16 %v102, %v102
    %v107 = vpack.c.b16 %v103, %v103
    %v108 = vpack.c.b16 %v104, %v104
    %v109 = vpack.c.b16 %v105, %v105
    %vm110 = vcmask 64512
    %v112 = vsel %vm110, %v72, 0
    %v115 = vsel %vm110, %v73, 0
    %v118 = vsel %vm110, %v74, 0
    %v121 = vsel %vm110, %v75, 0
    %vm123 = vcmask 1043456
    %v125 = vsel %vm123, %v106, 0
    %v128 = vsel %vm123, %v107, 0
    %v131 = vsel %vm123, %v108, 0
    %v134 = vsel %vm123, %v109, 0
    %136 = vmatprep.subr.bf16.mxu0 0
    %137 = vmatpush1.bf16.msra.mxu0 0
    %138 = vmatprep.subr.bf16.mxu0 0
    %139 = vmatpush1.bf16.msra.mxu0 0
    %140 = vmatprep.subr.bf16.mxu0 0
    %141 = vmatpush1.bf16.msra.mxu0 0
    %142 = vmatprep.subr.bf16.mxu0 0
    %143 = vmatpush1.bf16.msra.mxu0 0
    %144 = vmatprep.subr.bf16.mxu0 0
    %145 = vmatpush1.bf16.msra.mxu0 0
    %146 = vmatprep.subr.bf16.mxu0 0
    %147 = vmatpush1.bf16.msra.mxu0 0
    %148 = vmatprep.subr.bf16.mxu0 0
    %149 = vmatpush1.bf16.msra.mxu0 0
    %150 = vmatprep.subr.bf16.mxu0 %v128
    %151 = vmatpush1.bf16.msra.mxu0 %v125
    %152 = vmatprep.subr.bf16.mxu0 0
    %153 = vmatpush2.bf16.msra.mxu0 0
    %154 = vmatprep.subr.bf16.mxu0 0
    %155 = vmatpush2.bf16.msra.mxu0 0
    %156 = vmatprep.subr.bf16.mxu0 0
    %157 = vmatpush2.bf16.msra.mxu0 0
    %158 = vmatprep.subr.bf16.mxu0 0
    %159 = vmatpush2.bf16.msra.mxu0 0
    %160 = vmatprep.subr.bf16.mxu0 0
    %161 = vmatpush2.bf16.msra.mxu0 0
    %162 = vmatprep.subr.bf16.mxu0 0
    %163 = vmatpush2.bf16.msra.mxu0 0
    %164 = vmatprep.subr.bf16.mxu0 0
    %165 = vmatpush2.bf16.msra.mxu0 0
    %166 = vmatprep.subr.bf16.mxu0 0
    %167 = vmatpush2.bf16.msra.mxu0 0
    %168 = vmatprep.mubr.bf16.mxu0 0
    %169 = vmatmul.mubr.bf16.gmra.mxu0 %v112
    %v170 = vpop.f32.mrf.mxu0
    %v171 = vadd.f32 %v83, %v170
    %v172 = vpop.f32.mrf.mxu0
    %v173 = vadd.f32 %v87, %v172
    %v174 = vpop.f32.mrf.mxu0
    %v175 = vadd.f32 %v83, %v174
    %v176 = vpop.f32.mrf.mxu0
    %v177 = vadd.f32 %v87, %v176
    %178 = vmatprep.mubr.bf16.mxu0 0
    %179 = vmatmul.mubr.bf16.gmra.mxu0 %v115
    %v180 = vpop.f32.mrf.mxu0
    %v181 = vadd.f32 %v83, %v180
    %v182 = vpop.f32.mrf.mxu0
    %v183 = vadd.f32 %v87, %v182
    %v184 = vpop.f32.mrf.mxu0
    %v185 = vadd.f32 %v83, %v184
    %v186 = vpop.f32.mrf.mxu0
    %v187 = vadd.f32 %v87, %v186
    %188 = vmatprep.mubr.bf16.mxu0 0
    %189 = vmatmul.mubr.bf16.gmra.mxu0 %v118
    %v190 = vpop.f32.mrf.mxu0
    %v191 = vadd.f32 %v83, %v190
    %v192 = vpop.f32.mrf.mxu0
    %v193 = vadd.f32 %v87, %v192
    %v194 = vpop.f32.mrf.mxu0
    %v195 = vadd.f32 %v83, %v194
    %v196 = vpop.f32.mrf.mxu0
    %v197 = vadd.f32 %v87, %v196
    %198 = vmatprep.mubr.bf16.mxu0 0
    %199 = vmatmul.mubr.bf16.gmra.mxu0 %v121
    %v200 = vpop.f32.mrf.mxu0
    %v201 = vadd.f32 %v83, %v200
    %v202 = vpop.f32.mrf.mxu0
    %v203 = vadd.f32 %v87, %v202
    %v204 = vpop.f32.mrf.mxu0
    %v205 = vadd.f32 %v83, %v204
    %v206 = vpop.f32.mrf.mxu0
    %v207 = vadd.f32 %v87, %v206
    %208 = vdwg.mxu0
    %209 = vmatprep.subr.bf16.mxu0 0
    %210 = vmatpush1.bf16.msra.mxu0 0
    %211 = vmatprep.subr.bf16.mxu0 0
    %212 = vmatpush1.bf16.msra.mxu0 0
    %213 = vmatprep.subr.bf16.mxu0 0
    %214 = vmatpush1.bf16.msra.mxu0 0
    %215 = vmatprep.subr.bf16.mxu0 0
    %216 = vmatpush1.bf16.msra.mxu0 0
    %217 = vmatprep.subr.bf16.mxu0 0
    %218 = vmatpush1.bf16.msra.mxu0 0
    %219 = vmatprep.subr.bf16.mxu0 0
    %220 = vmatpush1.bf16.msra.mxu0 0
    %221 = vmatprep.subr.bf16.mxu0 0
    %222 = vmatpush1.bf16.msra.mxu0 0
    %223 = vmatprep.subr.bf16.mxu0 %v134
    %224 = vmatpush1.bf16.msra.mxu0 %v131
    %225 = vmatprep.subr.bf16.mxu0 0
    %226 = vmatpush2.bf16.msra.mxu0 0
    %227 = vmatprep.subr.bf16.mxu0 0
    %228 = vmatpush2.bf16.msra.mxu0 0
    %229 = vmatprep.subr.bf16.mxu0 0
    %230 = vmatpush2.bf16.msra.mxu0 0
    %231 = vmatprep.subr.bf16.mxu0 0
    %232 = vmatpush2.bf16.msra.mxu0 0
    %233 = vmatprep.subr.bf16.mxu0 0
    %234 = vmatpush2.bf16.msra.mxu0 0
    %235 = vmatprep.subr.bf16.mxu0 0
    %236 = vmatpush2.bf16.msra.mxu0 0
    %237 = vmatprep.subr.bf16.mxu0 0
    %238 = vmatpush2.bf16.msra.mxu0 0
    %239 = vmatprep.subr.bf16.mxu0 0
    %240 = vmatpush2.bf16.msra.mxu0 0
    %241 = vmatprep.mubr.bf16.mxu0 0
    %242 = vmatmul.mubr.bf16.gmra.mxu0 %v112
    %v243 = vpop.f32.mrf.mxu0
    %v244 = vadd.f32 %v91, %v243
    %v245 = vpop.f32.mrf.mxu0
    %v246 = vadd.f32 %v95, %v245
    %v247 = vpop.f32.mrf.mxu0
    %v248 = vadd.f32 %v91, %v247
    %v249 = vpop.f32.mrf.mxu0
    %v250 = vadd.f32 %v95, %v249
    %251 = vmatprep.mubr.bf16.mxu0 0
    %252 = vmatmul.mubr.bf16.gmra.mxu0 %v115
    %v253 = vpop.f32.mrf.mxu0
    %v254 = vadd.f32 %v91, %v253
    %v255 = vpop.f32.mrf.mxu0
    %v256 = vadd.f32 %v95, %v255
    %v257 = vpop.f32.mrf.mxu0
    %v258 = vadd.f32 %v91, %v257
    %v259 = vpop.f32.mrf.mxu0
    %v260 = vadd.f32 %v95, %v259
    %261 = vmatprep.mubr.bf16.mxu0 0
    %262 = vmatmul.mubr.bf16.gmra.mxu0 %v118
    %v263 = vpop.f32.mrf.mxu0
    %v264 = vadd.f32 %v91, %v263
    %v265 = vpop.f32.mrf.mxu0
    %v266 = vadd.f32 %v95, %v265
    %v267 = vpop.f32.mrf.mxu0
    %v268 = vadd.f32 %v91, %v267
    %v269 = vpop.f32.mrf.mxu0
    %v270 = vadd.f32 %v95, %v269
    %271 = vmatprep.mubr.bf16.mxu0 0
    %272 = vmatmul.mubr.bf16.gmra.mxu0 %v121
    %v273 = vpop.f32.mrf.mxu0
    %v274 = vadd.f32 %v91, %v273
    %v275 = vpop.f32.mrf.mxu0
    %v276 = vadd.f32 %v95, %v275
    %v277 = vpop.f32.mrf.mxu0
    %v278 = vadd.f32 %v91, %v277
    %v279 = vpop.f32.mrf.mxu0
    %v280 = vadd.f32 %v95, %v279
    %281 = vdwg.mxu0
    %282 = vst [vmem:[#allocation2] sm:$0xff] %v171
    %283 = vst [vmem:[#allocation2 + $0x8] sm:$0xff] %v173
    %284 = vst [vmem:[#allocation2 + $0x10] sm:$0xff] %v244
    %285 = vst [vmem:[#allocation2 + $0x18] sm:$0xff] %v246
    %286 = vst [vmem:[#allocation2 + $0x20] sm:$0xff] %v175
    %287 = vst [vmem:[#allocation2 + $0x28] sm:$0xff] %v177
    %288 = vst [vmem:[#allocation2 + $0x30] sm:$0xff] %v248
    %289 = vst [vmem:[#allocation2 + $0x38] sm:$0xff] %v250
    %290 = vst [vmem:[#allocation2 + $0x40] sm:$0xff] %v181
    %291 = vst [vmem:[#allocation2 + $0x48] sm:$0xff] %v183
    %292 = vst [vmem:[#allocation2 + $0x50] sm:$0xff] %v254
    %293 = vst [vmem:[#allocation2 + $0x58] sm:$0xff] %v256
    %294 = vst [vmem:[#allocation2 + $0x60] sm:$0xff] %v185
    %295 = vst [vmem:[#allocation2 + $0x68] sm:$0xff] %v187
    %296 = vst [vmem:[#allocation2 + $0x70] sm:$0xff] %v258
    %297 = vst [vmem:[#allocation2 + $0x78] sm:$0xff] %v260
    %298 = vst [vmem:[#allocation2 + $0x80] sm:$0xff] %v191
    %299 = vst [vmem:[#allocation2 + $0x88] sm:$0xff] %v193
    %300 = vst [vmem:[#allocation2 + $0x90] sm:$0xff] %v264
    %301 = vst [vmem:[#allocation2 + $0x98] sm:$0xff] %v266
    %302 = vst [vmem:[#allocation2 + $0xa0] sm:$0xff] %v195
    %303 = vst [vmem:[#allocation2 + $0xa8] sm:$0xff] %v197
    %304 = vst [vmem:[#allocation2 + $0xb0] sm:$0xff] %v268
    %305 = vst [vmem:[#allocation2 + $0xb8] sm:$0xff] %v270
    %306 = vst [vmem:[#allocation2 + $0xc0] sm:$0xff] %v201
    %307 = vst [vmem:[#allocation2 + $0xc8] sm:$0xff] %v203
    %308 = vst [vmem:[#allocation2 + $0xd0] sm:$0xff] %v274
    %309 = vst [vmem:[#allocation2 + $0xd8] sm:$0xff] %v276
    %310 = vst [vmem:[#allocation2 + $0xe0] sm:$0xff] %v205
    %311 = vst [vmem:[#allocation2 + $0xe8] sm:$0xff] %v207
    %312 = vst [vmem:[#allocation2 + $0xf0] sm:$0xff] %v278
    %313 = vst [vmem:[#allocation2 + $0xf8] sm:$0xff] %v280
    %v314 = vld [vmem:[#allocation10] sm:$0xff]
    %v315 = vld [vmem:[#allocation10 + $0x8] sm:$0xff]
    %v316 = vld [vmem:[#allocation10 + $0x10] sm:$0xff]
    %v317 = vld [vmem:[#allocation10 + $0x18] sm:$0xff]
    %v318 = vld [vmem:[#allocation10 + $0x20] sm:$0xff]
    %v319 = vld [vmem:[#allocation10 + $0x28] sm:$0xff]
    %v320 = vld [vmem:[#allocation10 + $0x30] sm:$0xff]
    %v321 = vld [vmem:[#allocation10 + $0x38] sm:$0xff]
    %v322 = vld [vmem:[#allocation10 + $0x40] sm:$0xff]
    %v323 = vld [vmem:[#allocation10 + $0x48] sm:$0xff]
    %v324 = vld [vmem:[#allocation10 + $0x50] sm:$0xff]
    %v325 = vld [vmem:[#allocation10 + $0x58] sm:$0xff]
    %v326 = vld [vmem:[#allocation10 + $0x60] sm:$0xff]
    %v327 = vld [vmem:[#allocation10 + $0x68] sm:$0xff]
    %v328 = vld [vmem:[#allocation10 + $0x70] sm:$0xff]
    %v329 = vld [vmem:[#allocation10 + $0x78] sm:$0xff]
    %v330 = vld [vmem:[#allocation10 + $0x80] sm:$0xff]
    %v331 = vld [vmem:[#allocation10 + $0x88] sm:$0xff]
    %v332 = vld [vmem:[#allocation10 + $0x90] sm:$0xff]
    %v333 = vld [vmem:[#allocation10 + $0x98] sm:$0xff]
    %v334 = vld [vmem:[#allocation10 + $0xa0] sm:$0xff]
    %v335 = vld [vmem:[#allocation10 + $0xa8] sm:$0xff]
    %v336 = vld [vmem:[#allocation10 + $0xb0] sm:$0xff]
    %v337 = vld [vmem:[#allocation10 + $0xb8] sm:$0xff]
    %v338 = vld [vmem:[#allocation10 + $0xc0] sm:$0xff]
    %v339 = vld [vmem:[#allocation10 + $0xc8] sm:$0xff]
    %v340 = vld [vmem:[#allocation10 + $0xd0] sm:$0xff]
    %v341 = vld [vmem:[#allocation10 + $0xd8] sm:$0xff]
    %v342 = vld [vmem:[#allocation10 + $0xe0] sm:$0xff]
    %v343 = vld [vmem:[#allocation10 + $0xe8] sm:$0xff]
    %v344 = vld [vmem:[#allocation10 + $0xf0] sm:$0xff]
    %v345 = vld [vmem:[#allocation10 + $0xf8] sm:$0xff]
    %v346 = vld [vmem:[#allocation3] sm:$0xff]
    %v347 = vld [vmem:[#allocation4] sm:$0xff]
    %v348 = vld [vmem:[#allocation2] sm:$0xff]
    %v349 = vld [vmem:[#allocation2 + $0x8] sm:$0xff]
    %v350 = vld [vmem:[#allocation2 + $0x10] sm:$0xff]
    %v351 = vld [vmem:[#allocation2 + $0x18] sm:$0xff]
    %v352 = vpack.c.bf16 %v346, %v346
    %v385 = vunpack.c.l.b16 %v314
    %v386 = vunpack.c.h.b16 %v314
    %v387 = vunpack.c.l.b16 %v315
    %v388 = vunpack.c.h.b16 %v315
    %v389 = vunpack.c.l.b16 %v316
    %v390 = vunpack.c.h.b16 %v316
    %v391 = vunpack.c.l.b16 %v317
    %v392 = vunpack.c.h.b16 %v317
    %v393 = vunpack.c.l.b16 %v318
    %v394 = vunpack.c.h.b16 %v318
    %v395 = vunpack.c.l.b16 %v319
    %v396 = vunpack.c.h.b16 %v319
    %v397 = vunpack.c.l.b16 %v320
    %v398 = vunpack.c.h.b16 %v320
    %v399 = vunpack.c.l.b16 %v321
    %v400 = vunpack.c.h.b16 %v321
    %v401 = vunpack.c.l.b16 %v322
    %v402 = vunpack.c.h.b16 %v322
    %v403 = vunpack.c.l.b16 %v323
    %v404 = vunpack.c.h.b16 %v323
    %v405 = vunpack.c.l.b16 %v324
    %v406 = vunpack.c.h.b16 %v324
    %v407 = vunpack.c.l.b16 %v325
    %v408 = vunpack.c.h.b16 %v325
    %v409 = vunpack.c.l.b16 %v326
    %v410 = vunpack.c.h.b16 %v326
    %v411 = vunpack.c.l.b16 %v327
    %v412 = vunpack.c.h.b16 %v327
    %v413 = vunpack.c.l.b16 %v328
    %v414 = vunpack.c.h.b16 %v328
    %v415 = vunpack.c.l.b16 %v329
    %v416 = vunpack.c.h.b16 %v329
    %v417 = vunpack.c.l.b16 %v330
    %v418 = vunpack.c.h.b16 %v330
    %v419 = vunpack.c.l.b16 %v331
    %v420 = vunpack.c.h.b16 %v331
    %v421 = vunpack.c.l.b16 %v332
    %v422 = vunpack.c.h.b16 %v332
    %v423 = vunpack.c.l.b16 %v333
    %v424 = vunpack.c.h.b16 %v333
    %v425 = vunpack.c.l.b16 %v334
    %v426 = vunpack.c.h.b16 %v334
    %v427 = vunpack.c.l.b16 %v335
    %v428 = vunpack.c.h.b16 %v335
    %v429 = vunpack.c.l.b16 %v336
    %v430 = vunpack.c.h.b16 %v336
    %v431 = vunpack.c.l.b16 %v337
    %v432 = vunpack.c.h.b16 %v337
    %v433 = vunpack.c.l.b16 %v338
    %v434 = vunpack.c.h.b16 %v338
    %v435 = vunpack.c.l.b16 %v339
    %v436 = vunpack.c.h.b16 %v339
    %v437 = vunpack.c.l.b16 %v340
    %v438 = vunpack.c.h.b16 %v340
    %v439 = vunpack.c.l.b16 %v341
    %v440 = vunpack.c.h.b16 %v341
    %v441 = vunpack.c.l.b16 %v342
    %v442 = vunpack.c.h.b16 %v342
    %v443 = vunpack.c.l.b16 %v343
    %v444 = vunpack.c.h.b16 %v343
    %v445 = vunpack.c.l.b16 %v344
    %v446 = vunpack.c.h.b16 %v344
    %v447 = vunpack.c.l.b16 %v345
    %v448 = vunpack.c.h.b16 %v345
    %v449 = vpack.c.b16 %v389, %v385
    %v450 = vpack.c.b16 %v390, %v386
    %v451 = vpack.c.b16 %v391, %v387
    %v452 = vpack.c.b16 %v392, %v388
    %v453 = vpack.c.b16 %v397, %v393
    %v454 = vpack.c.b16 %v398, %v394
    %v455 = vpack.c.b16 %v399, %v395
    %v456 = vpack.c.b16 %v400, %v396
    %v457 = vpack.c.b16 %v405, %v401
    %v458 = vpack.c.b16 %v406, %v402
    %v459 = vpack.c.b16 %v407, %v403
    %v460 = vpack.c.b16 %v408, %v404
    %v461 = vpack.c.b16 %v413, %v409
    %v462 = vpack.c.b16 %v414, %v410
    %v463 = vpack.c.b16 %v415, %v411
    %v464 = vpack.c.b16 %v416, %v412
    %v465 = vpack.c.b16 %v421, %v417
    %v466 = vpack.c.b16 %v422, %v418
    %v467 = vpack.c.b16 %v423, %v419
    %v468 = vpack.c.b16 %v424, %v420
    %v469 = vpack.c.b16 %v429, %v425
    %v470 = vpack.c.b16 %v430, %v426
    %v471 = vpack.c.b16 %v431, %v427
    %v472 = vpack.c.b16 %v432, %v428
    %v473 = vpack.c.b16 %v437, %v433
    %v474 = vpack.c.b16 %v438, %v434
    %v475 = vpack.c.b16 %v439, %v435
    %v476 = vpack.c.b16 %v440, %v436
    %v477 = vpack.c.b16 %v445, %v441
    %v478 = vpack.c.b16 %v446, %v442
    %v479 = vpack.c.b16 %v447, %v443
    %v480 = vpack.c.b16 %v448, %v444
    %513 = vmatprep.subr.bf16.mxu0 %v478
    %514 = vmatpush1.bf16.msra.mxu0 %v477
    %515 = vmatprep.subr.bf16.mxu0 %v474
    %516 = vmatpush1.bf16.msra.mxu0 %v473
    %517 = vmatprep.subr.bf16.mxu0 %v470
    %518 = vmatpush1.bf16.msra.mxu0 %v469
    %519 = vmatprep.subr.bf16.mxu0 %v466
    %520 = vmatpush1.bf16.msra.mxu0 %v465
    %521 = vmatprep.subr.bf16.mxu0 %v462
    %522 = vmatpush1.bf16.msra.mxu0 %v461
    %523 = vmatprep.subr.bf16.mxu0 %v458
    %524 = vmatpush1.bf16.msra.mxu0 %v457
    %525 = vmatprep.subr.bf16.mxu0 %v454
    %526 = vmatpush1.bf16.msra.mxu0 %v453
    %527 = vmatprep.subr.bf16.mxu0 %v450
    %528 = vmatpush1.bf16.msra.mxu0 %v449
    %529 = vmatprep.subr.bf16.mxu0 0
    %530 = vmatpush2.bf16.msra.mxu0 0
    %531 = vmatprep.subr.bf16.mxu0 0
    %532 = vmatpush2.bf16.msra.mxu0 0
    %533 = vmatprep.subr.bf16.mxu0 0
    %534 = vmatpush2.bf16.msra.mxu0 0
    %535 = vmatprep.subr.bf16.mxu0 0
    %536 = vmatpush2.bf16.msra.mxu0 0
    %537 = vmatprep.subr.bf16.mxu0 0
    %538 = vmatpush2.bf16.msra.mxu0 0
    %539 = vmatprep.subr.bf16.mxu0 0
    %540 = vmatpush2.bf16.msra.mxu0 0
    %541 = vmatprep.subr.bf16.mxu0 0
    %542 = vmatpush2.bf16.msra.mxu0 0
    %543 = vmatprep.subr.bf16.mxu0 0
    %544 = vmatpush2.bf16.msra.mxu0 0
    %545 = vmatprep.mubr.bf16.mxu0 0
    %546 = vmatmul.mubr.bf16.gmra.mxu0 %v352
    %v547 = vpop.f32.mrf.mxu0
    %v548 = vadd.f32 0.0, %v547
    %v549 = vpop.f32.mrf.mxu0
    %v550 = vadd.f32 0.0, %v549
    %v551 = vpop.f32.mrf.mxu0
    %v552 = vpop.f32.mrf.mxu0
    %553 = vdwg.mxu0
    %554 = vmatprep.subr.bf16.mxu0 %v480
    %555 = vmatpush1.bf16.msra.mxu0 %v479
    %556 = vmatprep.subr.bf16.mxu0 %v476
    %557 = vmatpush1.bf16.msra.mxu0 %v475
    %558 = vmatprep.subr.bf16.mxu0 %v472
    %559 = vmatpush1.bf16.msra.mxu0 %v471
    %560 = vmatprep.subr.bf16.mxu0 %v468
    %561 = vmatpush1.bf16.msra.mxu0 %v467
    %562 = vmatprep.subr.bf16.mxu0 %v464
    %563 = vmatpush1.bf16.msra.mxu0 %v463
    %564 = vmatprep.subr.bf16.mxu0 %v460
    %565 = vmatpush1.bf16.msra.mxu0 %v459
    %566 = vmatprep.subr.bf16.mxu0 %v456
    %567 = vmatpush1.bf16.msra.mxu0 %v455
    %568 = vmatprep.subr.bf16.mxu0 %v452
    %569 = vmatpush1.bf16.msra.mxu0 %v451
    %570 = vmatprep.subr.bf16.mxu0 0
    %571 = vmatpush2.bf16.msra.mxu0 0
    %572 = vmatprep.subr.bf16.mxu0 0
    %573 = vmatpush2.bf16.msra.mxu0 0
    %574 = vmatprep.subr.bf16.mxu0 0
    %575 = vmatpush2.bf16.msra.mxu0 0
    %576 = vmatprep.subr.bf16.mxu0 0
    %577 = vmatpush2.bf16.msra.mxu0 0
    %578 = vmatprep.subr.bf16.mxu0 0
    %579 = vmatpush2.bf16.msra.mxu0 0
    %580 = vmatprep.subr.bf16.mxu0 0
    %581 = vmatpush2.bf16.msra.mxu0 0
    %582 = vmatprep.subr.bf16.mxu0 0
    %583 = vmatpush2.bf16.msra.mxu0 0
    %584 = vmatprep.subr.bf16.mxu0 0
    %585 = vmatpush2.bf16.msra.mxu0 0
    %586 = vmatprep.mubr.bf16.mxu0 0
    %587 = vmatmul.mubr.bf16.gmra.mxu0 %v352
    %v588 = vpop.f32.mrf.mxu0
    %v589 = vadd.f32 0.0, %v588
    %v590 = vpop.f32.mrf.mxu0
    %v591 = vadd.f32 0.0, %v590
    %v592 = vpop.f32.mrf.mxu0
    %v593 = vpop.f32.mrf.mxu0
    %594 = vdwg.mxu0
    %v595 = vadd.f32 %v348, %v548
    %v596 = vadd.f32 %v349, %v550
    %v597 = vadd.f32 %v350, %v589
    %v598 = vadd.f32 %v351, %v591
    %v599 = vsub.f32 0.0, %v595
    %v600 = vmul.f32 %v599, 1.442695
    %v601 = vpow.pop %v600
    %v602 = vadd.f32 %v601, 1.0
    %v603 = vrcp.pop %v602
    %v604 = vmul.f32 1.0, %v603
    %v605 = vsub.f32 0.0, %v596
    %v606 = vmul.f32 %v605, 1.442695
    %v607 = vpow.pop %v606
    %v608 = vadd.f32 %v607, 1.0
    %v609 = vrcp.pop %v608
    %v610 = vmul.f32 1.0, %v609
    %v611 = vtanh.pop %v597
    %v612 = vsub.f32 0.0, %v598
    %v613 = vmul.f32 %v612, 1.442695
    %v614 = vpow.pop %v613
    %v615 = vadd.f32 %v614, 1.0
    %v616 = vrcp.pop %v615
    %v617 = vmul.f32 1.0, %v616
    %v618 = vmul.f32 %v610, %v347
    %v619 = vmul.f32 %v604, %v611
    %v620 = vadd.f32 %v618, %v619
    %v621 = vtanh.pop %v620
    %v622 = vmul.f32 %v617, %v621
    %623 = vst [vmem:[#allocation11] sm:$0xff] %v622
    %s624 = scalar_lea.vmem [#allocation2], 32
    %v625 = vld [vmem:[%s624] sm:$0xff]
    %v626 = vld [vmem:[%s624 + $0x8] sm:$0xff]
    %v627 = vld [vmem:[%s624 + $0x10] sm:$0xff]
    %v628 = vld [vmem:[%s624 + $0x18] sm:$0xff]
    %v629 = vpack.c.bf16 %v622, %v622
    %630 = vmatprep.subr.bf16.mxu0 %v478
    %631 = vmatpush1.bf16.msra.mxu0 %v477
    %632 = vmatprep.subr.bf16.mxu0 %v474
    %633 = vmatpush1.bf16.msra.mxu0 %v473
    %634 = vmatprep.subr.bf16.mxu0 %v470
    %635 = vmatpush1.bf16.msra.mxu0 %v469
    %636 = vmatprep.subr.bf16.mxu0 %v466
    %637 = vmatpush1.bf16.msra.mxu0 %v465
    %638 = vmatprep.subr.bf16.mxu0 %v462
    %639 = vmatpush1.bf16.msra.mxu0 %v461
    %640 = vmatprep.subr.bf16.mxu0 %v458
    %641 = vmatpush1.bf16.msra.mxu0 %v457
    %642 = vmatprep.subr.bf16.mxu0 %v454
    %643 = vmatpush1.bf16.msra.mxu0 %v453
    %644 = vmatprep.subr.bf16.mxu0 %v450
    %645 = vmatpush1.bf16.msra.mxu0 %v449
    %646 = vmatprep.subr.bf16.mxu0 0
    %647 = vmatpush2.bf16.msra.mxu0 0
    %648 = vmatprep.subr.bf16.mxu0 0
    %649 = vmatpush2.bf16.msra.mxu0 0
    %650 = vmatprep.subr.bf16.mxu0 0
    %651 = vmatpush2.bf16.msra.mxu0 0
    %652 = vmatprep.subr.bf16.mxu0 0
    %653 = vmatpush2.bf16.msra.mxu0 0
    %654 = vmatprep.subr.bf16.mxu0 0
    %655 = vmatpush2.bf16.msra.mxu0 0
    %656 = vmatprep.subr.bf16.mxu0 0
    %657 = vmatpush2.bf16.msra.mxu0 0
    %658 = vmatprep.subr.bf16.mxu0 0
    %659 = vmatpush2.bf16.msra.mxu0 0
    %660 = vmatprep.subr.bf16.mxu0 0
    %661 = vmatpush2.bf16.msra.mxu0 0
    %662 = vmatprep.mubr.bf16.mxu0 0
    %663 = vmatmul.mubr.bf16.gmra.mxu0 %v629
    %v664 = vpop.f32.mrf.mxu0
    %v665 = vadd.f32 0.0, %v664
    %v666 = vpop.f32.mrf.mxu0
    %v667 = vadd.f32 0.0, %v666
    %v668 = vpop.f32.mrf.mxu0
    %v669 = vpop.f32.mrf.mxu0
    %670 = vdwg.mxu0
    %671 = vmatprep.subr.bf16.mxu0 %v480
    %672 = vmatpush1.bf16.msra.mxu0 %v479
    %673 = vmatprep.subr.bf16.mxu0 %v476
    %674 = vmatpush1.bf16.msra.mxu0 %v475
    %675 = vmatprep.subr.bf16.mxu0 %v472
    %676 = vmatpush1.bf16.msra.mxu0 %v471
    %677 = vmatprep.subr.bf16.mxu0 %v468
    %678 = vmatpush1.bf16.msra.mxu0 %v467
    %679 = vmatprep.subr.bf16.mxu0 %v464
    %680 = vmatpush1.bf16.msra.mxu0 %v463
    %681 = vmatprep.subr.bf16.mxu0 %v460
    %682 = vmatpush1.bf16.msra.mxu0 %v459
    %683 = vmatprep.subr.bf16.mxu0 %v456
    %684 = vmatpush1.bf16.msra.mxu0 %v455
    %685 = vmatprep.subr.bf16.mxu0 %v452
    %686 = vmatpush1.bf16.msra.mxu0 %v451
    %687 = vmatprep.subr.bf16.mxu0 0
    %688 = vmatpush2.bf16.msra.mxu0 0
    %689 = vmatprep.subr.bf16.mxu0 0
    %690 = vmatpush2.bf16.msra.mxu0 0
    %691 = vmatprep.subr.bf16.mxu0 0
    %692 = vmatpush2.bf16.msra.mxu0 0
    %693 = vmatprep.subr.bf16.mxu0 0
    %694 = vmatpush2.bf16.msra.mxu0 0
    %695 = vmatprep.subr.bf16.mxu0 0
    %696 = vmatpush2.bf16.msra.mxu0 0
    %697 = vmatprep.subr.bf16.mxu0 0
    %698 = vmatpush2.bf16.msra.mxu0 0
    %699 = vmatprep.subr.bf16.mxu0 0
    %700 = vmatpush2.bf16.msra.mxu0 0
    %701 = vmatprep.subr.bf16.mxu0 0
    %702 = vmatpush2.bf16.msra.mxu0 0
    %703 = vmatprep.mubr.bf16.mxu0 0
    %704 = vmatmul.mubr.bf16.gmra.mxu0 %v629
    %v705 = vpop.f32.mrf.mxu0
    %v706 = vadd.f32 0.0, %v705
    %v707 = vpop.f32.mrf.mxu0
    %v708 = vadd.f32 0.0, %v707
    %v709 = vpop.f32.mrf.mxu0
    %v710 = vpop.f32.mrf.mxu0
    %711 = vdwg.mxu0
    %v712 = vadd.f32 %v625, %v665
    %v713 = vadd.f32 %v626, %v667
    %v714 = vadd.f32 %v627, %v706
    %v715 = vadd.f32 %v628, %v708
    %v716 = vsub.f32 0.0, %v712
    %v717 = vmul.f32 %v716, 1.442695
    %v718 = vpow.pop %v717
    %v719 = vadd.f32 %v718, 1.0
    %v720 = vrcp.pop %v719
    %v721 = vmul.f32 1.0, %v720
    %v722 = vsub.f32 0.0, %v713
    %v723 = vmul.f32 %v722, 1.442695
    %v724 = vpow.pop %v723
    %v725 = vadd.f32 %v724, 1.0
    %v726 = vrcp.pop %v725
    %v727 = vmul.f32 1.0, %v726
    %v728 = vtanh.pop %v714
    %v729 = vsub.f32 0.0, %v715
    %v730 = vmul.f32 %v729, 1.442695
    %v731 = vpow.pop %v730
    %v732 = vadd.f32 %v731, 1.0
    %v733 = vrcp.pop %v732
    %v734 = vmul.f32 1.0, %v733
    %v735 = vmul.f32 %v727, %v620
    %v736 = vmul.f32 %v721, %v728
    %v737 = vadd.f32 %v735, %v736
    %v738 = vtanh.pop %v737
    %v739 = vmul.f32 %v734, %v738
    %s740 = scalar_lea.vmem [#allocation11], 8
    %741 = vst [vmem:[%s740] sm:$0xff] %v739
    %s742 = scalar_lea.vmem [#allocation2], 64
    %v743 = vld [vmem:[%s742] sm:$0xff]
    %v744 = vld [vmem:[%s742 + $0x8] sm:$0xff]
    %v745 = vld [vmem:[%s742 + $0x10] sm:$0xff]
    %v746 = vld [vmem:[%s742 + $0x18] sm:$0xff]
    %v747 = vpack.c.bf16 %v739, %v739
    %748 = vmatprep.subr.bf16.mxu0 %v478
    %749 = vmatpush1.bf16.msra.mxu0 %v477
    %750 = vmatprep.subr.bf16.mxu0 %v474
    %751 = vmatpush1.bf16.msra.mxu0 %v473
    %752 = vmatprep.subr.bf16.mxu0 %v470
    %753 = vmatpush1.bf16.msra.mxu0 %v469
    %754 = vmatprep.subr.bf16.mxu0 %v466
    %755 = vmatpush1.bf16.msra.mxu0 %v465
    %756 = vmatprep.subr.bf16.mxu0 %v462
    %757 = vmatpush1.bf16.msra.mxu0 %v461
    %758 = vmatprep.subr.bf16.mxu0 %v458
    %759 = vmatpush1.bf16.msra.mxu0 %v457
    %760 = vmatprep.subr.bf16.mxu0 %v454
    %761 = vmatpush1.bf16.msra.mxu0 %v453
    %762 = vmatprep.subr.bf16.mxu0 %v450
    %763 = vmatpush1.bf16.msra.mxu0 %v449
    %764 = vmatprep.subr.bf16.mxu0 0
    %765 = vmatpush2.bf16.msra.mxu0 0
    %766 = vmatprep.subr.bf16.mxu0 0
    %767 = vmatpush2.bf16.msra.mxu0 0
    %768 = vmatprep.subr.bf16.mxu0 0
    %769 = vmatpush2.bf16.msra.mxu0 0
    %770 = vmatprep.subr.bf16.mxu0 0
    %771 = vmatpush2.bf16.msra.mxu0 0
    %772 = vmatprep.subr.bf16.mxu0 0
    %773 = vmatpush2.bf16.msra.mxu0 0
    %774 = vmatprep.subr.bf16.mxu0 0
    %775 = vmatpush2.bf16.msra.mxu0 0
    %776 = vmatprep.subr.bf16.mxu0 0
    %777 = vmatpush2.bf16.msra.mxu0 0
    %778 = vmatprep.subr.bf16.mxu0 0
    %779 = vmatpush2.bf16.msra.mxu0 0
    %780 = vmatprep.mubr.bf16.mxu0 0
    %781 = vmatmul.mubr.bf16.gmra.mxu0 %v747
    %v782 = vpop.f32.mrf.mxu0
    %v783 = vadd.f32 0.0, %v782
    %v784 = vpop.f32.mrf.mxu0
    %v785 = vadd.f32 0.0, %v784
    %v786 = vpop.f32.mrf.mxu0
    %v787 = vpop.f32.mrf.mxu0
    %788 = vdwg.mxu0
    %789 = vmatprep.subr.bf16.mxu0 %v480
    %790 = vmatpush1.bf16.msra.mxu0 %v479
    %791 = vmatprep.subr.bf16.mxu0 %v476
    %792 = vmatpush1.bf16.msra.mxu0 %v475
    %793 = vmatprep.subr.bf16.mxu0 %v472
    %794 = vmatpush1.bf16.msra.mxu0 %v471
    %795 = vmatprep.subr.bf16.mxu0 %v468
    %796 = vmatpush1.bf16.msra.mxu0 %v467
    %797 = vmatprep.subr.bf16.mxu0 %v464
    %798 = vmatpush1.bf16.msra.mxu0 %v463
    %799 = vmatprep.subr.bf16.mxu0 %v460
    %800 = vmatpush1.bf16.msra.mxu0 %v459
    %801 = vmatprep.subr.bf16.mxu0 %v456
    %802 = vmatpush1.bf16.msra.mxu0 %v455
    %803 = vmatprep.subr.bf16.mxu0 %v452
    %804 = vmatpush1.bf16.msra.mxu0 %v451
    %805 = vmatprep.subr.bf16.mxu0 0
    %806 = vmatpush2.bf16.msra.mxu0 0
    %807 = vmatprep.subr.bf16.mxu0 0
    %808 = vmatpush2.bf16.msra.mxu0 0
    %809 = vmatprep.subr.bf16.mxu0 0
    %810 = vmatpush2.bf16.msra.mxu0 0
    %811 = vmatprep.subr.bf16.mxu0 0
    %812 = vmatpush2.bf16.msra.mxu0 0
    %813 = vmatprep.subr.bf16.mxu0 0
    %814 = vmatpush2.bf16.msra.mxu0 0
    %815 = vmatprep.subr.bf16.mxu0 0
    %816 = vmatpush2.bf16.msra.mxu0 0
    %817 = vmatprep.subr.bf16.mxu0 0
    %818 = vmatpush2.bf16.msra.mxu0 0
    %819 = vmatprep.subr.bf16.mxu0 0
    %820 = vmatpush2.bf16.msra.mxu0 0
    %821 = vmatprep.mubr.bf16.mxu0 0
    %822 = vmatmul.mubr.bf16.gmra.mxu0 %v747
    %v823 = vpop.f32.mrf.mxu0
    %v824 = vadd.f32 0.0, %v823
    %v825 = vpop.f32.mrf.mxu0
    %v826 = vadd.f32 0.0, %v825
    %v827 = vpop.f32.mrf.mxu0
    %v828 = vpop.f32.mrf.mxu0
    %829 = vdwg.mxu0
    %v830 = vadd.f32 %v743, %v783
    %v831 = vadd.f32 %v744, %v785
    %v832 = vadd.f32 %v745, %v824
    %v833 = vadd.f32 %v746, %v826
    %v834 = vsub.f32 0.0, %v830
    %v835 = vmul.f32 %v834, 1.442695
    %v836 = vpow.pop %v835
    %v837 = vadd.f32 %v836, 1.0
    %v838 = vrcp.pop %v837
    %v839 = vmul.f32 1.0, %v838
    %v840 = vsub.f32 0.0, %v831
    %v841 = vmul.f32 %v840, 1.442695
    %v842 = vpow.pop %v841
    %v843 = vadd.f32 %v842, 1.0
    %v844 = vrcp.pop %v843
    %v845 = vmul.f32 1.0, %v844
    %v846 = vtanh.pop %v832
    %v847 = vsub.f32 0.0, %v833
    %v848 = vmul.f32 %v847, 1.442695
    %v849 = vpow.pop %v848
    %v850 = vadd.f32 %v849, 1.0
    %v851 = vrcp.pop %v850
    %v852 = vmul.f32 1.0, %v851
    %v853 = vmul.f32 %v845, %v737
    %v854 = vmul.f32 %v839, %v846
    %v855 = vadd.f32 %v853, %v854
    %v856 = vtanh.pop %v855
    %v857 = vmul.f32 %v852, %v856
    %s858 = scalar_lea.vmem [#allocation11], 16
    %859 = vst [vmem:[%s858] sm:$0xff] %v857
    %s860 = scalar_lea.vmem [#allocation2], 96
    %v861 = vld [vmem:[%s860] sm:$0xff]
    %v862 = vld [vmem:[%s860 + $0x8] sm:$0xff]
    %v863 = vld [vmem:[%s860 + $0x10] sm:$0xff]
    %v864 = vld [vmem:[%s860 + $0x18] sm:$0xff]
    %v865 = vpack.c.bf16 %v857, %v857
    %866 = vmatprep.subr.bf16.mxu0 %v478
    %867 = vmatpush1.bf16.msra.mxu0 %v477
    %868 = vmatprep.subr.bf16.mxu0 %v474
    %869 = vmatpush1.bf16.msra.mxu0 %v473
    %870 = vmatprep.subr.bf16.mxu0 %v470
    %871 = vmatpush1.bf16.msra.mxu0 %v469
    %872 = vmatprep.subr.bf16.mxu0 %v466
    %873 = vmatpush1.bf16.msra.mxu0 %v465
    %874 = vmatprep.subr.bf16.mxu0 %v462
    %875 = vmatpush1.bf16.msra.mxu0 %v461
    %876 = vmatprep.subr.bf16.mxu0 %v458
    %877 = vmatpush1.bf16.msra.mxu0 %v457
    %878 = vmatprep.subr.bf16.mxu0 %v454
    %879 = vmatpush1.bf16.msra.mxu0 %v453
    %880 = vmatprep.subr.bf16.mxu0 %v450
    %881 = vmatpush1.bf16.msra.mxu0 %v449
    %882 = vmatprep.subr.bf16.mxu0 0
    %883 = vmatpush2.bf16.msra.mxu0 0
    %884 = vmatprep.subr.bf16.mxu0 0
    %885 = vmatpush2.bf16.msra.mxu0 0
    %886 = vmatprep.subr.bf16.mxu0 0
    %887 = vmatpush2.bf16.msra.mxu0 0
    %888 = vmatprep.subr.bf16.mxu0 0
    %889 = vmatpush2.bf16.msra.mxu0 0
    %890 = vmatprep.subr.bf16.mxu0 0
    %891 = vmatpush2.bf16.msra.mxu0 0
    %892 = vmatprep.subr.bf16.mxu0 0
    %893 = vmatpush2.bf16.msra.mxu0 0
    %894 = vmatprep.subr.bf16.mxu0 0
    %895 = vmatpush2.bf16.msra.mxu0 0
    %896 = vmatprep.subr.bf16.mxu0 0
    %897 = vmatpush2.bf16.msra.mxu0 0
    %898 = vmatprep.mubr.bf16.mxu0 0
    %899 = vmatmul.mubr.bf16.gmra.mxu0 %v865
    %v900 = vpop.f32.mrf.mxu0
    %v901 = vadd.f32 0.0, %v900
    %v902 = vpop.f32.mrf.mxu0
    %v903 = vadd.f32 0.0, %v902
    %v904 = vpop.f32.mrf.mxu0
    %v905 = vpop.f32.mrf.mxu0
    %906 = vdwg.mxu0
    %907 = vmatprep.subr.bf16.mxu0 %v480
    %908 = vmatpush1.bf16.msra.mxu0 %v479
    %909 = vmatprep.subr.bf16.mxu0 %v476
    %910 = vmatpush1.bf16.msra.mxu0 %v475
    %911 = vmatprep.subr.bf16.mxu0 %v472
    %912 = vmatpush1.bf16.msra.mxu0 %v471
    %913 = vmatprep.subr.bf16.mxu0 %v468
    %914 = vmatpush1.bf16.msra.mxu0 %v467
    %915 = vmatprep.subr.bf16.mxu0 %v464
    %916 = vmatpush1.bf16.msra.mxu0 %v463
    %917 = vmatprep.subr.bf16.mxu0 %v460
    %918 = vmatpush1.bf16.msra.mxu0 %v459
    %919 = vmatprep.subr.bf16.mxu0 %v456
    %920 = vmatpush1.bf16.msra.mxu0 %v455
    %921 = vmatprep.subr.bf16.mxu0 %v452
    %922 = vmatpush1.bf16.msra.mxu0 %v451
    %923 = vmatprep.subr.bf16.mxu0 0
    %924 = vmatpush2.bf16.msra.mxu0 0
    %925 = vmatprep.subr.bf16.mxu0 0
    %926 = vmatpush2.bf16.msra.mxu0 0
    %927 = vmatprep.subr.bf16.mxu0 0
    %928 = vmatpush2.bf16.msra.mxu0 0
    %929 = vmatprep.subr.bf16.mxu0 0
    %930 = vmatpush2.bf16.msra.mxu0 0
    %931 = vmatprep.subr.bf16.mxu0 0
    %932 = vmatpush2.bf16.msra.mxu0 0
    %933 = vmatprep.subr.bf16.mxu0 0
    %934 = vmatpush2.bf16.msra.mxu0 0
    %935 = vmatprep.subr.bf16.mxu0 0
    %936 = vmatpush2.bf16.msra.mxu0 0
    %937 = vmatprep.subr.bf16.mxu0 0
    %938 = vmatpush2.bf16.msra.mxu0 0
    %939 = vmatprep.mubr.bf16.mxu0 0
    %940 = vmatmul.mubr.bf16.gmra.mxu0 %v865
    %v941 = vpop.f32.mrf.mxu0
    %v942 = vadd.f32 0.0, %v941
    %v943 = vpop.f32.mrf.mxu0
    %v944 = vadd.f32 0.0, %v943
    %v945 = vpop.f32.mrf.mxu0
    %v946 = vpop.f32.mrf.mxu0
    %947 = vdwg.mxu0
    %v948 = vadd.f32 %v861, %v901
    %v949 = vadd.f32 %v862, %v903
    %v950 = vadd.f32 %v863, %v942
    %v951 = vadd.f32 %v864, %v944
    %v952 = vsub.f32 0.0, %v948
    %v953 = vmul.f32 %v952, 1.442695
    %v954 = vpow.pop %v953
    %v955 = vadd.f32 %v954, 1.0
    %v956 = vrcp.pop %v955
    %v957 = vmul.f32 1.0, %v956
    %v958 = vsub.f32 0.0, %v949
    %v959 = vmul.f32 %v958, 1.442695
    %v960 = vpow.pop %v959
    %v961 = vadd.f32 %v960, 1.0
    %v962 = vrcp.pop %v961
    %v963 = vmul.f32 1.0, %v962
    %v964 = vtanh.pop %v950
    %v965 = vsub.f32 0.0, %v951
    %v966 = vmul.f32 %v965, 1.442695
    %v967 = vpow.pop %v966
    %v968 = vadd.f32 %v967, 1.0
    %v969 = vrcp.pop %v968
    %v970 = vmul.f32 1.0, %v969
    %v971 = vmul.f32 %v963, %v855
    %v972 = vmul.f32 %v957, %v964
    %v973 = vadd.f32 %v971, %v972
    %v974 = vtanh.pop %v973
    %v975 = vmul.f32 %v970, %v974
    %s976 = scalar_lea.vmem [#allocation11], 24
    %977 = vst [vmem:[%s976] sm:$0xff] %v975
    %s978 = scalar_lea.vmem [#allocation2], 128
    %v979 = vld [vmem:[%s978] sm:$0xff]
    %v980 = vld [vmem:[%s978 + $0x8] sm:$0xff]
    %v981 = vld [vmem:[%s978 + $0x10] sm:$0xff]
    %v982 = vld [vmem:[%s978 + $0x18] sm:$0xff]
    %v983 = vpack.c.bf16 %v975, %v975
    %984 = vmatprep.subr.bf16.mxu0 %v478
    %985 = vmatpush1.bf16.msra.mxu0 %v477
    %986 = vmatprep.subr.bf16.mxu0 %v474
    %987 = vmatpush1.bf16.msra.mxu0 %v473
    %988 = vmatprep.subr.bf16.mxu0 %v470
    %989 = vmatpush1.bf16.msra.mxu0 %v469
    %990 = vmatprep.subr.bf16.mxu0 %v466
    %991 = vmatpush1.bf16.msra.mxu0 %v465
    %992 = vmatprep.subr.bf16.mxu0 %v462
    %993 = vmatpush1.bf16.msra.mxu0 %v461
    %994 = vmatprep.subr.bf16.mxu0 %v458
    %995 = vmatpush1.bf16.msra.mxu0 %v457
    %996 = vmatprep.subr.bf16.mxu0 %v454
    %997 = vmatpush1.bf16.msra.mxu0 %v453
    %998 = vmatprep.subr.bf16.mxu0 %v450
    %999 = vmatpush1.bf16.msra.mxu0 %v449
    %1000 = vmatprep.subr.bf16.mxu0 0
    %1001 = vmatpush2.bf16.msra.mxu0 0
    %1002 = vmatprep.subr.bf16.mxu0 0
    %1003 = vmatpush2.bf16.msra.mxu0 0
    %1004 = vmatprep.subr.bf16.mxu0 0
    %1005 = vmatpush2.bf16.msra.mxu0 0
    %1006 = vmatprep.subr.bf16.mxu0 0
    %1007 = vmatpush2.bf16.msra.mxu0 0
    %1008 = vmatprep.subr.bf16.mxu0 0
    %1009 = vmatpush2.bf16.msra.mxu0 0
    %1010 = vmatprep.subr.bf16.mxu0 0
    %1011 = vmatpush2.bf16.msra.mxu0 0
    %1012 = vmatprep.subr.bf16.mxu0 0
    %1013 = vmatpush2.bf16.msra.mxu0 0
    %1014 = vmatprep.subr.bf16.mxu0 0
    %1015 = vmatpush2.bf16.msra.mxu0 0
    %1016 = vmatprep.mubr.bf16.mxu0 0
    %1017 = vmatmul.mubr.bf16.gmra.mxu0 %v983
    %v1018 = vpop.f32.mrf.mxu0
    %v1019 = vadd.f32 0.0, %v1018
    %v1020 = vpop.f32.mrf.mxu0
    %v1021 = vadd.f32 0.0, %v1020
    %v1022 = vpop.f32.mrf.mxu0
    %v1023 = vpop.f32.mrf.mxu0
    %1024 = vdwg.mxu0
    %1025 = vmatprep.subr.bf16.mxu0 %v480
    %1026 = vmatpush1.bf16.msra.mxu0 %v479
    %1027 = vmatprep.subr.bf16.mxu0 %v476
    %1028 = vmatpush1.bf16.msra.mxu0 %v475
    %1029 = vmatprep.subr.bf16.mxu0 %v472
    %1030 = vmatpush1.bf16.msra.mxu0 %v471
    %1031 = vmatprep.subr.bf16.mxu0 %v468
    %1032 = vmatpush1.bf16.msra.mxu0 %v467
    %1033 = vmatprep.subr.bf16.mxu0 %v464
    %1034 = vmatpush1.bf16.msra.mxu0 %v463
    %1035 = vmatprep.subr.bf16.mxu0 %v460
    %1036 = vmatpush1.bf16.msra.mxu0 %v459
    %1037 = vmatprep.subr.bf16.mxu0 %v456
    %1038 = vmatpush1.bf16.msra.mxu0 %v455
    %1039 = vmatprep.subr.bf16.mxu0 %v452
    %1040 = vmatpush1.bf16.msra.mxu0 %v451
    %1041 = vmatprep.subr.bf16.mxu0 0
    %1042 = vmatpush2.bf16.msra.mxu0 0
    %1043 = vmatprep.subr.bf16.mxu0 0
    %1044 = vmatpush2.bf16.msra.mxu0 0
    %1045 = vmatprep.subr.bf16.mxu0 0
    %1046 = vmatpush2.bf16.msra.mxu0 0
    %1047 = vmatprep.subr.bf16.mxu0 0
    %1048 = vmatpush2.bf16.msra.mxu0 0
    %1049 = vmatprep.subr.bf16.mxu0 0
    %1050 = vmatpush2.bf16.msra.mxu0 0
    %1051 = vmatprep.subr.bf16.mxu0 0
    %1052 = vmatpush2.bf16.msra.mxu0 0
    %1053 = vmatprep.subr.bf16.mxu0 0
    %1054 = vmatpush2.bf16.msra.mxu0 0
    %1055 = vmatprep.subr.bf16.mxu0 0
    %1056 = vmatpush2.bf16.msra.mxu0 0
    %1057 = vmatprep.mubr.bf16.mxu0 0
    %1058 = vmatmul.mubr.bf16.gmra.mxu0 %v983
    %v1059 = vpop.f32.mrf.mxu0
    %v1060 = vadd.f32 0.0, %v1059
    %v1061 = vpop.f32.mrf.mxu0
    %v1062 = vadd.f32 0.0, %v1061
    %v1063 = vpop.f32.mrf.mxu0
    %v1064 = vpop.f32.mrf.mxu0
    %1065 = vdwg.mxu0
    %v1066 = vadd.f32 %v979, %v1019
    %v1067 = vadd.f32 %v980, %v1021
    %v1068 = vadd.f32 %v981, %v1060
    %v1069 = vadd.f32 %v982, %v1062
    %v1070 = vsub.f32 0.0, %v1066
    %v1071 = vmul.f32 %v1070, 1.442695
    %v1072 = vpow.pop %v1071
    %v1073 = vadd.f32 %v1072, 1.0
    %v1074 = vrcp.pop %v1073
    %v1075 = vmul.f32 1.0, %v1074
    %v1076 = vsub.f32 0.0, %v1067
    %v1077 = vmul.f32 %v1076, 1.442695
    %v1078 = vpow.pop %v1077
    %v1079 = vadd.f32 %v1078, 1.0
    %v1080 = vrcp.pop %v1079
    %v1081 = vmul.f32 1.0, %v1080
    %v1082 = vtanh.pop %v1068
    %v1083 = vsub.f32 0.0, %v1069
    %v1084 = vmul.f32 %v1083, 1.442695
    %v1085 = vpow.pop %v1084
    %v1086 = vadd.f32 %v1085, 1.0
    %v1087 = vrcp.pop %v1086
    %v1088 = vmul.f32 1.0, %v1087
    %v1089 = vmul.f32 %v1081, %v973
    %v1090 = vmul.f32 %v1075, %v1082
    %v1091 = vadd.f32 %v1089, %v1090
    %v1092 = vtanh.pop %v1091
    %v1093 = vmul.f32 %v1088, %v1092
    %s1094 = scalar_lea.vmem [#allocation11], 32
    %1095 = vst [vmem:[%s1094] sm:$0xff] %v1093
    %s1096 = scalar_lea.vmem [#allocation2], 160
    %v1097 = vld [vmem:[%s1096] sm:$0xff]
    %v1098 = vld [vmem:[%s1096 + $0x8] sm:$0xff]
    %v1099 = vld [vmem:[%s1096 + $0x10] sm:$0xff]
    %v1100 = vld [vmem:[%s1096 + $0x18] sm:$0xff]
    %v1101 = vpack.c.bf16 %v1093, %v1093
    %1102 = vmatprep.subr.bf16.mxu0 %v478
    %1103 = vmatpush1.bf16.msra.mxu0 %v477
    %1104 = vmatprep.subr.bf16.mxu0 %v474
    %1105 = vmatpush1.bf16.msra.mxu0 %v473
    %1106 = vmatprep.subr.bf16.mxu0 %v470
    %1107 = vmatpush1.bf16.msra.mxu0 %v469
    %1108 = vmatprep.subr.bf16.mxu0 %v466
    %1109 = vmatpush1.bf16.msra.mxu0 %v465
    %1110 = vmatprep.subr.bf16.mxu0 %v462
    %1111 = vmatpush1.bf16.msra.mxu0 %v461
    %1112 = vmatprep.subr.bf16.mxu0 %v458
    %1113 = vmatpush1.bf16.msra.mxu0 %v457
    %1114 = vmatprep.subr.bf16.mxu0 %v454
    %1115 = vmatpush1.bf16.msra.mxu0 %v453
    %1116 = vmatprep.subr.bf16.mxu0 %v450
    %1117 = vmatpush1.bf16.msra.mxu0 %v449
    %1118 = vmatprep.subr.bf16.mxu0 0
    %1119 = vmatpush2.bf16.msra.mxu0 0
    %1120 = vmatprep.subr.bf16.mxu0 0
    %1121 = vmatpush2.bf16.msra.mxu0 0
    %1122 = vmatprep.subr.bf16.mxu0 0
    %1123 = vmatpush2.bf16.msra.mxu0 0
    %1124 = vmatprep.subr.bf16.mxu0 0
    %1125 = vmatpush2.bf16.msra.mxu0 0
    %1126 = vmatprep.subr.bf16.mxu0 0
    %1127 = vmatpush2.bf16.msra.mxu0 0
    %1128 = vmatprep.subr.bf16.mxu0 0
    %1129 = vmatpush2.bf16.msra.mxu0 0
    %1130 = vmatprep.subr.bf16.mxu0 0
    %1131 = vmatpush2.bf16.msra.mxu0 0
    %1132 = vmatprep.subr.bf16.mxu0 0
    %1133 = vmatpush2.bf16.msra.mxu0 0
    %1134 = vmatprep.mubr.bf16.mxu0 0
    %1135 = vmatmul.mubr.bf16.gmra.mxu0 %v1101
    %v1136 = vpop.f32.mrf.mxu0
    %v1137 = vadd.f32 0.0, %v1136
    %v1138 = vpop.f32.mrf.mxu0
    %v1139 = vadd.f32 0.0, %v1138
    %v1140 = vpop.f32.mrf.mxu0
    %v1141 = vpop.f32.mrf.mxu0
    %1142 = vdwg.mxu0
    %1143 = vmatprep.subr.bf16.mxu0 %v480
    %1144 = vmatpush1.bf16.msra.mxu0 %v479
    %1145 = vmatprep.subr.bf16.mxu0 %v476
    %1146 = vmatpush1.bf16.msra.mxu0 %v475
    %1147 = vmatprep.subr.bf16.mxu0 %v472
    %1148 = vmatpush1.bf16.msra.mxu0 %v471
    %1149 = vmatprep.subr.bf16.mxu0 %v468
    %1150 = vmatpush1.bf16.msra.mxu0 %v467
    %1151 = vmatprep.subr.bf16.mxu0 %v464
    %1152 = vmatpush1.bf16.msra.mxu0 %v463
    %1153 = vmatprep.subr.bf16.mxu0 %v460
    %1154 = vmatpush1.bf16.msra.mxu0 %v459
    %1155 = vmatprep.subr.bf16.mxu0 %v456
    %1156 = vmatpush1.bf16.msra.mxu0 %v455
    %1157 = vmatprep.subr.bf16.mxu0 %v452
    %1158 = vmatpush1.bf16.msra.mxu0 %v451
    %1159 = vmatprep.subr.bf16.mxu0 0
    %1160 = vmatpush2.bf16.msra.mxu0 0
    %1161 = vmatprep.subr.bf16.mxu0 0
    %1162 = vmatpush2.bf16.msra.mxu0 0
    %1163 = vmatprep.subr.bf16.mxu0 0
    %1164 = vmatpush2.bf16.msra.mxu0 0
    %1165 = vmatprep.subr.bf16.mxu0 0
    %1166 = vmatpush2.bf16.msra.mxu0 0
    %1167 = vmatprep.subr.bf16.mxu0 0
    %1168 = vmatpush2.bf16.msra.mxu0 0
    %1169 = vmatprep.subr.bf16.mxu0 0
    %1170 = vmatpush2.bf16.msra.mxu0 0
    %1171 = vmatprep.subr.bf16.mxu0 0
    %1172 = vmatpush2.bf16.msra.mxu0 0
    %1173 = vmatprep.subr.bf16.mxu0 0
    %1174 = vmatpush2.bf16.msra.mxu0 0
    %1175 = vmatprep.mubr.bf16.mxu0 0
    %1176 = vmatmul.mubr.bf16.gmra.mxu0 %v1101
    %v1177 = vpop.f32.mrf.mxu0
    %v1178 = vadd.f32 0.0, %v1177
    %v1179 = vpop.f32.mrf.mxu0
    %v1180 = vadd.f32 0.0, %v1179
    %v1181 = vpop.f32.mrf.mxu0
    %v1182 = vpop.f32.mrf.mxu0
    %1183 = vdwg.mxu0
    %v1184 = vadd.f32 %v1097, %v1137
    %v1185 = vadd.f32 %v1098, %v1139
    %v1186 = vadd.f32 %v1099, %v1178
    %v1187 = vadd.f32 %v1100, %v1180
    %v1188 = vsub.f32 0.0, %v1184
    %v1189 = vmul.f32 %v1188, 1.442695
    %v1190 = vpow.pop %v1189
    %v1191 = vadd.f32 %v1190, 1.0
    %v1192 = vrcp.pop %v1191
    %v1193 = vmul.f32 1.0, %v1192
    %v1194 = vsub.f32 0.0, %v1185
    %v1195 = vmul.f32 %v1194, 1.442695
    %v1196 = vpow.pop %v1195
    %v1197 = vadd.f32 %v1196, 1.0
    %v1198 = vrcp.pop %v1197
    %v1199 = vmul.f32 1.0, %v1198
    %v1200 = vtanh.pop %v1186
    %v1201 = vsub.f32 0.0, %v1187
    %v1202 = vmul.f32 %v1201, 1.442695
    %v1203 = vpow.pop %v1202
    %v1204 = vadd.f32 %v1203, 1.0
    %v1205 = vrcp.pop %v1204
    %v1206 = vmul.f32 1.0, %v1205
    %v1207 = vmul.f32 %v1199, %v1091
    %v1208 = vmul.f32 %v1193, %v1200
    %v1209 = vadd.f32 %v1207, %v1208
    %v1210 = vtanh.pop %v1209
    %v1211 = vmul.f32 %v1206, %v1210
    %s1212 = scalar_lea.vmem [#allocation11], 40
    %1213 = vst [vmem:[%s1212] sm:$0xff] %v1211
    %s1214 = scalar_lea.vmem [#allocation2], 192
    %v1215 = vld [vmem:[%s1214] sm:$0xff]
    %v1216 = vld [vmem:[%s1214 + $0x8] sm:$0xff]
    %v1217 = vld [vmem:[%s1214 + $0x10] sm:$0xff]
    %v1218 = vld [vmem:[%s1214 + $0x18] sm:$0xff]
    %v1219 = vpack.c.bf16 %v1211, %v1211
    %1220 = vmatprep.subr.bf16.mxu0 %v478
    %1221 = vmatpush1.bf16.msra.mxu0 %v477
    %1222 = vmatprep.subr.bf16.mxu0 %v474
    %1223 = vmatpush1.bf16.msra.mxu0 %v473
    %1224 = vmatprep.subr.bf16.mxu0 %v470
    %1225 = vmatpush1.bf16.msra.mxu0 %v469
    %1226 = vmatprep.subr.bf16.mxu0 %v466
    %1227 = vmatpush1.bf16.msra.mxu0 %v465
    %1228 = vmatprep.subr.bf16.mxu0 %v462
    %1229 = vmatpush1.bf16.msra.mxu0 %v461
    %1230 = vmatprep.subr.bf16.mxu0 %v458
    %1231 = vmatpush1.bf16.msra.mxu0 %v457
    %1232 = vmatprep.subr.bf16.mxu0 %v454
    %1233 = vmatpush1.bf16.msra.mxu0 %v453
    %1234 = vmatprep.subr.bf16.mxu0 %v450
    %1235 = vmatpush1.bf16.msra.mxu0 %v449
    %1236 = vmatprep.subr.bf16.mxu0 0
    %1237 = vmatpush2.bf16.msra.mxu0 0
    %1238 = vmatprep.subr.bf16.mxu0 0
    %1239 = vmatpush2.bf16.msra.mxu0 0
    %1240 = vmatprep.subr.bf16.mxu0 0
    %1241 = vmatpush2.bf16.msra.mxu0 0
    %1242 = vmatprep.subr.bf16.mxu0 0
    %1243 = vmatpush2.bf16.msra.mxu0 0
    %1244 = vmatprep.subr.bf16.mxu0 0
    %1245 = vmatpush2.bf16.msra.mxu0 0
    %1246 = vmatprep.subr.bf16.mxu0 0
    %1247 = vmatpush2.bf16.msra.mxu0 0
    %1248 = vmatprep.subr.bf16.mxu0 0
    %1249 = vmatpush2.bf16.msra.mxu0 0
    %1250 = vmatprep.subr.bf16.mxu0 0
    %1251 = vmatpush2.bf16.msra.mxu0 0
    %1252 = vmatprep.mubr.bf16.mxu0 0
    %1253 = vmatmul.mubr.bf16.gmra.mxu0 %v1219
    %v1254 = vpop.f32.mrf.mxu0
    %v1255 = vadd.f32 0.0, %v1254
    %v1256 = vpop.f32.mrf.mxu0
    %v1257 = vadd.f32 0.0, %v1256
    %v1258 = vpop.f32.mrf.mxu0
    %v1259 = vpop.f32.mrf.mxu0
    %1260 = vdwg.mxu0
    %1261 = vmatprep.subr.bf16.mxu0 %v480
    %1262 = vmatpush1.bf16.msra.mxu0 %v479
    %1263 = vmatprep.subr.bf16.mxu0 %v476
    %1264 = vmatpush1.bf16.msra.mxu0 %v475
    %1265 = vmatprep.subr.bf16.mxu0 %v472
    %1266 = vmatpush1.bf16.msra.mxu0 %v471
    %1267 = vmatprep.subr.bf16.mxu0 %v468
    %1268 = vmatpush1.bf16.msra.mxu0 %v467
    %1269 = vmatprep.subr.bf16.mxu0 %v464
    %1270 = vmatpush1.bf16.msra.mxu0 %v463
    %1271 = vmatprep.subr.bf16.mxu0 %v460
    %1272 = vmatpush1.bf16.msra.mxu0 %v459
    %1273 = vmatprep.subr.bf16.mxu0 %v456
    %1274 = vmatpush1.bf16.msra.mxu0 %v455
    %1275 = vmatprep.subr.bf16.mxu0 %v452
    %1276 = vmatpush1.bf16.msra.mxu0 %v451
    %1277 = vmatprep.subr.bf16.mxu0 0
    %1278 = vmatpush2.bf16.msra.mxu0 0
    %1279 = vmatprep.subr.bf16.mxu0 0
    %1280 = vmatpush2.bf16.msra.mxu0 0
    %1281 = vmatprep.subr.bf16.mxu0 0
    %1282 = vmatpush2.bf16.msra.mxu0 0
    %1283 = vmatprep.subr.bf16.mxu0 0
    %1284 = vmatpush2.bf16.msra.mxu0 0
    %1285 = vmatprep.subr.bf16.mxu0 0
    %1286 = vmatpush2.bf16.msra.mxu0 0
    %1287 = vmatprep.subr.bf16.mxu0 0
    %1288 = vmatpush2.bf16.msra.mxu0 0
    %1289 = vmatprep.subr.bf16.mxu0 0
    %1290 = vmatpush2.bf16.msra.mxu0 0
    %1291 = vmatprep.subr.bf16.mxu0 0
    %1292 = vmatpush2.bf16.msra.mxu0 0
    %1293 = vmatprep.mubr.bf16.mxu0 0
    %1294 = vmatmul.mubr.bf16.gmra.mxu0 %v1219
    %v1295 = vpop.f32.mrf.mxu0
    %v1296 = vadd.f32 0.0, %v1295
    %v1297 = vpop.f32.mrf.mxu0
    %v1298 = vadd.f32 0.0, %v1297
    %v1299 = vpop.f32.mrf.mxu0
    %v1300 = vpop.f32.mrf.mxu0
    %1301 = vdwg.mxu0
    %v1302 = vadd.f32 %v1215, %v1255
    %v1303 = vadd.f32 %v1216, %v1257
    %v1304 = vadd.f32 %v1217, %v1296
    %v1305 = vadd.f32 %v1218, %v1298
    %v1306 = vsub.f32 0.0, %v1302
    %v1307 = vmul.f32 %v1306, 1.442695
    %v1308 = vpow.pop %v1307
    %v1309 = vadd.f32 %v1308, 1.0
    %v1310 = vrcp.pop %v1309
    %v1311 = vmul.f32 1.0, %v1310
    %v1312 = vsub.f32 0.0, %v1303
    %v1313 = vmul.f32 %v1312, 1.442695
    %v1314 = vpow.pop %v1313
    %v1315 = vadd.f32 %v1314, 1.0
    %v1316 = vrcp.pop %v1315
    %v1317 = vmul.f32 1.0, %v1316
    %v1318 = vtanh.pop %v1304
    %v1319 = vsub.f32 0.0, %v1305
    %v1320 = vmul.f32 %v1319, 1.442695
    %v1321 = vpow.pop %v1320
    %v1322 = vadd.f32 %v1321, 1.0
    %v1323 = vrcp.pop %v1322
    %v1324 = vmul.f32 1.0, %v1323
    %v1325 = vmul.f32 %v1317, %v1209
    %v1326 = vmul.f32 %v1311, %v1318
    %v1327 = vadd.f32 %v1325, %v1326
    %v1328 = vtanh.pop %v1327
    %v1329 = vmul.f32 %v1324, %v1328
    %s1330 = scalar_lea.vmem [#allocation11], 48
    %1331 = vst [vmem:[%s1330] sm:$0xff] %v1329
    %s1332 = scalar_lea.vmem [#allocation2], 224
    %v1333 = vld [vmem:[%s1332] sm:$0xff]
    %v1334 = vld [vmem:[%s1332 + $0x8] sm:$0xff]
    %v1335 = vld [vmem:[%s1332 + $0x10] sm:$0xff]
    %v1336 = vld [vmem:[%s1332 + $0x18] sm:$0xff]
    %v1337 = vpack.c.bf16 %v1329, %v1329
    %1338 = vmatprep.subr.bf16.mxu0 %v478
    %1339 = vmatpush1.bf16.msra.mxu0 %v477
    %1340 = vmatprep.subr.bf16.mxu0 %v474
    %1341 = vmatpush1.bf16.msra.mxu0 %v473
    %1342 = vmatprep.subr.bf16.mxu0 %v470
    %1343 = vmatpush1.bf16.msra.mxu0 %v469
    %1344 = vmatprep.subr.bf16.mxu0 %v466
    %1345 = vmatpush1.bf16.msra.mxu0 %v465
    %1346 = vmatprep.subr.bf16.mxu0 %v462
    %1347 = vmatpush1.bf16.msra.mxu0 %v461
    %1348 = vmatprep.subr.bf16.mxu0 %v458
    %1349 = vmatpush1.bf16.msra.mxu0 %v457
    %1350 = vmatprep.subr.bf16.mxu0 %v454
    %1351 = vmatpush1.bf16.msra.mxu0 %v453
    %1352 = vmatprep.subr.bf16.mxu0 %v450
    %1353 = vmatpush1.bf16.msra.mxu0 %v449
    %1354 = vmatprep.subr.bf16.mxu0 0
    %1355 = vmatpush2.bf16.msra.mxu0 0
    %1356 = vmatprep.subr.bf16.mxu0 0
    %1357 = vmatpush2.bf16.msra.mxu0 0
    %1358 = vmatprep.subr.bf16.mxu0 0
    %1359 = vmatpush2.bf16.msra.mxu0 0
    %1360 = vmatprep.subr.bf16.mxu0 0
    %1361 = vmatpush2.bf16.msra.mxu0 0
    %1362 = vmatprep.subr.bf16.mxu0 0
    %1363 = vmatpush2.bf16.msra.mxu0 0
    %1364 = vmatprep.subr.bf16.mxu0 0
    %1365 = vmatpush2.bf16.msra.mxu0 0
    %1366 = vmatprep.subr.bf16.mxu0 0
    %1367 = vmatpush2.bf16.msra.mxu0 0
    %1368 = vmatprep.subr.bf16.mxu0 0
    %1369 = vmatpush2.bf16.msra.mxu0 0
    %1370 = vmatprep.mubr.bf16.mxu0 0
    %1371 = vmatmul.mubr.bf16.gmra.mxu0 %v1337
    %v1372 = vpop.f32.mrf.mxu0
    %v1373 = vadd.f32 0.0, %v1372
    %v1374 = vpop.f32.mrf.mxu0
    %v1375 = vadd.f32 0.0, %v1374
    %v1376 = vpop.f32.mrf.mxu0
    %v1377 = vpop.f32.mrf.mxu0
    %1378 = vdwg.mxu0
    %1379 = vmatprep.subr.bf16.mxu0 %v480
    %1380 = vmatpush1.bf16.msra.mxu0 %v479
    %1381 = vmatprep.subr.bf16.mxu0 %v476
    %1382 = vmatpush1.bf16.msra.mxu0 %v475
    %1383 = vmatprep.subr.bf16.mxu0 %v472
    %1384 = vmatpush1.bf16.msra.mxu0 %v471
    %1385 = vmatprep.subr.bf16.mxu0 %v468
    %1386 = vmatpush1.bf16.msra.mxu0 %v467
    %1387 = vmatprep.subr.bf16.mxu0 %v464
    %1388 = vmatpush1.bf16.msra.mxu0 %v463
    %1389 = vmatprep.subr.bf16.mxu0 %v460
    %1390 = vmatpush1.bf16.msra.mxu0 %v459
    %1391 = vmatprep.subr.bf16.mxu0 %v456
    %1392 = vmatpush1.bf16.msra.mxu0 %v455
    %1393 = vmatprep.subr.bf16.mxu0 %v452
    %1394 = vmatpush1.bf16.msra.mxu0 %v451
    %1395 = vmatprep.subr.bf16.mxu0 0
    %1396 = vmatpush2.bf16.msra.mxu0 0
    %1397 = vmatprep.subr.bf16.mxu0 0
    %1398 = vmatpush2.bf16.msra.mxu0 0
    %1399 = vmatprep.subr.bf16.mxu0 0
    %1400 = vmatpush2.bf16.msra.mxu0 0
    %1401 = vmatprep.subr.bf16.mxu0 0
    %1402 = vmatpush2.bf16.msra.mxu0 0
    %1403 = vmatprep.subr.bf16.mxu0 0
    %1404 = vmatpush2.bf16.msra.mxu0 0
    %1405 = vmatprep.subr.bf16.mxu0 0
    %1406 = vmatpush2.bf16.msra.mxu0 0
    %1407 = vmatprep.subr.bf16.mxu0 0
    %1408 = vmatpush2.bf16.msra.mxu0 0
    %1409 = vmatprep.subr.bf16.mxu0 0
    %1410 = vmatpush2.bf16.msra.mxu0 0
    %1411 = vmatprep.mubr.bf16.mxu0 0
    %1412 = vmatmul.mubr.bf16.gmra.mxu0 %v1337
    %v1413 = vpop.f32.mrf.mxu0
    %v1414 = vadd.f32 0.0, %v1413
    %v1415 = vpop.f32.mrf.mxu0
    %v1416 = vadd.f32 0.0, %v1415
    %v1417 = vpop.f32.mrf.mxu0
    %v1418 = vpop.f32.mrf.mxu0
    %1419 = vdwg.mxu0
    %v1420 = vadd.f32 %v1333, %v1373
    %v1421 = vadd.f32 %v1334, %v1375
    %v1422 = vadd.f32 %v1335, %v1414
    %v1423 = vadd.f32 %v1336, %v1416
    %v1424 = vsub.f32 0.0, %v1420
    %v1425 = vmul.f32 %v1424, 1.442695
    %v1426 = vpow.pop %v1425
    %v1427 = vadd.f32 %v1426, 1.0
    %v1428 = vrcp.pop %v1427
    %v1429 = vmul.f32 1.0, %v1428
    %v1430 = vsub.f32 0.0, %v1421
    %v1431 = vmul.f32 %v1430, 1.442695
    %v1432 = vpow.pop %v1431
    %v1433 = vadd.f32 %v1432, 1.0
    %v1434 = vrcp.pop %v1433
    %v1435 = vmul.f32 1.0, %v1434
    %v1436 = vtanh.pop %v1422
    %v1437 = vsub.f32 0.0, %v1423
    %v1438 = vmul.f32 %v1437, 1.442695
    %v1439 = vpow.pop %v1438
    %v1440 = vadd.f32 %v1439, 1.0
    %v1441 = vrcp.pop %v1440
    %v1442 = vmul.f32 1.0, %v1441
    %v1443 = vmul.f32 %v1435, %v1327
    %v1444 = vmul.f32 %v1429, %v1436
    %v1445 = vadd.f32 %v1443, %v1444
    %v1446 = vtanh.pop %v1445
    %v1447 = vmul.f32 %v1442, %v1446
    %s1448 = scalar_lea.vmem [#allocation11], 56
    %1449 = vst [vmem:[%s1448] sm:$0xff] %v1447
    %1450 = vst [vmem:[#allocation3] sm:$0xff] %v1447
    %1451 = vst [vmem:[#allocation4] sm:$0xff] %v1445
    // Predicated region
    $region34: #{tpu_custom_call.1} parent=1 // pred_check
      _
    $region35: #{tpu_custom_call.1} parent=1 // pred_check_branch
      %1453 = sbr.rel (0) target = $region37
    $region36: #{tpu_custom_call.1} parent=1 // pred_region
      %s1455 = ssub.s32 1024, 1024
      %1456 = vsyncadd [#allocation7], %s1455
      %s1457 = sshll.u32 [#allocation11], 4
      %s1458 = int_to_ptr.vmem [resolvable:$true] %s1457
      %1463 = dma.vmem_to_hbm [thread:$0]  %s1458, 1024, %s4, [#allocation7], 128, 128, 8
    $region37: #{tpu_custom_call.1} parent=1 // pred_fallthru
      _
    // Predicated region
    $region38: #{tpu_custom_call.1} parent=1 // pred_check
      _
    $region39: #{tpu_custom_call.1} parent=1 // pred_check_branch
      %1465 = sbr.rel (0) target = $region41
    $region40: #{tpu_custom_call.1} parent=1 // pred_region
      %1466 = dma.done [#allocation7], 1024
    $region41: #{tpu_custom_call.1} parent=1 // pred_fallthru
      _
    %1467 = vsyncpa [#allocation6], 1
    %1468 = vsyncpa [#allocation9], 1
    %1469 = vsyncpa [#allocation7], 1

// kernel: tpu_custom_call.1
$region0: #{tpu_custom_call.1}
  #allocation0 [shape = 'u32[]', space=smem, size = 0x4, offset = 0x4, fixed_abs, tag = 'smem constant byte address 0x4 - core index']
  #allocation1 [shape = 'u32[144,128]{1,0:T(1,128)}', space=vmem, size = 0x12000, scoped, tag = 'internal scratch']
  #allocation2 [shape = 'f32[8,8,512]{2,1,0:T(8,128)}', space=vmem, size = 0x20000, scoped, tag = 'scratch operand']
  #allocation3 [shape = 'f32[8,128]{1,0:T(8,128)}', space=vmem, size = 0x1000, scoped, tag = 'scratch operand']
  #allocation4 [shape = 'f32[8,128]{1,0:T(8,128)}', space=vmem, size = 0x1000, scoped, tag = 'scratch operand']
  %s0 = inlined_call_operand.hbm [shape: f32[8,8,8], index: 0, kind: input, shape index: {}]
  %s1 = inlined_call_operand.hbm [shape: bf16[8,512], index: 1, kind: input, shape index: {}]
  %s2 = inlined_call_operand.hbm [shape: bf16[128,512], index: 2, kind: input, shape index: {}]
  %s3 = inlined_call_operand.vmem [shape: f32[1,512], index: 3, kind: input, shape index: {}]
  %s4 = inlined_call_operand.hbm [shape: f32[8,8,128], index: 4, kind: output, shape index: {}]
  %s5 = sld [smem:[#allocation0]]
  $region42: #{tpu_custom_call.1} parent=0
    _
  %s7 = ssub.s32 1, %s5
  %s8 = scalar_select 0, %s7, %s5
  $region1: #{tpu_custom_call.1} parent=0
    #allocation5 [shape = 'u8[32768]{0}', space=vmem, size = 0x8000, scoped, tag = 'input window, operand 0, single buffered']
    #allocation6 [shape = 's32[1]{0}', space=sflag, size = 0x4, scoped, tag = 'scoped memory for tpu_custom_call.1']
    #allocation7 [shape = 's32[1]{0}', space=sflag, size = 0x4, scoped, tag = 'scoped memory for tpu_custom_call.1']
    #allocation8 [shape = 'u8[8192]{0}', space=vmem, size = 0x2000, scoped, tag = 'input window, operand 1, single buffered']
    #allocation9 [shape = 's32[1]{0}', space=sflag, size = 0x4, scoped, tag = 'scoped memory for tpu_custom_call.1']
    #allocation10 [shape = 'u8[131072]{0}', space=vmem, size = 0x20000, scoped, tag = 'input window, operand 2, single buffered']
    #allocation11 [shape = 'u8[32768]{0}', space=vmem, size = 0x8000, scoped, tag = 'output window, operand 0, single buffered']
    %9 = vsyncpa [#allocation6], 0
    %10 = vsyncpa [#allocation9], 0
    %11 = vsyncpa [#allocation7], 0
    // Predicated region
    $region2: #{tpu_custom_call.1} parent=1 // pred_check
      _
    $region3: #{tpu_custom_call.1} parent=1 // pred_check_branch
      %13 = sbr.rel (0) target = $region5
    $region4: #{tpu_custom_call.1} parent=1 // pred_region
      %s15 = ssub.s32 1024, 1024
      %16 = vsyncadd [#allocation6], %s15
      %s17 = sshll.u32 [#allocation5], 4
      %s18 = int_to_ptr.vmem [resolvable:$true] %s17
      %23 = dma.hbm_to_vmem [thread:$0]  %s0, 1024, %s18, [#allocation6], 128, 128, 8
    $region5: #{tpu_custom_call.1} parent=1 // pred_fallthru
      _
    // Predicated region
    $region6: #{tpu_custom_call.1} parent=1 // pred_check
      _
    $region7: #{tpu_custom_call.1} parent=1 // pred_check_branch
      %25 = sbr.rel (0) target = $region9
    $region8: #{tpu_custom_call.1} parent=1 // pred_region
      %s27 = ssub.s32 256, 256
      %28 = vsyncadd [#allocation9], %s27
      %s30 = sshll.u32 [#allocation8], 4
      %s31 = int_to_ptr.vmem [resolvable:$true] %s30
      %33 = dma.hbm_to_vmem [thread:$0]  %s1, 256, %s31, [#allocation9]
    $region9: #{tpu_custom_call.1} parent=1 // pred_fallthru
      _
    // Predicated region
    $region10: #{tpu_custom_call.1} parent=1 // pred_check
      _
    $region11: #{tpu_custom_call.1} parent=1 // pred_check_branch
      %35 = sbr.rel (0) target = $region13
    $region12: #{tpu_custom_call.1} parent=1 // pred_region
      %s37 = ssub.s32 4096, 4096
      %38 = vsyncadd [#allocation9], %s37
      %s39 = sshll.u32 [#allocation10], 4
      %s40 = int_to_ptr.vmem [resolvable:$true] %s39
      %45 = dma.hbm_to_vmem [thread:$0]  %s2, 4096, %s40, [#allocation9], 256, 256, 16
    $region13: #{tpu_custom_call.1} parent=1 // pred_fallthru
      _
    // Predicated region
    $region14: #{tpu_custom_call.1} parent=1 // pred_check
      _
    $region15: #{tpu_custom_call.1} parent=1 // pred_check_branch
      %47 = sbr.rel (0) target = $region17
    $region16: #{tpu_custom_call.1} parent=1 // pred_region
      _
    $region17: #{tpu_custom_call.1} parent=1 // pred_fallthru
      _
    // Predicated region
    $region18: #{tpu_custom_call.1} parent=1 // pred_check
      _
    $region19: #{tpu_custom_call.1} parent=1 // pred_check_branch
      %49 = sbr.rel (0) target = $region21
    $region20: #{tpu_custom_call.1} parent=1 // pred_region
      %50 = dma.done [#allocation6], 1024
    $region21: #{tpu_custom_call.1} parent=1 // pred_fallthru
      _
    // Predicated region
    $region22: #{tpu_custom_call.1} parent=1 // pred_check
      _
    $region23: #{tpu_custom_call.1} parent=1 // pred_check_branch
      %52 = sbr.rel (0) target = $region25
    $region24: #{tpu_custom_call.1} parent=1 // pred_region
      %53 = dma.done [#allocation9], 256
    $region25: #{tpu_custom_call.1} parent=1 // pred_fallthru
      _
    // Predicated region
    $region26: #{tpu_custom_call.1} parent=1 // pred_check
      _
    $region27: #{tpu_custom_call.1} parent=1 // pred_check_branch
      %55 = sbr.rel (0) target = $region29
    $region28: #{tpu_custom_call.1} parent=1 // pred_region
      %56 = dma.done [#allocation9], 4096
    $region29: #{tpu_custom_call.1} parent=1 // pred_fallthru
      _
    %p58 = scmp.eq.s32.totalorder 0, 0
    // Predicated region
    $region30: #{tpu_custom_call.1} parent=1 // pred_check
      %p59 = pneg %p58
    $region31: #{tpu_custom_call.1} parent=1 // pred_check_branch
      %61 = sbr.rel (%p59) target = $region33
    $region32: #{tpu_custom_call.1} parent=1 // pred_region
      %62 = vst [vmem:[#allocation3] sm:$0xff] 0.0
      %63 = vst [vmem:[#allocation4] sm:$0xff] 0.0
    $region33: #{tpu_custom_call.1} parent=1 // pred_fallthru
      _
    %v64 = vld [vmem:[#allocation5] sm:$0xff]
    %v65 = vld [vmem:[#allocation5 + $0x8] sm:$0xff]
    %v66 = vld [vmem:[#allocation5 + $0x10] sm:$0xff]
    %v67 = vld [vmem:[#allocation5 + $0x18] sm:$0xff]
    %v68 = vld [vmem:[#allocation5 + $0x20] sm:$0xff]
    %v69 = vld [vmem:[#allocation5 + $0x28] sm:$0xff]
    %v70 = vld [vmem:[#allocation5 + $0x30] sm:$0xff]
    %v71 = vld [vmem:[#allocation5 + $0x38] sm:$0xff]
    %v72 = vpack.c.bf16 %v65, %v64
    %v73 = vpack.c.bf16 %v67, %v66
    %v74 = vpack.c.bf16 %v69, %v68
    %v75 = vpack.c.bf16 %v71, %v70
    %v76 = vld [vmem:[#allocation8] sm:$0xff]
    %v77 = vld [vmem:[#allocation8 + $0x8] sm:$0xff]
    %v78 = vld [vmem:[%s3] sm:$0xf]
    %v80 = vlaneseq
    %v81 = vshrl.u32 %v80, 7
    %v82 = vsub.s32 0, %v81
    %v83 = vrot.slane %v78, %v82
    %v84 = vlaneseq
    %v85 = vshrl.u32 %v84, 7
    %v86 = vsub.s32 1, %v85
    %v87 = vrot.slane %v78, %v86
    %v88 = vlaneseq
    %v89 = vshrl.u32 %v88, 7
    %v90 = vsub.s32 2, %v89
    %v91 = vrot.slane %v78, %v90
    %v92 = vlaneseq
    %v93 = vshrl.u32 %v92, 7
    %v94 = vsub.s32 3, %v93
    %v95 = vrot.slane %v78, %v94
    %v102 = vunpack.c.l.b16 %v76
    %v103 = vunpack.c.h.b16 %v76
    %v104 = vunpack.c.l.b16 %v77
    %v105 = vunpack.c.h.b16 %v77
    %v106 = vpack.c.b16 %v102, %v102
    %v107 = vpack.c.b16 %v103, %v103
    %v108 = vpack.c.b16 %v104, %v104
    %v109 = vpack.c.b16 %v105, %v105
    %vm110 = vcmask 64512
    %v112 = vsel %vm110, %v72, 0
    %v115 = vsel %vm110, %v73, 0
    %v118 = vsel %vm110, %v74, 0
    %v121 = vsel %vm110, %v75, 0
    %vm123 = vcmask 1043456
    %v125 = vsel %vm123, %v106, 0
    %v128 = vsel %vm123, %v107, 0
    %v131 = vsel %vm123, %v108, 0
    %v134 = vsel %vm123, %v109, 0
    %136 = vmatprep.subr.bf16.mxu0 0
    %137 = vmatpush1.bf16.msra.mxu0 0
    %138 = vmatprep.subr.bf16.mxu0 0
    %139 = vmatpush1.bf16.msra.mxu0 0
    %140 = vmatprep.subr.bf16.mxu0 0
    %141 = vmatpush1.bf16.msra.mxu0 0
    %142 = vmatprep.subr.bf16.mxu0 0
    %143 = vmatpush1.bf16.msra.mxu0 0
    %144 = vmatprep.subr.bf16.mxu0 0
    %145 = vmatpush1.bf16.msra.mxu0 0
    %146 = vmatprep.subr.bf16.mxu0 0
    %147 = vmatpush1.bf16.msra.mxu0 0
    %148 = vmatprep.subr.bf16.mxu0 0
    %149 = vmatpush1.bf16.msra.mxu0 0
    %150 = vmatprep.subr.bf16.mxu0 %v128
    %151 = vmatpush1.bf16.msra.mxu0 %v125
    %152 = vmatprep.subr.bf16.mxu0 0
    %153 = vmatpush2.bf16.msra.mxu0 0
    %154 = vmatprep.subr.bf16.mxu0 0
    %155 = vmatpush2.bf16.msra.mxu0 0
    %156 = vmatprep.subr.bf16.mxu0 0
    %157 = vmatpush2.bf16.msra.mxu0 0
    %158 = vmatprep.subr.bf16.mxu0 0
    %159 = vmatpush2.bf16.msra.mxu0 0
    %160 = vmatprep.subr.bf16.mxu0 0
    %161 = vmatpush2.bf16.msra.mxu0 0
    %162 = vmatprep.subr.bf16.mxu0 0
    %163 = vmatpush2.bf16.msra.mxu0 0
    %164 = vmatprep.subr.bf16.mxu0 0
    %165 = vmatpush2.bf16.msra.mxu0 0
    %166 = vmatprep.subr.bf16.mxu0 0
    %167 = vmatpush2.bf16.msra.mxu0 0
    %168 = vmatprep.mubr.bf16.mxu0 0
    %169 = vmatmul.mubr.bf16.gmra.mxu0 %v112
    %v170 = vpop.f32.mrf.mxu0
    %v171 = vadd.f32 %v83, %v170
    %v172 = vpop.f32.mrf.mxu0
    %v173 = vadd.f32 %v87, %v172
    %v174 = vpop.f32.mrf.mxu0
    %v175 = vadd.f32 %v83, %v174
    %v176 = vpop.f32.mrf.mxu0
    %v177 = vadd.f32 %v87, %v176
    %178 = vmatprep.mubr.bf16.mxu0 0
    %179 = vmatmul.mubr.bf16.gmra.mxu0 %v115
    %v180 = vpop.f32.mrf.mxu0
    %v181 = vadd.f32 %v83, %v180
    %v182 = vpop.f32.mrf.mxu0
    %v183 = vadd.f32 %v87, %v182
    %v184 = vpop.f32.mrf.mxu0
    %v185 = vadd.f32 %v83, %v184
    %v186 = vpop.f32.mrf.mxu0
    %v187 = vadd.f32 %v87, %v186
    %188 = vmatprep.mubr.bf16.mxu0 0
    %189 = vmatmul.mubr.bf16.gmra.mxu0 %v118
    %v190 = vpop.f32.mrf.mxu0
    %v191 = vadd.f32 %v83, %v190
    %v192 = vpop.f32.mrf.mxu0
    %v193 = vadd.f32 %v87, %v192
    %v194 = vpop.f32.mrf.mxu0
    %v195 = vadd.f32 %v83, %v194
    %v196 = vpop.f32.mrf.mxu0
    %v197 = vadd.f32 %v87, %v196
    %198 = vmatprep.mubr.bf16.mxu0 0
    %199 = vmatmul.mubr.bf16.gmra.mxu0 %v121
    %v200 = vpop.f32.mrf.mxu0
    %v201 = vadd.f32 %v83, %v200
    %v202 = vpop.f32.mrf.mxu0
    %v203 = vadd.f32 %v87, %v202
    %v204 = vpop.f32.mrf.mxu0
    %v205 = vadd.f32 %v83, %v204
    %v206 = vpop.f32.mrf.mxu0
    %v207 = vadd.f32 %v87, %v206
    %208 = vdwg.mxu0
    %209 = vmatprep.subr.bf16.mxu0 0
    %210 = vmatpush1.bf16.msra.mxu0 0
    %211 = vmatprep.subr.bf16.mxu0 0
    %212 = vmatpush1.bf16.msra.mxu0 0
    %213 = vmatprep.subr.bf16.mxu0 0
    %214 = vmatpush1.bf16.msra.mxu0 0
    %215 = vmatprep.subr.bf16.mxu0 0
    %216 = vmatpush1.bf16.msra.mxu0 0
    %217 = vmatprep.subr.bf16.mxu0 0
    %218 = vmatpush1.bf16.msra.mxu0 0
    %219 = vmatprep.subr.bf16.mxu0 0
    %220 = vmatpush1.bf16.msra.mxu0 0
    %221 = vmatprep.subr.bf16.mxu0 0
    %222 = vmatpush1.bf16.msra.mxu0 0
    %223 = vmatprep.subr.bf16.mxu0 %v134
    %224 = vmatpush1.bf16.msra.mxu0 %v131
    %225 = vmatprep.subr.bf16.mxu0 0
    %226 = vmatpush2.bf16.msra.mxu0 0
    %227 = vmatprep.subr.bf16.mxu0 0
    %228 = vmatpush2.bf16.msra.mxu0 0
    %229 = vmatprep.subr.bf16.mxu0 0
    %230 = vmatpush2.bf16.msra.mxu0 0
    %231 = vmatprep.subr.bf16.mxu0 0
    %232 = vmatpush2.bf16.msra.mxu0 0
    %233 = vmatprep.subr.bf16.mxu0 0
    %234 = vmatpush2.bf16.msra.mxu0 0
    %235 = vmatprep.subr.bf16.mxu0 0
    %236 = vmatpush2.bf16.msra.mxu0 0
    %237 = vmatprep.subr.bf16.mxu0 0
    %238 = vmatpush2.bf16.msra.mxu0 0
    %239 = vmatprep.subr.bf16.mxu0 0
    %240 = vmatpush2.bf16.msra.mxu0 0
    %241 = vmatprep.mubr.bf16.mxu0 0
    %242 = vmatmul.mubr.bf16.gmra.mxu0 %v112
    %v243 = vpop.f32.mrf.mxu0
    %v244 = vadd.f32 %v91, %v243
    %v245 = vpop.f32.mrf.mxu0
    %v246 = vadd.f32 %v95, %v245
    %v247 = vpop.f32.mrf.mxu0
    %v248 = vadd.f32 %v91, %v247
    %v249 = vpop.f32.mrf.mxu0
    %v250 = vadd.f32 %v95, %v249
    %251 = vmatprep.mubr.bf16.mxu0 0
    %252 = vmatmul.mubr.bf16.gmra.mxu0 %v115
    %v253 = vpop.f32.mrf.mxu0
    %v254 = vadd.f32 %v91, %v253
    %v255 = vpop.f32.mrf.mxu0
    %v256 = vadd.f32 %v95, %v255
    %v257 = vpop.f32.mrf.mxu0
    %v258 = vadd.f32 %v91, %v257
    %v259 = vpop.f32.mrf.mxu0
    %v260 = vadd.f32 %v95, %v259
    %261 = vmatprep.mubr.bf16.mxu0 0
    %262 = vmatmul.mubr.bf16.gmra.mxu0 %v118
    %v263 = vpop.f32.mrf.mxu0
    %v264 = vadd.f32 %v91, %v263
    %v265 = vpop.f32.mrf.mxu0
    %v266 = vadd.f32 %v95, %v265
    %v267 = vpop.f32.mrf.mxu0
    %v268 = vadd.f32 %v91, %v267
    %v269 = vpop.f32.mrf.mxu0
    %v270 = vadd.f32 %v95, %v269
    %271 = vmatprep.mubr.bf16.mxu0 0
    %272 = vmatmul.mubr.bf16.gmra.mxu0 %v121
    %v273 = vpop.f32.mrf.mxu0
    %v274 = vadd.f32 %v91, %v273
    %v275 = vpop.f32.mrf.mxu0
    %v276 = vadd.f32 %v95, %v275
    %v277 = vpop.f32.mrf.mxu0
    %v278 = vadd.f32 %v91, %v277
    %v279 = vpop.f32.mrf.mxu0
    %v280 = vadd.f32 %v95, %v279
    %281 = vdwg.mxu0
    %282 = vst [vmem:[#allocation2] sm:$0xff] %v171
    %283 = vst [vmem:[#allocation2 + $0x8] sm:$0xff] %v173
    %284 = vst [vmem:[#allocation2 + $0x10] sm:$0xff] %v244
    %285 = vst [vmem:[#allocation2 + $0x18] sm:$0xff] %v246
    %286 = vst [vmem:[#allocation2 + $0x20] sm:$0xff] %v175
    %287 = vst [vmem:[#allocation2 + $0x28] sm:$0xff] %v177
    %288 = vst [vmem:[#allocation2 + $0x30] sm:$0xff] %v248
    %289 = vst [vmem:[#allocation2 + $0x38] sm:$0xff] %v250
    %290 = vst [vmem:[#allocation2 + $0x40] sm:$0xff] %v181
    %291 = vst [vmem:[#allocation2 + $0x48] sm:$0xff] %v183
    %292 = vst [vmem:[#allocation2 + $0x50] sm:$0xff] %v254
    %293 = vst [vmem:[#allocation2 + $0x58] sm:$0xff] %v256
    %294 = vst [vmem:[#allocation2 + $0x60] sm:$0xff] %v185
    %295 = vst [vmem:[#allocation2 + $0x68] sm:$0xff] %v187
    %296 = vst [vmem:[#allocation2 + $0x70] sm:$0xff] %v258
    %297 = vst [vmem:[#allocation2 + $0x78] sm:$0xff] %v260
    %298 = vst [vmem:[#allocation2 + $0x80] sm:$0xff] %v191
    %299 = vst [vmem:[#allocation2 + $0x88] sm:$0xff] %v193
    %300 = vst [vmem:[#allocation2 + $0x90] sm:$0xff] %v264
    %301 = vst [vmem:[#allocation2 + $0x98] sm:$0xff] %v266
    %302 = vst [vmem:[#allocation2 + $0xa0] sm:$0xff] %v195
    %303 = vst [vmem:[#allocation2 + $0xa8] sm:$0xff] %v197
    %304 = vst [vmem:[#allocation2 + $0xb0] sm:$0xff] %v268
    %305 = vst [vmem:[#allocation2 + $0xb8] sm:$0xff] %v270
    %306 = vst [vmem:[#allocation2 + $0xc0] sm:$0xff] %v201
    %307 = vst [vmem:[#allocation2 + $0xc8] sm:$0xff] %v203
    %308 = vst [vmem:[#allocation2 + $0xd0] sm:$0xff] %v274
    %309 = vst [vmem:[#allocation2 + $0xd8] sm:$0xff] %v276
    %310 = vst [vmem:[#allocation2 + $0xe0] sm:$0xff] %v205
    %311 = vst [vmem:[#allocation2 + $0xe8] sm:$0xff] %v207
    %312 = vst [vmem:[#allocation2 + $0xf0] sm:$0xff] %v278
    %313 = vst [vmem:[#allocation2 + $0xf8] sm:$0xff] %v280
    %v314 = vld [vmem:[#allocation10] sm:$0xff]
    %v315 = vld [vmem:[#allocation10 + $0x8] sm:$0xff]
    %v316 = vld [vmem:[#allocation10 + $0x10] sm:$0xff]
    %v317 = vld [vmem:[#allocation10 + $0x18] sm:$0xff]
    %v318 = vld [vmem:[#allocation10 + $0x20] sm:$0xff]
    %v319 = vld [vmem:[#allocation10 + $0x28] sm:$0xff]
    %v320 = vld [vmem:[#allocation10 + $0x30] sm:$0xff]
    %v321 = vld [vmem:[#allocation10 + $0x38] sm:$0xff]
    %v322 = vld [vmem:[#allocation10 + $0x40] sm:$0xff]
    %v323 = vld [vmem:[#allocation10 + $0x48] sm:$0xff]
    %v324 = vld [vmem:[#allocation10 + $0x50] sm:$0xff]
    %v325 = vld [vmem:[#allocation10 + $0x58] sm:$0xff]
    %v326 = vld [vmem:[#allocation10 + $0x60] sm:$0xff]
    %v327 = vld [vmem:[#allocation10 + $0x68] sm:$0xff]
    %v328 = vld [vmem:[#allocation10 + $0x70] sm:$0xff]
    %v329 = vld [vmem:[#allocation10 + $0x78] sm:$0xff]
    %v330 = vld [vmem:[#allocation10 + $0x80] sm:$0xff]
    %v331 = vld [vmem:[#allocation10 + $0x88] sm:$0xff]
    %v332 = vld [vmem:[#allocation10 + $0x90] sm:$0xff]
    %v333 = vld [vmem:[#allocation10 + $0x98] sm:$0xff]
    %v334 = vld [vmem:[#allocation10 + $0xa0] sm:$0xff]
    %v335 = vld [vmem:[#allocation10 + $0xa8] sm:$0xff]
    %v336 = vld [vmem:[#allocation10 + $0xb0] sm:$0xff]
    %v337 = vld [vmem:[#allocation10 + $0xb8] sm:$0xff]
    %v338 = vld [vmem:[#allocation10 + $0xc0] sm:$0xff]
    %v339 = vld [vmem:[#allocation10 + $0xc8] sm:$0xff]
    %v340 = vld [vmem:[#allocation10 + $0xd0] sm:$0xff]
    %v341 = vld [vmem:[#allocation10 + $0xd8] sm:$0xff]
    %v342 = vld [vmem:[#allocation10 + $0xe0] sm:$0xff]
    %v343 = vld [vmem:[#allocation10 + $0xe8] sm:$0xff]
    %v344 = vld [vmem:[#allocation10 + $0xf0] sm:$0xff]
    %v345 = vld [vmem:[#allocation10 + $0xf8] sm:$0xff]
    %v346 = vld [vmem:[#allocation3] sm:$0xff]
    %v347 = vld [vmem:[#allocation4] sm:$0xff]
    %v348 = vld [vmem:[#allocation2] sm:$0xff]
    %v349 = vld [vmem:[#allocation2 + $0x8] sm:$0xff]
    %v350 = vld [vmem:[#allocation2 + $0x10] sm:$0xff]
    %v351 = vld [vmem:[#allocation2 + $0x18] sm:$0xff]
    %v352 = vpack.c.bf16 %v346, %v346
    %v385 = vunpack.c.l.b16 %v314
    %v386 = vunpack.c.h.b16 %v314
    %v387 = vunpack.c.l.b16 %v315
    %v388 = vunpack.c.h.b16 %v315
    %v389 = vunpack.c.l.b16 %v316
    %v390 = vunpack.c.h.b16 %v316
    %v391 = vunpack.c.l.b16 %v317
    %v392 = vunpack.c.h.b16 %v317
    %v393 = vunpack.c.l.b16 %v318
    %v394 = vunpack.c.h.b16 %v318
    %v395 = vunpack.c.l.b16 %v319
    %v396 = vunpack.c.h.b16 %v319
    %v397 = vunpack.c.l.b16 %v320
    %v398 = vunpack.c.h.b16 %v320
    %v399 = vunpack.c.l.b16 %v321
    %v400 = vunpack.c.h.b16 %v321
    %v401 = vunpack.c.l.b16 %v322
    %v402 = vunpack.c.h.b16 %v322
    %v403 = vunpack.c.l.b16 %v323
    %v404 = vunpack.c.h.b16 %v323
    %v405 = vunpack.c.l.b16 %v324
    %v406 = vunpack.c.h.b16 %v324
    %v407 = vunpack.c.l.b16 %v325
    %v408 = vunpack.c.h.b16 %v325
    %v409 = vunpack.c.l.b16 %v326
    %v410 = vunpack.c.h.b16 %v326
    %v411 = vunpack.c.l.b16 %v327
    %v412 = vunpack.c.h.b16 %v327
    %v413 = vunpack.c.l.b16 %v328
    %v414 = vunpack.c.h.b16 %v328
    %v415 = vunpack.c.l.b16 %v329
    %v416 = vunpack.c.h.b16 %v329
    %v417 = vunpack.c.l.b16 %v330
    %v418 = vunpack.c.h.b16 %v330
    %v419 = vunpack.c.l.b16 %v331
    %v420 = vunpack.c.h.b16 %v331
    %v421 = vunpack.c.l.b16 %v332
    %v422 = vunpack.c.h.b16 %v332
    %v423 = vunpack.c.l.b16 %v333
    %v424 = vunpack.c.h.b16 %v333
    %v425 = vunpack.c.l.b16 %v334
    %v426 = vunpack.c.h.b16 %v334
    %v427 = vunpack.c.l.b16 %v335
    %v428 = vunpack.c.h.b16 %v335
    %v429 = vunpack.c.l.b16 %v336
    %v430 = vunpack.c.h.b16 %v336
    %v431 = vunpack.c.l.b16 %v337
    %v432 = vunpack.c.h.b16 %v337
    %v433 = vunpack.c.l.b16 %v338
    %v434 = vunpack.c.h.b16 %v338
    %v435 = vunpack.c.l.b16 %v339
    %v436 = vunpack.c.h.b16 %v339
    %v437 = vunpack.c.l.b16 %v340
    %v438 = vunpack.c.h.b16 %v340
    %v439 = vunpack.c.l.b16 %v341
    %v440 = vunpack.c.h.b16 %v341
    %v441 = vunpack.c.l.b16 %v342
    %v442 = vunpack.c.h.b16 %v342
    %v443 = vunpack.c.l.b16 %v343
    %v444 = vunpack.c.h.b16 %v343
    %v445 = vunpack.c.l.b16 %v344
    %v446 = vunpack.c.h.b16 %v344
    %v447 = vunpack.c.l.b16 %v345
    %v448 = vunpack.c.h.b16 %v345
    %v449 = vpack.c.b16 %v389, %v385
    %v450 = vpack.c.b16 %v390, %v386
    %v451 = vpack.c.b16 %v391, %v387
    %v452 = vpack.c.b16 %v392, %v388
    %v453 = vpack.c.b16 %v397, %v393
    %v454 = vpack.c.b16 %v398, %v394
    %v455 = vpack.c.b16 %v399, %v395
    %v456 = vpack.c.b16 %v400, %v396
    %v457 = vpack.c.b16 %v405, %v401
    %v458 = vpack.c.b16 %v406, %v402
    %v459 = vpack.c.b16 %v407, %v403
    %v460 = vpack.c.b16 %v408, %v404
    %v461 = vpack.c.b16 %v413, %v409
    %v462 = vpack.c.b16 %v414, %v410
    %v463 = vpack.c.b16 %v415, %v411
    %v464 = vpack.c.b16 %v416, %v412
    %v465 = vpack.c.b16 %v421, %v417
    %v466 = vpack.c.b16 %v422, %v418
    %v467 = vpack.c.b16 %v423, %v419
    %v468 = vpack.c.b16 %v424, %v420
    %v469 = vpack.c.b16 %v429, %v425
    %v470 = vpack.c.b16 %v430, %v426
    %v471 = vpack.c.b16 %v431, %v427
    %v472 = vpack.c.b16 %v432, %v428
    %v473 = vpack.c.b16 %v437, %v433
    %v474 = vpack.c.b16 %v438, %v434
    %v475 = vpack.c.b16 %v439, %v435
    %v476 = vpack.c.b16 %v440, %v436
    %v477 = vpack.c.b16 %v445, %v441
    %v478 = vpack.c.b16 %v446, %v442
    %v479 = vpack.c.b16 %v447, %v443
    %v480 = vpack.c.b16 %v448, %v444
    %513 = vmatprep.subr.bf16.mxu0 %v478
    %514 = vmatpush1.bf16.msra.mxu0 %v477
    %515 = vmatprep.subr.bf16.mxu0 %v474
    %516 = vmatpush1.bf16.msra.mxu0 %v473
    %517 = vmatprep.subr.bf16.mxu0 %v470
    %518 = vmatpush1.bf16.msra.mxu0 %v469
    %519 = vmatprep.subr.bf16.mxu0 %v466
    %520 = vmatpush1.bf16.msra.mxu0 %v465
    %521 = vmatprep.subr.bf16.mxu0 %v462
    %522 = vmatpush1.bf16.msra.mxu0 %v461
    %523 = vmatprep.subr.bf16.mxu0 %v458
    %524 = vmatpush1.bf16.msra.mxu0 %v457
    %525 = vmatprep.subr.bf16.mxu0 %v454
    %526 = vmatpush1.bf16.msra.mxu0 %v453
    %527 = vmatprep.subr.bf16.mxu0 %v450
    %528 = vmatpush1.bf16.msra.mxu0 %v449
    %529 = vmatprep.subr.bf16.mxu0 0
    %530 = vmatpush2.bf16.msra.mxu0 0
    %531 = vmatprep.subr.bf16.mxu0 0
    %532 = vmatpush2.bf16.msra.mxu0 0
    %533 = vmatprep.subr.bf16.mxu0 0
    %534 = vmatpush2.bf16.msra.mxu0 0
    %535 = vmatprep.subr.bf16.mxu0 0
    %536 = vmatpush2.bf16.msra.mxu0 0
    %537 = vmatprep.subr.bf16.mxu0 0
    %538 = vmatpush2.bf16.msra.mxu0 0
    %539 = vmatprep.subr.bf16.mxu0 0
    %540 = vmatpush2.bf16.msra.mxu0 0
    %541 = vmatprep.subr.bf16.mxu0 0
    %542 = vmatpush2.bf16.msra.mxu0 0
    %543 = vmatprep.subr.bf16.mxu0 0
    %544 = vmatpush2.bf16.msra.mxu0 0
    %545 = vmatprep.mubr.bf16.mxu0 0
    %546 = vmatmul.mubr.bf16.gmra.mxu0 %v352
    %v547 = vpop.f32.mrf.mxu0
    %v548 = vadd.f32 0.0, %v547
    %v549 = vpop.f32.mrf.mxu0
    %v550 = vadd.f32 0.0, %v549
    %v551 = vpop.f32.mrf.mxu0
    %v552 = vpop.f32.mrf.mxu0
    %553 = vdwg.mxu0
    %554 = vmatprep.subr.bf16.mxu0 %v480
    %555 = vmatpush1.bf16.msra.mxu0 %v479
    %556 = vmatprep.subr.bf16.mxu0 %v476
    %557 = vmatpush1.bf16.msra.mxu0 %v475
    %558 = vmatprep.subr.bf16.mxu0 %v472
    %559 = vmatpush1.bf16.msra.mxu0 %v471
    %560 = vmatprep.subr.bf16.mxu0 %v468
    %561 = vmatpush1.bf16.msra.mxu0 %v467
    %562 = vmatprep.subr.bf16.mxu0 %v464
    %563 = vmatpush1.bf16.msra.mxu0 %v463
    %564 = vmatprep.subr.bf16.mxu0 %v460
    %565 = vmatpush1.bf16.msra.mxu0 %v459
    %566 = vmatprep.subr.bf16.mxu0 %v456
    %567 = vmatpush1.bf16.msra.mxu0 %v455
    %568 = vmatprep.subr.bf16.mxu0 %v452
    %569 = vmatpush1.bf16.msra.mxu0 %v451
    %570 = vmatprep.subr.bf16.mxu0 0
    %571 = vmatpush2.bf16.msra.mxu0 0
    %572 = vmatprep.subr.bf16.mxu0 0
    %573 = vmatpush2.bf16.msra.mxu0 0
    %574 = vmatprep.subr.bf16.mxu0 0
    %575 = vmatpush2.bf16.msra.mxu0 0
    %576 = vmatprep.subr.bf16.mxu0 0
    %577 = vmatpush2.bf16.msra.mxu0 0
    %578 = vmatprep.subr.bf16.mxu0 0
    %579 = vmatpush2.bf16.msra.mxu0 0
    %580 = vmatprep.subr.bf16.mxu0 0
    %581 = vmatpush2.bf16.msra.mxu0 0
    %582 = vmatprep.subr.bf16.mxu0 0
    %583 = vmatpush2.bf16.msra.mxu0 0
    %584 = vmatprep.subr.bf16.mxu0 0
    %585 = vmatpush2.bf16.msra.mxu0 0
    %586 = vmatprep.mubr.bf16.mxu0 0
    %587 = vmatmul.mubr.bf16.gmra.mxu0 %v352
    %v588 = vpop.f32.mrf.mxu0
    %v589 = vadd.f32 0.0, %v588
    %v590 = vpop.f32.mrf.mxu0
    %v591 = vadd.f32 0.0, %v590
    %v592 = vpop.f32.mrf.mxu0
    %v593 = vpop.f32.mrf.mxu0
    %594 = vdwg.mxu0
    %v595 = vadd.f32 %v348, %v548
    %v596 = vadd.f32 %v349, %v550
    %v597 = vadd.f32 %v350, %v589
    %v598 = vadd.f32 %v351, %v591
    %v599 = vsub.f32 0.0, %v595
    %v600 = vmul.f32 %v599, 1.442695
    %v601 = vpow.pop %v600
    %v602 = vadd.f32 %v601, 1.0
    %v603 = vrcp.pop %v602
    %v604 = vmul.f32 1.0, %v603
    %v605 = vsub.f32 0.0, %v596
    %v606 = vmul.f32 %v605, 1.442695
    %v607 = vpow.pop %v606
    %v608 = vadd.f32 %v607, 1.0
    %v609 = vrcp.pop %v608
    %v610 = vmul.f32 1.0, %v609
    %v611 = vtanh.pop %v597
    %v612 = vsub.f32 0.0, %v598
    %v613 = vmul.f32 %v612, 1.442695
    %v614 = vpow.pop %v613
    %v615 = vadd.f32 %v614, 1.0
    %v616 = vrcp.pop %v615
    %v617 = vmul.f32 1.0, %v616
    %v618 = vmul.f32 %v610, %v347
    %v619 = vmul.f32 %v604, %v611
    %v620 = vadd.f32 %v618, %v619
    %v621 = vtanh.pop %v620
    %v622 = vmul.f32 %v617, %v621
    %623 = vst [vmem:[#allocation11] sm:$0xff] %v622
    %s624 = scalar_lea.vmem [#allocation2], 32
    %v625 = vld [vmem:[%s624] sm:$0xff]
    %v626 = vld [vmem:[%s624 + $0x8] sm:$0xff]
    %v627 = vld [vmem:[%s624 + $0x10] sm:$0xff]
    %v628 = vld [vmem:[%s624 + $0x18] sm:$0xff]
    %v629 = vpack.c.bf16 %v622, %v622
    %630 = vmatprep.subr.bf16.mxu0 %v478
    %631 = vmatpush1.bf16.msra.mxu0 %v477
    %632 = vmatprep.subr.bf16.mxu0 %v474
    %633 = vmatpush1.bf16.msra.mxu0 %v473
    %634 = vmatprep.subr.bf16.mxu0 %v470
    %635 = vmatpush1.bf16.msra.mxu0 %v469
    %636 = vmatprep.subr.bf16.mxu0 %v466
    %637 = vmatpush1.bf16.msra.mxu0 %v465
    %638 = vmatprep.subr.bf16.mxu0 %v462
    %639 = vmatpush1.bf16.msra.mxu0 %v461
    %640 = vmatprep.subr.bf16.mxu0 %v458
    %641 = vmatpush1.bf16.msra.mxu0 %v457
    %642 = vmatprep.subr.bf16.mxu0 %v454
    %643 = vmatpush1.bf16.msra.mxu0 %v453
    %644 = vmatprep.subr.bf16.mxu0 %v450
    %645 = vmatpush1.bf16.msra.mxu0 %v449
    %646 = vmatprep.subr.bf16.mxu0 0
    %647 = vmatpush2.bf16.msra.mxu0 0
    %648 = vmatprep.subr.bf16.mxu0 0
    %649 = vmatpush2.bf16.msra.mxu0 0
    %650 = vmatprep.subr.bf16.mxu0 0
    %651 = vmatpush2.bf16.msra.mxu0 0
    %652 = vmatprep.subr.bf16.mxu0 0
    %653 = vmatpush2.bf16.msra.mxu0 0
    %654 = vmatprep.subr.bf16.mxu0 0
    %655 = vmatpush2.bf16.msra.mxu0 0
    %656 = vmatprep.subr.bf16.mxu0 0
    %657 = vmatpush2.bf16.msra.mxu0 0
    %658 = vmatprep.subr.bf16.mxu0 0
    %659 = vmatpush2.bf16.msra.mxu0 0
    %660 = vmatprep.subr.bf16.mxu0 0
    %661 = vmatpush2.bf16.msra.mxu0 0
    %662 = vmatprep.mubr.bf16.mxu0 0
    %663 = vmatmul.mubr.bf16.gmra.mxu0 %v629
    %v664 = vpop.f32.mrf.mxu0
    %v665 = vadd.f32 0.0, %v664
    %v666 = vpop.f32.mrf.mxu0
    %v667 = vadd.f32 0.0, %v666
    %v668 = vpop.f32.mrf.mxu0
    %v669 = vpop.f32.mrf.mxu0
    %670 = vdwg.mxu0
    %671 = vmatprep.subr.bf16.mxu0 %v480
    %672 = vmatpush1.bf16.msra.mxu0 %v479
    %673 = vmatprep.subr.bf16.mxu0 %v476
    %674 = vmatpush1.bf16.msra.mxu0 %v475
    %675 = vmatprep.subr.bf16.mxu0 %v472
    %676 = vmatpush1.bf16.msra.mxu0 %v471
    %677 = vmatprep.subr.bf16.mxu0 %v468
    %678 = vmatpush1.bf16.msra.mxu0 %v467
    %679 = vmatprep.subr.bf16.mxu0 %v464
    %680 = vmatpush1.bf16.msra.mxu0 %v463
    %681 = vmatprep.subr.bf16.mxu0 %v460
    %682 = vmatpush1.bf16.msra.mxu0 %v459
    %683 = vmatprep.subr.bf16.mxu0 %v456
    %684 = vmatpush1.bf16.msra.mxu0 %v455
    %685 = vmatprep.subr.bf16.mxu0 %v452
    %686 = vmatpush1.bf16.msra.mxu0 %v451
    %687 = vmatprep.subr.bf16.mxu0 0
    %688 = vmatpush2.bf16.msra.mxu0 0
    %689 = vmatprep.subr.bf16.mxu0 0
    %690 = vmatpush2.bf16.msra.mxu0 0
    %691 = vmatprep.subr.bf16.mxu0 0
    %692 = vmatpush2.bf16.msra.mxu0 0
    %693 = vmatprep.subr.bf16.mxu0 0
    %694 = vmatpush2.bf16.msra.mxu0 0
    %695 = vmatprep.subr.bf16.mxu0 0
    %696 = vmatpush2.bf16.msra.mxu0 0
    %697 = vmatprep.subr.bf16.mxu0 0
    %698 = vmatpush2.bf16.msra.mxu0 0
    %699 = vmatprep.subr.bf16.mxu0 0
    %700 = vmatpush2.bf16.msra.mxu0 0
    %701 = vmatprep.subr.bf16.mxu0 0
    %702 = vmatpush2.bf16.msra.mxu0 0
    %703 = vmatprep.mubr.bf16.mxu0 0
    %704 = vmatmul.mubr.bf16.gmra.mxu0 %v629
    %v705 = vpop.f32.mrf.mxu0
    %v706 = vadd.f32 0.0, %v705
    %v707 = vpop.f32.mrf.mxu0
    %v708 = vadd.f32 0.0, %v707
    %v709 = vpop.f32.mrf.mxu0
    %v710 = vpop.f32.mrf.mxu0
    %711 = vdwg.mxu0
    %v712 = vadd.f32 %v625, %v665
    %v713 = vadd.f32 %v626, %v667
    %v714 = vadd.f32 %v627, %v706
    %v715 = vadd.f32 %v628, %v708
    %v716 = vsub.f32 0.0, %v712
    %v717 = vmul.f32 %v716, 1.442695
    %v718 = vpow.pop %v717
    %v719 = vadd.f32 %v718, 1.0
    %v720 = vrcp.pop %v719
    %v721 = vmul.f32 1.0, %v720
    %v722 = vsub.f32 0.0, %v713
    %v723 = vmul.f32 %v722, 1.442695
    %v724 = vpow.pop %v723
    %v725 = vadd.f32 %v724, 1.0
    %v726 = vrcp.pop %v725
    %v727 = vmul.f32 1.0, %v726
    %v728 = vtanh.pop %v714
    %v729 = vsub.f32 0.0, %v715
    %v730 = vmul.f32 %v729, 1.442695
    %v731 = vpow.pop %v730
    %v732 = vadd.f32 %v731, 1.0
    %v733 = vrcp.pop %v732
    %v734 = vmul.f32 1.0, %v733
    %v735 = vmul.f32 %v727, %v620
    %v736 = vmul.f32 %v721, %v728
    %v737 = vadd.f32 %v735, %v736
    %v738 = vtanh.pop %v737
    %v739 = vmul.f32 %v734, %v738
    %s740 = scalar_lea.vmem [#allocation11], 8
    %741 = vst [vmem:[%s740] sm:$0xff] %v739
    %s742 = scalar_lea.vmem [#allocation2], 64
    %v743 = vld [vmem:[%s742] sm:$0xff]
    %v744 = vld [vmem:[%s742 + $0x8] sm:$0xff]
    %v745 = vld [vmem:[%s742 + $0x10] sm:$0xff]
    %v746 = vld [vmem:[%s742 + $0x18] sm:$0xff]
    %v747 = vpack.c.bf16 %v739, %v739
    %748 = vmatprep.subr.bf16.mxu0 %v478
    %749 = vmatpush1.bf16.msra.mxu0 %v477
    %750 = vmatprep.subr.bf16.mxu0 %v474
    %751 = vmatpush1.bf16.msra.mxu0 %v473
    %752 = vmatprep.subr.bf16.mxu0 %v470
    %753 = vmatpush1.bf16.msra.mxu0 %v469
    %754 = vmatprep.subr.bf16.mxu0 %v466
    %755 = vmatpush1.bf16.msra.mxu0 %v465
    %756 = vmatprep.subr.bf16.mxu0 %v462
    %757 = vmatpush1.bf16.msra.mxu0 %v461
    %758 = vmatprep.subr.bf16.mxu0 %v458
    %759 = vmatpush1.bf16.msra.mxu0 %v457
    %760 = vmatprep.subr.bf16.mxu0 %v454
    %761 = vmatpush1.bf16.msra.mxu0 %v453
    %762 = vmatprep.subr.bf16.mxu0 %v450
    %763 = vmatpush1.bf16.msra.mxu0 %v449
    %764 = vmatprep.subr.bf16.mxu0 0
    %765 = vmatpush2.bf16.msra.mxu0 0
    %766 = vmatprep.subr.bf16.mxu0 0
    %767 = vmatpush2.bf16.msra.mxu0 0
    %768 = vmatprep.subr.bf16.mxu0 0
    %769 = vmatpush2.bf16.msra.mxu0 0
    %770 = vmatprep.subr.bf16.mxu0 0
    %771 = vmatpush2.bf16.msra.mxu0 0
    %772 = vmatprep.subr.bf16.mxu0 0
    %773 = vmatpush2.bf16.msra.mxu0 0
    %774 = vmatprep.subr.bf16.mxu0 0
    %775 = vmatpush2.bf16.msra.mxu0 0
    %776 = vmatprep.subr.bf16.mxu0 0
    %777 = vmatpush2.bf16.msra.mxu0 0
    %778 = vmatprep.subr.bf16.mxu0 0
    %779 = vmatpush2.bf16.msra.mxu0 0
    %780 = vmatprep.mubr.bf16.mxu0 0
    %781 = vmatmul.mubr.bf16.gmra.mxu0 %v747
    %v782 = vpop.f32.mrf.mxu0
    %v783 = vadd.f32 0.0, %v782
    %v784 = vpop.f32.mrf.mxu0
    %v785 = vadd.f32 0.0, %v784
    %v786 = vpop.f32.mrf.mxu0
    %v787 = vpop.f32.mrf.mxu0
    %788 = vdwg.mxu0
    %789 = vmatprep.subr.bf16.mxu0 %v480
    %790 = vmatpush1.bf16.msra.mxu0 %v479
    %791 = vmatprep.subr.bf16.mxu0 %v476
    %792 = vmatpush1.bf16.msra.mxu0 %v475
    %793 = vmatprep.subr.bf16.mxu0 %v472
    %794 = vmatpush1.bf16.msra.mxu0 %v471
    %795 = vmatprep.subr.bf16.mxu0 %v468
    %796 = vmatpush1.bf16.msra.mxu0 %v467
    %797 = vmatprep.subr.bf16.mxu0 %v464
    %798 = vmatpush1.bf16.msra.mxu0 %v463
    %799 = vmatprep.subr.bf16.mxu0 %v460
    %800 = vmatpush1.bf16.msra.mxu0 %v459
    %801 = vmatprep.subr.bf16.mxu0 %v456
    %802 = vmatpush1.bf16.msra.mxu0 %v455
    %803 = vmatprep.subr.bf16.mxu0 %v452
    %804 = vmatpush1.bf16.msra.mxu0 %v451
    %805 = vmatprep.subr.bf16.mxu0 0
    %806 = vmatpush2.bf16.msra.mxu0 0
    %807 = vmatprep.subr.bf16.mxu0 0
    %808 = vmatpush2.bf16.msra.mxu0 0
    %809 = vmatprep.subr.bf16.mxu0 0
    %810 = vmatpush2.bf16.msra.mxu0 0
    %811 = vmatprep.subr.bf16.mxu0 0
    %812 = vmatpush2.bf16.msra.mxu0 0
    %813 = vmatprep.subr.bf16.mxu0 0
    %814 = vmatpush2.bf16.msra.mxu0 0
    %815 = vmatprep.subr.bf16.mxu0 0
    %816 = vmatpush2.bf16.msra.mxu0 0
    %817 = vmatprep.subr.bf16.mxu0 0
    %818 = vmatpush2.bf16.msra.mxu0 0
    %819 = vmatprep.subr.bf16.mxu0 0
    %820 = vmatpush2.bf16.msra.mxu0 0
    %821 = vmatprep.mubr.bf16.mxu0 0
    %822 = vmatmul.mubr.bf16.gmra.mxu0 %v747
    %v823 = vpop.f32.mrf.mxu0
    %v824 = vadd.f32 0.0, %v823
    %v825 = vpop.f32.mrf.mxu0
    %v826 = vadd.f32 0.0, %v825
    %v827 = vpop.f32.mrf.mxu0
    %v828 = vpop.f32.mrf.mxu0
    %829 = vdwg.mxu0
    %v830 = vadd.f32 %v743, %v783
    %v831 = vadd.f32 %v744, %v785
    %v832 = vadd.f32 %v745, %v824
    %v833 = vadd.f32 %v746, %v826
    %v834 = vsub.f32 0.0, %v830
    %v835 = vmul.f32 %v834, 1.442695
    %v836 = vpow.pop %v835
    %v837 = vadd.f32 %v836, 1.0
    %v838 = vrcp.pop %v837
    %v839 = vmul.f32 1.0, %v838
    %v840 = vsub.f32 0.0, %v831
    %v841 = vmul.f32 %v840, 1.442695
    %v842 = vpow.pop %v841
    %v843 = vadd.f32 %v842, 1.0
    %v844 = vrcp.pop %v843
    %v845 = vmul.f32 1.0, %v844
    %v846 = vtanh.pop %v832
    %v847 = vsub.f32 0.0, %v833
    %v848 = vmul.f32 %v847, 1.442695
    %v849 = vpow.pop %v848
    %v850 = vadd.f32 %v849, 1.0
    %v851 = vrcp.pop %v850
    %v852 = vmul.f32 1.0, %v851
    %v853 = vmul.f32 %v845, %v737
    %v854 = vmul.f32 %v839, %v846
    %v855 = vadd.f32 %v853, %v854
    %v856 = vtanh.pop %v855
    %v857 = vmul.f32 %v852, %v856
    %s858 = scalar_lea.vmem [#allocation11], 16
    %859 = vst [vmem:[%s858] sm:$0xff] %v857
    %s860 = scalar_lea.vmem [#allocation2], 96
    %v861 = vld [vmem:[%s860] sm:$0xff]
    %v862 = vld [vmem:[%s860 + $0x8] sm:$0xff]
    %v863 = vld [vmem:[%s860 + $0x10] sm:$0xff]
    %v864 = vld [vmem:[%s860 + $0x18] sm:$0xff]
    %v865 = vpack.c.bf16 %v857, %v857
    %866 = vmatprep.subr.bf16.mxu0 %v478
    %867 = vmatpush1.bf16.msra.mxu0 %v477
    %868 = vmatprep.subr.bf16.mxu0 %v474
    %869 = vmatpush1.bf16.msra.mxu0 %v473
    %870 = vmatprep.subr.bf16.mxu0 %v470
    %871 = vmatpush1.bf16.msra.mxu0 %v469
    %872 = vmatprep.subr.bf16.mxu0 %v466
    %873 = vmatpush1.bf16.msra.mxu0 %v465
    %874 = vmatprep.subr.bf16.mxu0 %v462
    %875 = vmatpush1.bf16.msra.mxu0 %v461
    %876 = vmatprep.subr.bf16.mxu0 %v458
    %877 = vmatpush1.bf16.msra.mxu0 %v457
    %878 = vmatprep.subr.bf16.mxu0 %v454
    %879 = vmatpush1.bf16.msra.mxu0 %v453
    %880 = vmatprep.subr.bf16.mxu0 %v450
    %881 = vmatpush1.bf16.msra.mxu0 %v449
    %882 = vmatprep.subr.bf16.mxu0 0
    %883 = vmatpush2.bf16.msra.mxu0 0
    %884 = vmatprep.subr.bf16.mxu0 0
    %885 = vmatpush2.bf16.msra.mxu0 0
    %886 = vmatprep.subr.bf16.mxu0 0
    %887 = vmatpush2.bf16.msra.mxu0 0
    %888 = vmatprep.subr.bf16.mxu0 0
    %889 = vmatpush2.bf16.msra.mxu0 0
    %890 = vmatprep.subr.bf16.mxu0 0
    %891 = vmatpush2.bf16.msra.mxu0 0
    %892 = vmatprep.subr.bf16.mxu0 0
    %893 = vmatpush2.bf16.msra.mxu0 0
    %894 = vmatprep.subr.bf16.mxu0 0
    %895 = vmatpush2.bf16.msra.mxu0 0
    %896 = vmatprep.subr.bf16.mxu0 0
    %897 = vmatpush2.bf16.msra.mxu0 0
    %898 = vmatprep.mubr.bf16.mxu0 0
    %899 = vmatmul.mubr.bf16.gmra.mxu0 %v865
    %v900 = vpop.f32.mrf.mxu0
    %v901 = vadd.f32 0.0, %v900
    %v902 = vpop.f32.mrf.mxu0
    %v903 = vadd.f32 0.0, %v902
    %v904 = vpop.f32.mrf.mxu0
    %v905 = vpop.f32.mrf.mxu0
    %906 = vdwg.mxu0
    %907 = vmatprep.subr.bf16.mxu0 %v480
    %908 = vmatpush1.bf16.msra.mxu0 %v479
    %909 = vmatprep.subr.bf16.mxu0 %v476
    %910 = vmatpush1.bf16.msra.mxu0 %v475
    %911 = vmatprep.subr.bf16.mxu0 %v472
    %912 = vmatpush1.bf16.msra.mxu0 %v471
    %913 = vmatprep.subr.bf16.mxu0 %v468
    %914 = vmatpush1.bf16.msra.mxu0 %v467
    %915 = vmatprep.subr.bf16.mxu0 %v464
    %916 = vmatpush1.bf16.msra.mxu0 %v463
    %917 = vmatprep.subr.bf16.mxu0 %v460
    %918 = vmatpush1.bf16.msra.mxu0 %v459
    %919 = vmatprep.subr.bf16.mxu0 %v456
    %920 = vmatpush1.bf16.msra.mxu0 %v455
    %921 = vmatprep.subr.bf16.mxu0 %v452
    %922 = vmatpush1.bf16.msra.mxu0 %v451
    %923 = vmatprep.subr.bf16.mxu0 0
    %924 = vmatpush2.bf16.msra.mxu0 0
    %925 = vmatprep.subr.bf16.mxu0 0
    %926 = vmatpush2.bf16.msra.mxu0 0
    %927 = vmatprep.subr.bf16.mxu0 0
    %928 = vmatpush2.bf16.msra.mxu0 0
    %929 = vmatprep.subr.bf16.mxu0 0
    %930 = vmatpush2.bf16.msra.mxu0 0
    %931 = vmatprep.subr.bf16.mxu0 0
    %932 = vmatpush2.bf16.msra.mxu0 0
    %933 = vmatprep.subr.bf16.mxu0 0
    %934 = vmatpush2.bf16.msra.mxu0 0
    %935 = vmatprep.subr.bf16.mxu0 0
    %936 = vmatpush2.bf16.msra.mxu0 0
    %937 = vmatprep.subr.bf16.mxu0 0
    %938 = vmatpush2.bf16.msra.mxu0 0
    %939 = vmatprep.mubr.bf16.mxu0 0
    %940 = vmatmul.mubr.bf16.gmra.mxu0 %v865
    %v941 = vpop.f32.mrf.mxu0
    %v942 = vadd.f32 0.0, %v941
    %v943 = vpop.f32.mrf.mxu0
    %v944 = vadd.f32 0.0, %v943
    %v945 = vpop.f32.mrf.mxu0
    %v946 = vpop.f32.mrf.mxu0
    %947 = vdwg.mxu0
    %v948 = vadd.f32 %v861, %v901
    %v949 = vadd.f32 %v862, %v903
    %v950 = vadd.f32 %v863, %v942
    %v951 = vadd.f32 %v864, %v944
    %v952 = vsub.f32 0.0, %v948
    %v953 = vmul.f32 %v952, 1.442695
    %v954 = vpow.pop %v953
    %v955 = vadd.f32 %v954, 1.0
    %v956 = vrcp.pop %v955
    %v957 = vmul.f32 1.0, %v956
    %v958 = vsub.f32 0.0, %v949
    %v959 = vmul.f32 %v958, 1.442695
    %v960 = vpow.pop %v959
    %v961 = vadd.f32 %v960, 1.0
    %v962 = vrcp.pop %v961
    %v963 = vmul.f32 1.0, %v962
    %v964 = vtanh.pop %v950
    %v965 = vsub.f32 0.0, %v951
    %v966 = vmul.f32 %v965, 1.442695
    %v967 = vpow.pop %v966
    %v968 = vadd.f32 %v967, 1.0
    %v969 = vrcp.pop %v968
    %v970 = vmul.f32 1.0, %v969
    %v971 = vmul.f32 %v963, %v855
    %v972 = vmul.f32 %v957, %v964
    %v973 = vadd.f32 %v971, %v972
    %v974 = vtanh.pop %v973
    %v975 = vmul.f32 %v970, %v974
    %s976 = scalar_lea.vmem [#allocation11], 24
    %977 = vst [vmem:[%s976] sm:$0xff] %v975
    %s978 = scalar_lea.vmem [#allocation2], 128
    %v979 = vld [vmem:[%s978] sm:$0xff]
    %v980 = vld [vmem:[%s978 + $0x8] sm:$0xff]
    %v981 = vld [vmem:[%s978 + $0x10] sm:$0xff]
    %v982 = vld [vmem:[%s978 + $0x18] sm:$0xff]
    %v983 = vpack.c.bf16 %v975, %v975
    %984 = vmatprep.subr.bf16.mxu0 %v478
    %985 = vmatpush1.bf16.msra.mxu0 %v477
    %986 = vmatprep.subr.bf16.mxu0 %v474
    %987 = vmatpush1.bf16.msra.mxu0 %v473
    %988 = vmatprep.subr.bf16.mxu0 %v470
    %989 = vmatpush1.bf16.msra.mxu0 %v469
    %990 = vmatprep.subr.bf16.mxu0 %v466
    %991 = vmatpush1.bf16.msra.mxu0 %v465
    %992 = vmatprep.subr.bf16.mxu0 %v462
    %993 = vmatpush1.bf16.msra.mxu0 %v461
    %994 = vmatprep.subr.bf16.mxu0 %v458
    %995 = vmatpush1.bf16.msra.mxu0 %v457
    %996 = vmatprep.subr.bf16.mxu0 %v454
    %997 = vmatpush1.bf16.msra.mxu0 %v453
    %998 = vmatprep.subr.bf16.mxu0 %v450
    %999 = vmatpush1.bf16.msra.mxu0 %v449
    %1000 = vmatprep.subr.bf16.mxu0 0
    %1001 = vmatpush2.bf16.msra.mxu0 0
    %1002 = vmatprep.subr.bf16.mxu0 0
    %1003 = vmatpush2.bf16.msra.mxu0 0
    %1004 = vmatprep.subr.bf16.mxu0 0
    %1005 = vmatpush2.bf16.msra.mxu0 0
    %1006 = vmatprep.subr.bf16.mxu0 0
    %1007 = vmatpush2.bf16.msra.mxu0 0
    %1008 = vmatprep.subr.bf16.mxu0 0
    %1009 = vmatpush2.bf16.msra.mxu0 0
    %1010 = vmatprep.subr.bf16.mxu0 0
    %1011 = vmatpush2.bf16.msra.mxu0 0
    %1012 = vmatprep.subr.bf16.mxu0 0
    %1013 = vmatpush2.bf16.msra.mxu0 0
    %1014 = vmatprep.subr.bf16.mxu0 0
    %1015 = vmatpush2.bf16.msra.mxu0 0
    %1016 = vmatprep.mubr.bf16.mxu0 0
    %1017 = vmatmul.mubr.bf16.gmra.mxu0 %v983
    %v1018 = vpop.f32.mrf.mxu0
    %v1019 = vadd.f32 0.0, %v1018
    %v1020 = vpop.f32.mrf.mxu0
    %v1021 = vadd.f32 0.0, %v1020
    %v1022 = vpop.f32.mrf.mxu0
    %v1023 = vpop.f32.mrf.mxu0
    %1024 = vdwg.mxu0
    %1025 = vmatprep.subr.bf16.mxu0 %v480
    %1026 = vmatpush1.bf16.msra.mxu0 %v479
    %1027 = vmatprep.subr.bf16.mxu0 %v476
    %1028 = vmatpush1.bf16.msra.mxu0 %v475
    %1029 = vmatprep.subr.bf16.mxu0 %v472
    %1030 = vmatpush1.bf16.msra.mxu0 %v471
    %1031 = vmatprep.subr.bf16.mxu0 %v468
    %1032 = vmatpush1.bf16.msra.mxu0 %v467
    %1033 = vmatprep.subr.bf16.mxu0 %v464
    %1034 = vmatpush1.bf16.msra.mxu0 %v463
    %1035 = vmatprep.subr.bf16.mxu0 %v460
    %1036 = vmatpush1.bf16.msra.mxu0 %v459
    %1037 = vmatprep.subr.bf16.mxu0 %v456
    %1038 = vmatpush1.bf16.msra.mxu0 %v455
    %1039 = vmatprep.subr.bf16.mxu0 %v452
    %1040 = vmatpush1.bf16.msra.mxu0 %v451
    %1041 = vmatprep.subr.bf16.mxu0 0
    %1042 = vmatpush2.bf16.msra.mxu0 0
    %1043 = vmatprep.subr.bf16.mxu0 0
    %1044 = vmatpush2.bf16.msra.mxu0 0
    %1045 = vmatprep.subr.bf16.mxu0 0
    %1046 = vmatpush2.bf16.msra.mxu0 0
    %1047 = vmatprep.subr.bf16.mxu0 0
    %1048 = vmatpush2.bf16.msra.mxu0 0
    %1049 = vmatprep.subr.bf16.mxu0 0
    %1050 = vmatpush2.bf16.msra.mxu0 0
    %1051 = vmatprep.subr.bf16.mxu0 0
    %1052 = vmatpush2.bf16.msra.mxu0 0
    %1053 = vmatprep.subr.bf16.mxu0 0
    %1054 = vmatpush2.bf16.msra.mxu0 0
    %1055 = vmatprep.subr.bf16.mxu0 0
    %1056 = vmatpush2.bf16.msra.mxu0 0
    %1057 = vmatprep.mubr.bf16.mxu0 0
    %1058 = vmatmul.mubr.bf16.gmra.mxu0 %v983
    %v1059 = vpop.f32.mrf.mxu0
    %v1060 = vadd.f32 0.0, %v1059
    %v1061 = vpop.f32.mrf.mxu0
    %v1062 = vadd.f32 0.0, %v1061
    %v1063 = vpop.f32.mrf.mxu0
    %v1064 = vpop.f32.mrf.mxu0
    %1065 = vdwg.mxu0
    %v1066 = vadd.f32 %v979, %v1019
    %v1067 = vadd.f32 %v980, %v1021
    %v1068 = vadd.f32 %v981, %v1060
    %v1069 = vadd.f32 %v982, %v1062
    %v1070 = vsub.f32 0.0, %v1066
    %v1071 = vmul.f32 %v1070, 1.442695
    %v1072 = vpow.pop %v1071
    %v1073 = vadd.f32 %v1072, 1.0
    %v1074 = vrcp.pop %v1073
    %v1075 = vmul.f32 1.0, %v1074
    %v1076 = vsub.f32 0.0, %v1067
    %v1077 = vmul.f32 %v1076, 1.442695
    %v1078 = vpow.pop %v1077
    %v1079 = vadd.f32 %v1078, 1.0
    %v1080 = vrcp.pop %v1079
    %v1081 = vmul.f32 1.0, %v1080
    %v1082 = vtanh.pop %v1068
    %v1083 = vsub.f32 0.0, %v1069
    %v1084 = vmul.f32 %v1083, 1.442695
    %v1085 = vpow.pop %v1084
    %v1086 = vadd.f32 %v1085, 1.0
    %v1087 = vrcp.pop %v1086
    %v1088 = vmul.f32 1.0, %v1087
    %v1089 = vmul.f32 %v1081, %v973
    %v1090 = vmul.f32 %v1075, %v1082
    %v1091 = vadd.f32 %v1089, %v1090
    %v1092 = vtanh.pop %v1091
    %v1093 = vmul.f32 %v1088, %v1092
    %s1094 = scalar_lea.vmem [#allocation11], 32
    %1095 = vst [vmem:[%s1094] sm:$0xff] %v1093
    %s1096 = scalar_lea.vmem [#allocation2], 160
    %v1097 = vld [vmem:[%s1096] sm:$0xff]
    %v1098 = vld [vmem:[%s1096 + $0x8] sm:$0xff]
    %v1099 = vld [vmem:[%s1096 + $0x10] sm:$0xff]
    %v1100 = vld [vmem:[%s1096 + $0x18] sm:$0xff]
    %v1101 = vpack.c.bf16 %v1093, %v1093
    %1102 = vmatprep.subr.bf16.mxu0 %v478
    %1103 = vmatpush1.bf16.msra.mxu0 %v477
    %1104 = vmatprep.subr.bf16.mxu0 %v474
    %1105 = vmatpush1.bf16.msra.mxu0 %v473
    %1106 = vmatprep.subr.bf16.mxu0 %v470
    %1107 = vmatpush1.bf16.msra.mxu0 %v469
    %1108 = vmatprep.subr.bf16.mxu0 %v466
    %1109 = vmatpush1.bf16.msra.mxu0 %v465
    %1110 = vmatprep.subr.bf16.mxu0 %v462
    %1111 = vmatpush1.bf16.msra.mxu0 %v461
    %1112 = vmatprep.subr.bf16.mxu0 %v458
    %1113 = vmatpush1.bf16.msra.mxu0 %v457
    %1114 = vmatprep.subr.bf16.mxu0 %v454
    %1115 = vmatpush1.bf16.msra.mxu0 %v453
    %1116 = vmatprep.subr.bf16.mxu0 %v450
    %1117 = vmatpush1.bf16.msra.mxu0 %v449
    %1118 = vmatprep.subr.bf16.mxu0 0
    %1119 = vmatpush2.bf16.msra.mxu0 0
    %1120 = vmatprep.subr.bf16.mxu0 0
    %1121 = vmatpush2.bf16.msra.mxu0 0
    %1122 = vmatprep.subr.bf16.mxu0 0
    %1123 = vmatpush2.bf16.msra.mxu0 0
    %1124 = vmatprep.subr.bf16.mxu0 0
    %1125 = vmatpush2.bf16.msra.mxu0 0
    %1126 = vmatprep.subr.bf16.mxu0 0
    %1127 = vmatpush2.bf16.msra.mxu0 0
    %1128 = vmatprep.subr.bf16.mxu0 0
    %1129 = vmatpush2.bf16.msra.mxu0 0
    %1130 = vmatprep.subr.bf16.mxu0 0
    %1131 = vmatpush2.bf16.msra.mxu0 0
    %1132 = vmatprep.subr.bf16.mxu0 0
    %1133 = vmatpush2.bf16.msra.mxu0 0
    %1134 = vmatprep.mubr.bf16.mxu0 0
    %1135 = vmatmul.mubr.bf16.gmra.mxu0 %v1101
    %v1136 = vpop.f32.mrf.mxu0
    %v1137 = vadd.f32 0.0, %v1136
    %v1138 = vpop.f32.mrf.mxu0
    %v1139 = vadd.f32 0.0, %v1138
    %v1140 = vpop.f32.mrf.mxu0
    %v1141 = vpop.f32.mrf.mxu0
    %1142 = vdwg.mxu0
    %1143 = vmatprep.subr.bf16.mxu0 %v480
    %1144 = vmatpush1.bf16.msra.mxu0 %v479
    %1145 = vmatprep.subr.bf16.mxu0 %v476
    %1146 = vmatpush1.bf16.msra.mxu0 %v475
    %1147 = vmatprep.subr.bf16.mxu0 %v472
    %1148 = vmatpush1.bf16.msra.mxu0 %v471
    %1149 = vmatprep.subr.bf16.mxu0 %v468
    %1150 = vmatpush1.bf16.msra.mxu0 %v467
    %1151 = vmatprep.subr.bf16.mxu0 %v464
    %1152 = vmatpush1.bf16.msra.mxu0 %v463
    %1153 = vmatprep.subr.bf16.mxu0 %v460
    %1154 = vmatpush1.bf16.msra.mxu0 %v459
    %1155 = vmatprep.subr.bf16.mxu0 %v456
    %1156 = vmatpush1.bf16.msra.mxu0 %v455
    %1157 = vmatprep.subr.bf16.mxu0 %v452
    %1158 = vmatpush1.bf16.msra.mxu0 %v451
    %1159 = vmatprep.subr.bf16.mxu0 0
    %1160 = vmatpush2.bf16.msra.mxu0 0
    %1161 = vmatprep.subr.bf16.mxu0 0
    %1162 = vmatpush2.bf16.msra.mxu0 0
    %1163 = vmatprep.subr.bf16.mxu0 0
    %1164 = vmatpush2.bf16.msra.mxu0 0
    %1165 = vmatprep.subr.bf16.mxu0 0
    %1166 = vmatpush2.bf16.msra.mxu0 0
    %1167 = vmatprep.subr.bf16.mxu0 0
    %1168 = vmatpush2.bf16.msra.mxu0 0
    %1169 = vmatprep.subr.bf16.mxu0 0
    %1170 = vmatpush2.bf16.msra.mxu0 0
    %1171 = vmatprep.subr.bf16.mxu0 0
    %1172 = vmatpush2.bf16.msra.mxu0 0
    %1173 = vmatprep.subr.bf16.mxu0 0
    %1174 = vmatpush2.bf16.msra.mxu0 0
    %1175 = vmatprep.mubr.bf16.mxu0 0
    %1176 = vmatmul.mubr.bf16.gmra.mxu0 %v1101
    %v1177 = vpop.f32.mrf.mxu0
    %v1178 = vadd.f32 0.0, %v1177
    %v1179 = vpop.f32.mrf.mxu0
    %v1180 = vadd.f32 0.0, %v1179
    %v1181 = vpop.f32.mrf.mxu0
    %v1182 = vpop.f32.mrf.mxu0
    %1183 = vdwg.mxu0
    %v1184 = vadd.f32 %v1097, %v1137
    %v1185 = vadd.f32 %v1098, %v1139
    %v1186 = vadd.f32 %v1099, %v1178
    %v1187 = vadd.f32 %v1100, %v1180
    %v1188 = vsub.f32 0.0, %v1184
    %v1189 = vmul.f32 %v1188, 1.442695
    %v1190 = vpow.pop %v1189
    %v1191 = vadd.f32 %v1190, 1.0
    %v1192 = vrcp.pop %v1191
    %v1193 = vmul.f32 1.0, %v1192
    %v1194 = vsub.f32 0.0, %v1185
    %v1195 = vmul.f32 %v1194, 1.442695
    %v1196 = vpow.pop %v1195
    %v1197 = vadd.f32 %v1196, 1.0
    %v1198 = vrcp.pop %v1197
    %v1199 = vmul.f32 1.0, %v1198
    %v1200 = vtanh.pop %v1186
    %v1201 = vsub.f32 0.0, %v1187
    %v1202 = vmul.f32 %v1201, 1.442695
    %v1203 = vpow.pop %v1202
    %v1204 = vadd.f32 %v1203, 1.0
    %v1205 = vrcp.pop %v1204
    %v1206 = vmul.f32 1.0, %v1205
    %v1207 = vmul.f32 %v1199, %v1091
    %v1208 = vmul.f32 %v1193, %v1200
    %v1209 = vadd.f32 %v1207, %v1208
    %v1210 = vtanh.pop %v1209
    %v1211 = vmul.f32 %v1206, %v1210
    %s1212 = scalar_lea.vmem [#allocation11], 40
    %1213 = vst [vmem:[%s1212] sm:$0xff] %v1211
    %s1214 = scalar_lea.vmem [#allocation2], 192
    %v1215 = vld [vmem:[%s1214] sm:$0xff]
    %v1216 = vld [vmem:[%s1214 + $0x8] sm:$0xff]
    %v1217 = vld [vmem:[%s1214 + $0x10] sm:$0xff]
    %v1218 = vld [vmem:[%s1214 + $0x18] sm:$0xff]
    %v1219 = vpack.c.bf16 %v1211, %v1211
    %1220 = vmatprep.subr.bf16.mxu0 %v478
    %1221 = vmatpush1.bf16.msra.mxu0 %v477
    %1222 = vmatprep.subr.bf16.mxu0 %v474
    %1223 = vmatpush1.bf16.msra.mxu0 %v473
    %1224 = vmatprep.subr.bf16.mxu0 %v470
    %1225 = vmatpush1.bf16.msra.mxu0 %v469
    %1226 = vmatprep.subr.bf16.mxu0 %v466
    %1227 = vmatpush1.bf16.msra.mxu0 %v465
    %1228 = vmatprep.subr.bf16.mxu0 %v462
    %1229 = vmatpush1.bf16.msra.mxu0 %v461
    %1230 = vmatprep.subr.bf16.mxu0 %v458
    %1231 = vmatpush1.bf16.msra.mxu0 %v457
    %1232 = vmatprep.subr.bf16.mxu0 %v454
    %1233 = vmatpush1.bf16.msra.mxu0 %v453
    %1234 = vmatprep.subr.bf16.mxu0 %v450
    %1235 = vmatpush1.bf16.msra.mxu0 %v449
    %1236 = vmatprep.subr.bf16.mxu0 0
    %1237 = vmatpush2.bf16.msra.mxu0 0
    %1238 = vmatprep.subr.bf16.mxu0 0
    %1239 = vmatpush2.bf16.msra.mxu0 0
    %1240 = vmatprep.subr.bf16.mxu0 0
    %1241 = vmatpush2.bf16.msra.mxu0 0
    %1242 = vmatprep.subr.bf16.mxu0 0
    %1243 = vmatpush2.bf16.msra.mxu0 0
    %1244 = vmatprep.subr.bf16.mxu0 0
    %1245 = vmatpush2.bf16.msra.mxu0 0
    %1246 = vmatprep.subr.bf16.mxu0 0
    %1247 = vmatpush2.bf16.msra.mxu0 0
    %1248 = vmatprep.subr.bf16.mxu0 0
    %1249 = vmatpush2.bf16.msra.mxu0 0
    %1250 = vmatprep.subr.bf16.mxu0 0
    %1251 = vmatpush2.bf16.msra.mxu0 0
    %1252 = vmatprep.mubr.bf16.mxu0 0
    %1253 = vmatmul.mubr.bf16.gmra.mxu0 %v1219
    %v1254 = vpop.f32.mrf.mxu0
    %v1255 = vadd.f32 0.0, %v1254
    %v1256 = vpop.f32.mrf.mxu0
    %v1257 = vadd.f32 0.0, %v1256
    %v1258 = vpop.f32.mrf.mxu0
    %v1259 = vpop.f32.mrf.mxu0
    %1260 = vdwg.mxu0
    %1261 = vmatprep.subr.bf16.mxu0 %v480
    %1262 = vmatpush1.bf16.msra.mxu0 %v479
    %1263 = vmatprep.subr.bf16.mxu0 %v476
    %1264 = vmatpush1.bf16.msra.mxu0 %v475
    %1265 = vmatprep.subr.bf16.mxu0 %v472
    %1266 = vmatpush1.bf16.msra.mxu0 %v471
    %1267 = vmatprep.subr.bf16.mxu0 %v468
    %1268 = vmatpush1.bf16.msra.mxu0 %v467
    %1269 = vmatprep.subr.bf16.mxu0 %v464
    %1270 = vmatpush1.bf16.msra.mxu0 %v463
    %1271 = vmatprep.subr.bf16.mxu0 %v460
    %1272 = vmatpush1.bf16.msra.mxu0 %v459
    %1273 = vmatprep.subr.bf16.mxu0 %v456
    %1274 = vmatpush1.bf16.msra.mxu0 %v455
    %1275 = vmatprep.subr.bf16.mxu0 %v452
    %1276 = vmatpush1.bf16.msra.mxu0 %v451
    %1277 = vmatprep.subr.bf16.mxu0 0
    %1278 = vmatpush2.bf16.msra.mxu0 0
    %1279 = vmatprep.subr.bf16.mxu0 0
    %1280 = vmatpush2.bf16.msra.mxu0 0
    %1281 = vmatprep.subr.bf16.mxu0 0
    %1282 = vmatpush2.bf16.msra.mxu0 0
    %1283 = vmatprep.subr.bf16.mxu0 0
    %1284 = vmatpush2.bf16.msra.mxu0 0
    %1285 = vmatprep.subr.bf16.mxu0 0
    %1286 = vmatpush2.bf16.msra.mxu0 0
    %1287 = vmatprep.subr.bf16.mxu0 0
    %1288 = vmatpush2.bf16.msra.mxu0 0
    %1289 = vmatprep.subr.bf16.mxu0 0
    %1290 = vmatpush2.bf16.msra.mxu0 0
    %1291 = vmatprep.subr.bf16.mxu0 0
    %1292 = vmatpush2.bf16.msra.mxu0 0
    %1293 = vmatprep.mubr.bf16.mxu0 0
    %1294 = vmatmul.mubr.bf16.gmra.mxu0 %v1219
    %v1295 = vpop.f32.mrf.mxu0
    %v1296 = vadd.f32 0.0, %v1295
    %v1297 = vpop.f32.mrf.mxu0
    %v1298 = vadd.f32 0.0, %v1297
    %v1299 = vpop.f32.mrf.mxu0
    %v1300 = vpop.f32.mrf.mxu0
    %1301 = vdwg.mxu0
    %v1302 = vadd.f32 %v1215, %v1255
    %v1303 = vadd.f32 %v1216, %v1257
    %v1304 = vadd.f32 %v1217, %v1296
    %v1305 = vadd.f32 %v1218, %v1298
    %v1306 = vsub.f32 0.0, %v1302
    %v1307 = vmul.f32 %v1306, 1.442695
    %v1308 = vpow.pop %v1307
    %v1309 = vadd.f32 %v1308, 1.0
    %v1310 = vrcp.pop %v1309
    %v1311 = vmul.f32 1.0, %v1310
    %v1312 = vsub.f32 0.0, %v1303
    %v1313 = vmul.f32 %v1312, 1.442695
    %v1314 = vpow.pop %v1313
    %v1315 = vadd.f32 %v1314, 1.0
    %v1316 = vrcp.pop %v1315
    %v1317 = vmul.f32 1.0, %v1316
    %v1318 = vtanh.pop %v1304
    %v1319 = vsub.f32 0.0, %v1305
    %v1320 = vmul.f32 %v1319, 1.442695
    %v1321 = vpow.pop %v1320
    %v1322 = vadd.f32 %v1321, 1.0
    %v1323 = vrcp.pop %v1322
    %v1324 = vmul.f32 1.0, %v1323
    %v1325 = vmul.f32 %v1317, %v1209
    %v1326 = vmul.f32 %v1311, %v1318
    %v1327 = vadd.f32 %v1325, %v1326
    %v1328 = vtanh.pop %v1327
    %v1329 = vmul.f32 %v1324, %v1328
    %s1330 = scalar_lea.vmem [#allocation11], 48
    %1331 = vst [vmem:[%s1330] sm:$0xff] %v1329
    %s1332 = scalar_lea.vmem [#allocation2], 224
    %v1333 = vld [vmem:[%s1332] sm:$0xff]
    %v1334 = vld [vmem:[%s1332 + $0x8] sm:$0xff]
    %v1335 = vld [vmem:[%s1332 + $0x10] sm:$0xff]
    %v1336 = vld [vmem:[%s1332 + $0x18] sm:$0xff]
    %v1337 = vpack.c.bf16 %v1329, %v1329
    %1338 = vmatprep.subr.bf16.mxu0 %v478
    %1339 = vmatpush1.bf16.msra.mxu0 %v477
    %1340 = vmatprep.subr.bf16.mxu0 %v474
    %1341 = vmatpush1.bf16.msra.mxu0 %v473
    %1342 = vmatprep.subr.bf16.mxu0 %v470
    %1343 = vmatpush1.bf16.msra.mxu0 %v469
    %1344 = vmatprep.subr.bf16.mxu0 %v466
    %1345 = vmatpush1.bf16.msra.mxu0 %v465
    %1346 = vmatprep.subr.bf16.mxu0 %v462
    %1347 = vmatpush1.bf16.msra.mxu0 %v461
    %1348 = vmatprep.subr.bf16.mxu0 %v458
    %1349 = vmatpush1.bf16.msra.mxu0 %v457
    %1350 = vmatprep.subr.bf16.mxu0 %v454
    %1351 = vmatpush1.bf16.msra.mxu0 %v453
    %1352 = vmatprep.subr.bf16.mxu0 %v450
    %1353 = vmatpush1.bf16.msra.mxu0 %v449
    %1354 = vmatprep.subr.bf16.mxu0 0
    %1355 = vmatpush2.bf16.msra.mxu0 0
    %1356 = vmatprep.subr.bf16.mxu0 0
    %1357 = vmatpush2.bf16.msra.mxu0 0
    %1358 = vmatprep.subr.bf16.mxu0 0
    %1359 = vmatpush2.bf16.msra.mxu0 0
    %1360 = vmatprep.subr.bf16.mxu0 0
    %1361 = vmatpush2.bf16.msra.mxu0 0
    %1362 = vmatprep.subr.bf16.mxu0 0
    %1363 = vmatpush2.bf16.msra.mxu0 0
    %1364 = vmatprep.subr.bf16.mxu0 0
    %1365 = vmatpush2.bf16.msra.mxu0 0
    %1366 = vmatprep.subr.bf16.mxu0 0
    %1367 = vmatpush2.bf16.msra.mxu0 0
    %1368 = vmatprep.subr.bf16.mxu0 0
    %1369 = vmatpush2.bf16.msra.mxu0 0
    %1370 = vmatprep.mubr.bf16.mxu0 0
    %1371 = vmatmul.mubr.bf16.gmra.mxu0 %v1337
    %v1372 = vpop.f32.mrf.mxu0
    %v1373 = vadd.f32 0.0, %v1372
    %v1374 = vpop.f32.mrf.mxu0
    %v1375 = vadd.f32 0.0, %v1374
    %v1376 = vpop.f32.mrf.mxu0
    %v1377 = vpop.f32.mrf.mxu0
    %1378 = vdwg.mxu0
    %1379 = vmatprep.subr.bf16.mxu0 %v480
    %1380 = vmatpush1.bf16.msra.mxu0 %v479
    %1381 = vmatprep.subr.bf16.mxu0 %v476
    %1382 = vmatpush1.bf16.msra.mxu0 %v475
    %1383 = vmatprep.subr.bf16.mxu0 %v472
    %1384 = vmatpush1.bf16.msra.mxu0 %v471
    %1385 = vmatprep.subr.bf16.mxu0 %v468
    %1386 = vmatpush1.bf16.msra.mxu0 %v467
    %1387 = vmatprep.subr.bf16.mxu0 %v464
    %1388 = vmatpush1.bf16.msra.mxu0 %v463
    %1389 = vmatprep.subr.bf16.mxu0 %v460
    %1390 = vmatpush1.bf16.msra.mxu0 %v459
    %1391 = vmatprep.subr.bf16.mxu0 %v456
    %1392 = vmatpush1.bf16.msra.mxu0 %v455
    %1393 = vmatprep.subr.bf16.mxu0 %v452
    %1394 = vmatpush1.bf16.msra.mxu0 %v451
    %1395 = vmatprep.subr.bf16.mxu0 0
    %1396 = vmatpush2.bf16.msra.mxu0 0
    %1397 = vmatprep.subr.bf16.mxu0 0
    %1398 = vmatpush2.bf16.msra.mxu0 0
    %1399 = vmatprep.subr.bf16.mxu0 0
    %1400 = vmatpush2.bf16.msra.mxu0 0
    %1401 = vmatprep.subr.bf16.mxu0 0
    %1402 = vmatpush2.bf16.msra.mxu0 0
    %1403 = vmatprep.subr.bf16.mxu0 0
    %1404 = vmatpush2.bf16.msra.mxu0 0
    %1405 = vmatprep.subr.bf16.mxu0 0
    %1406 = vmatpush2.bf16.msra.mxu0 0
    %1407 = vmatprep.subr.bf16.mxu0 0
    %1408 = vmatpush2.bf16.msra.mxu0 0
    %1409 = vmatprep.subr.bf16.mxu0 0
    %1410 = vmatpush2.bf16.msra.mxu0 0
    %1411 = vmatprep.mubr.bf16.mxu0 0
    %1412 = vmatmul.mubr.bf16.gmra.mxu0 %v1337
    %v1413 = vpop.f32.mrf.mxu0
    %v1414 = vadd.f32 0.0, %v1413
    %v1415 = vpop.f32.mrf.mxu0
    %v1416 = vadd.f32 0.0, %v1415
    %v1417 = vpop.f32.mrf.mxu0
    %v1418 = vpop.f32.mrf.mxu0
    %1419 = vdwg.mxu0
    %v1420 = vadd.f32 %v1333, %v1373
    %v1421 = vadd.f32 %v1334, %v1375
    %v1422 = vadd.f32 %v1335, %v1414
    %v1423 = vadd.f32 %v1336, %v1416
    %v1424 = vsub.f32 0.0, %v1420
    %v1425 = vmul.f32 %v1424, 1.442695
    %v1426 = vpow.pop %v1425
    %v1427 = vadd.f32 %v1426, 1.0
    %v1428 = vrcp.pop %v1427
    %v1429 = vmul.f32 1.0, %v1428
    %v1430 = vsub.f32 0.0, %v1421
    %v1431 = vmul.f32 %v1430, 1.442695
    %v1432 = vpow.pop %v1431
    %v1433 = vadd.f32 %v1432, 1.0
    %v1434 = vrcp.pop %v1433
    %v1435 = vmul.f32 1.0, %v1434
    %v1436 = vtanh.pop %v1422
    %v1437 = vsub.f32 0.0, %v1423
    %v1438 = vmul.f32 %v1437, 1.442695
    %v1439 = vpow.pop %v1438
    %v1440 = vadd.f32 %v1439, 1.0
    %v1441 = vrcp.pop %v1440
    %v1442 = vmul.f32 1.0, %v1441
    %v1443 = vmul.f32 %v1435, %v1327
    %v1444 = vmul.f32 %v1429, %v1436
    %v1445 = vadd.f32 %v1443, %v1444
    %v1446 = vtanh.pop %v1445
    %v1447 = vmul.f32 %v1442, %v1446
    %s1448 = scalar_lea.vmem [#allocation11], 56
    %1449 = vst [vmem:[%s1448] sm:$0xff] %v1447
    %1450 = vst [vmem:[#allocation3] sm:$0xff] %v1447
    %1451 = vst [vmem:[#allocation4] sm:$0xff] %v1445
    // Predicated region
    $region34: #{tpu_custom_call.1} parent=1 // pred_check
      _
    $region35: #{tpu_custom_call.1} parent=1 // pred_check_branch
      %1453 = sbr.rel (0) target = $region37
    $region36: #{tpu_custom_call.1} parent=1 // pred_region
      %s1455 = ssub.s32 1024, 1024
      %1456 = vsyncadd [#allocation7], %s1455
      %s1457 = sshll.u32 [#allocation11], 4
      %s1458 = int_to_ptr.vmem [resolvable:$true] %s1457
      %1463 = dma.vmem_to_hbm [thread:$0]  %s1458, 1024, %s4, [#allocation7], 128, 128, 8
    $region37: #{tpu_custom_call.1} parent=1 // pred_fallthru
      _
    // Predicated region
    $region38: #{tpu_custom_call.1} parent=1 // pred_check
      _
    $region39: #{tpu_custom_call.1} parent=1 // pred_check_branch
      %1465 = sbr.rel (0) target = $region41
    $region40: #{tpu_custom_call.1} parent=1 // pred_region
      %1466 = dma.done [#allocation7], 1024
    $region41: #{tpu_custom_call.1} parent=1 // pred_fallthru
      _
    %1467 = vsyncpa [#allocation6], 1
    %1468 = vsyncpa [#allocation9], 1
    %1469 = vsyncpa [#allocation7], 1

</llo_original>
